<compile_context>
chip_gen: v5e
topology: v5e:2x2
jax: 0.10.0
libtpu: 0.0.40
codegen_flags: <defaults>
</compile_context>

<pallas_src>
import functools

import jax
import jax.numpy as jnp
import numpy as np
from jax.experimental import pallas as pl
from jax.experimental.pallas import tpu as pltpu


# ----------------------------- configuration --------------------------------
CFG = dict(
    B=2,            # batch
    C=3,            # input channels (Conv3d in_channels=3)
    H=16, W=16,     # spatial
    T=2,            # video frames after PadIm2Video
    KT=2, KH=4, KW=4,   # Conv3d kernel == stride
    D=32,           # vision_embed_dim
    HEADS=4,        # vision_num_heads
    BLOCKS=2,       # vision_num_blocks
    OUT=16,         # out_embed_dim
)
CFG["NPATCH"] = (CFG["T"] // CFG["KT"]) * (CFG["H"] // CFG["KH"]) * (CFG["W"] // CFG["KW"])
CFG["L"] = CFG["NPATCH"] + 1                       # + 1 cls token
CFG["LPAD"] = ((CFG["L"] + 7) // 8) * 8            # pad seq to sublane multiple (17 -> 24)
CFG["DH"] = CFG["D"] // CFG["HEADS"]               # head dim
CFG["CIN"] = CFG["C"] * CFG["KT"] * CFG["KH"] * CFG["KW"]

# Streamed-weight dtype: bf16 halves weight DMA / VMEM (set jnp.float32 for bit-parity).
WEIGHT_DTYPE = jnp.bfloat16


# ------------------------------ shared numerics helpers ----------------------
def _ln(x, g, b, eps=1e-6):
    """LayerNorm over the last dim (biased variance, like nn.LayerNorm), f32 stats."""
    mu = jnp.mean(x, axis=-1, keepdims=True)
    var = jnp.mean(jnp.square(x - mu), axis=-1, keepdims=True)
    return (x - mu) * jax.lax.rsqrt(var + eps) * g + b


def _gelu(x):
    """Exact (erf) GELU, matches torch.nn.GELU default (kept exact for parity)."""
    return 0.5 * x * (1.0 + jax.lax.erf(x * (1.0 / np.sqrt(2.0))))


def _mm(a, w):
    """Weight matmul: cast activation to the streamed weight dtype, f32 accumulation."""
    return jnp.dot(a.astype(w.dtype), w, preferred_element_type=jnp.float32)


# ------------------------------ fused Pallas kernel --------------------------
def _fused_vision_kernel(
        patches_ref, patch_w_ref, cls_pos_ref, pre_g_ref, pre_b_ref,
        n1_g_ref, n1_b_ref, in_w_ref, in_b_ref, out_w_ref, out_b_ref,
        n2_g_ref, n2_b_ref, fc1_w_ref, fc1_b_ref, fc2_w_ref, fc2_b_ref,
        head_g_ref, head_b_ref, head_w_ref,
        o_ref, x_scr, *, B):
    D, DH, HEADS = CFG["D"], CFG["DH"], CFG["HEADS"]
    L, LPAD = CFG["L"], CFG["LPAD"]
    i = pl.program_id(0)

    # ---- step 0: patch stem (matmul) + cls + pos embed + pre-LN into VMEM scratch ----
    @pl.when(i == 0)
    def _stem():
        tok = _mm(patches_ref[...], patch_w_ref[...])          # (B*LPAD, D) f32
        x0 = tok + cls_pos_ref[...]                            # cls+pos prebaked, batch-tiled
        x_scr[...] = _ln(x0, pre_g_ref[...], pre_b_ref[...])

    # ---- transformer block i: x += MHA(LN1(x)); x += MLP(LN2(x)) -------------
    x = x_scr[...]                                             # (B*LPAD, D) f32 residual

    h = _ln(x, n1_g_ref[0], n1_b_ref[0])
    qkv = _mm(h, in_w_ref[0]) + in_b_ref[0]                    # (B*LPAD, 3D) f32, q pre-scaled

    def split_heads(col0):
        # column slab [col0, col0+D) -> (HEADS*B, LPAD, DH): heads as leading batch dim.
        return jnp.concatenate(
            [qkv[:, col0 + hh * DH: col0 + (hh + 1) * DH].reshape(B, LPAD, DH)
             for hh in range(HEADS)], axis=0)

    q = split_heads(0)                                         # (HEADS*B, LPAD, DH)
    k = split_heads(D)
    v = split_heads(2 * D)

    # single batched attention over all heads (key-padding mask: keys >= L are padding)
    kmask = jax.lax.broadcasted_iota(jnp.int32, (1, 1, LPAD), 2) < L
    s = jnp.einsum("zqd,zkd->zqk", q, k, preferred_element_type=jnp.float32)
    s = jnp.where(kmask, s, jnp.float32(-1e30))
    m = jnp.max(s, axis=-1, keepdims=True)
    p = jnp.exp(s - m)
    denom = jnp.sum(p, axis=-1, keepdims=True)
    o = jnp.einsum("zqk,zkd->zqd", p, v, preferred_element_type=jnp.float32)
    o = o * (1.0 / denom)                                      # deferred softmax normalization
    o = o.reshape(HEADS, B * LPAD, DH)
    # re-assemble heads along lanes -> one K=D out_proj matmul (column order (head, dh)
    # matches the torch in/out_proj weight layout).
    attn = jnp.concatenate([o[hh] for hh in range(HEADS)], axis=-1)   # (B*LPAD, D)
    a = _mm(attn, out_w_ref[0]) + out_b_ref[0]
    x = x + a

    h2 = _ln(x, n2_g_ref[0], n2_b_ref[0])
    z = _mm(h2, fc1_w_ref[0]) + fc1_b_ref[0]
    z = _gelu(z)
    z = _mm(z, fc2_w_ref[0]) + fc2_b_ref[0]
    x = x + z
    x_scr[...] = x

    # ---- last step: head = LN(cls only) -> Linear(D, OUT, no bias) -> L2 norm ----
    @pl.when(i == pl.num_programs(0) - 1)
    def _head():
        cls_rows = x.reshape(B, LPAD, D)[:, 0, :]              # (B, D) -- cls before LN
        hcls = _ln(cls_rows, head_g_ref[...], head_b_ref[...])
        emb = _mm(hcls, head_w_ref[...])
        n2 = jnp.sum(emb * emb, axis=-1, keepdims=True)
        o_ref[...] = (emb * jax.lax.rsqrt(jnp.maximum(n2, 1e-24))).astype(o_ref.dtype)


# ----------------------------- parameter init --------------------------------
def init_params(key):
    C, KT, KH, KW, D, OUT, L, BLOCKS = (CFG[k] for k in
                                        ("C", "KT", "KH", "KW", "D", "OUT", "L", "BLOCKS"))
    ks = list(jax.random.split(key, 8 + 12 * BLOCKS))
    it = iter(ks)
    nrm = lambda shape, s=0.02: (s * jax.random.normal(next(it), shape, jnp.float32))

    params = {
        # Conv3d(3 -> D, kernel=(KT,KH,KW), stride=kernel, bias=False), flattened for matmul
        "patch_w": nrm((C * KT * KH * KW, D)),
        "cls": nrm((1, 1, D)),                      # cls_token (1, num_cls, D)
        "pos": nrm((1, L, D)),                      # learnable spatio-temporal pos embed
        "pre_ln_g": 1.0 + nrm((D,), 0.1),           # pre_transformer LayerNorm (vision only)
        "pre_ln_b": nrm((D,), 0.1),
        "head_ln_g": 1.0 + nrm((D,), 0.1),
        "head_ln_b": nrm((D,), 0.1),
        "head_w": nrm((D, OUT)),                    # Linear(D -> OUT, bias=False)
        "blocks": [],
    }
    for _ in range(BLOCKS):
        params["blocks"].append(dict(
            n1_g=1.0 + nrm((D,), 0.1), n1_b=nrm((D,), 0.1),
            in_w=nrm((D, 3 * D)), in_b=nrm((3 * D,), 0.1),     # MHA in_proj (bias=True)
            out_w=nrm((D, D)), out_b=nrm((D,), 0.1),           # MHA out_proj
            n2_g=1.0 + nrm((D,), 0.1), n2_b=nrm((D,), 0.1),
            fc1_w=nrm((D, 4 * D)), fc1_b=nrm((4 * D,), 0.1),   # MLP fc1 + GELU
            fc2_w=nrm((4 * D, D)), fc2_b=nrm((D,), 0.1),       # MLP fc2
        ))
    return params


def prepare_pallas_params(params, weight_dtype=WEIGHT_DTYPE):
    """Stack per-block weights to (BLOCKS, ...), fold q-scale into in_proj, prebake
    cls+pos, cast streamed matmul weights to `weight_dtype` (biases/LN stay f32)."""
    D, DH, L, LPAD = CFG["D"], CFG["DH"], CFG["L"], CFG["LPAD"]
    scale = float(DH) ** -0.5
    stack = lambda k: jnp.stack([blk[k] for blk in params["blocks"]], axis=0)

    in_w = stack("in_w").at[:, :, :D].multiply(scale)   # fold attention scale into q
    in_b = stack("in_b").at[:, :D].multiply(scale)

    cls_pos = jnp.zeros((LPAD, D), jnp.float32)
    cls_pos = cls_pos.at[:L, :].set(params["pos"][0])
    cls_pos = cls_pos.at[0, :].add(params["cls"][0, 0])  # cls token lands in row 0

    wd = weight_dtype
    return dict(
        patch_w=params["patch_w"].astype(wd),
        cls_pos=cls_pos,                                  # (LPAD, D) f32, tiled per-batch later
        pre_g=params["pre_ln_g"].reshape(1, D), pre_b=params["pre_ln_b"].reshape(1, D),
        n1_g=stack("n1_g")[:, None, :], n1_b=stack("n1_b")[:, None, :],
        in_w=in_w.astype(wd), in_b=in_b[:, None, :],
        out_w=stack("out_w").astype(wd), out_b=stack("out_b")[:, None, :],
        n2_g=stack("n2_g")[:, None, :], n2_b=stack("n2_b")[:, None, :],
        fc1_w=stack("fc1_w").astype(wd), fc1_b=stack("fc1_b")[:, None, :],
        fc2_w=stack("fc2_w").astype(wd), fc2_b=stack("fc2_b")[:, None, :],
        head_g=params["head_ln_g"].reshape(1, D), head_b=params["head_ln_b"].reshape(1, D),
        head_w=params["head_w"].astype(wd),
    )


# ----------------------------- layout plumbing (XLA) --------------------------
def _pad_im2video(x):
    """PadIm2Video(pad_type='repeat', ntimes=2): NCHW -> NCDHW with T=2."""
    if x.ndim == 4:
        x = x[:, :, None]                         # (B, C, 1, H, W)
    if x.shape[2] == 1:
        x = jnp.tile(x, (1, 1, CFG["T"], 1, 1))
    return x


def _patchify(x):
    """Conv3d with kernel==stride, bias=False == im2col + matmul."""
    B, C, T, H, W = x.shape
    KT, KH, KW = CFG["KT"], CFG["KH"], CFG["KW"]
    x = x.reshape(B, C, T // KT, KT, H // KH, KH, W // KW, KW)
    # patches ordered (t', h', w'), features ordered (c, kt, kh, kw) -> matches
    # torch Conv3d weight.reshape(D, -1) and output.flatten(2).transpose(1, 2)
    x = x.transpose(0, 2, 4, 6, 1, 3, 5, 7)
    return x.reshape(B * (T // KT) * (H // KH) * (W // KW), C * KT * KH * KW)


# ----------------------------- fused forward ---------------------------------
def _full(shape):
    n = len(shape)
    return pl.BlockSpec(shape, lambda i, _n=n: (0,) * _n)


def _per_block(shape):
    n = len(shape)
    return pl.BlockSpec(shape, lambda i, _n=n: (i,) + (0,) * (_n - 1))


def vision_forward(x_img, prep):
    B = x_img.shape[0]
    D, OUT, CIN = CFG["D"], CFG["OUT"], CFG["CIN"]
    LPAD, NPATCH, BLOCKS = CFG["LPAD"], CFG["NPATCH"], CFG["BLOCKS"]

    # PadIm2Video + im2col + pad rows so the stem matmul produces the padded (B*LPAD, D)
    # token slab directly (row 0 = cls slot, rows > NPATCH = padding, both zero-patched).
    patches = _patchify(_pad_im2video(x_img)).reshape(B, NPATCH, CIN)
    patches_pad = jnp.zeros((B, LPAD, CIN), jnp.float32).at[:, 1:1 + NPATCH, :].set(patches)
    patches_pad = patches_pad.reshape(B * LPAD, CIN).astype(prep["patch_w"].dtype)
    cls_pos_flat = jnp.tile(prep["cls_pos"], (B, 1))          # (B*LPAD, D) f32

    operands = [patches_pad, prep["patch_w"], cls_pos_flat, prep["pre_g"], prep["pre_b"]]
    in_specs = [_full((B * LPAD, CIN)), _full((CIN, D)), _full((B * LPAD, D)),
                _full((1, D)), _full((1, D))]
    # TODO(synk): at production scale, tile in_w/fc1_w/fc2_w along the hidden dim (extra
    # inner grid axis) or drop to pl.Buffered(1) / fp8 so double-buffering fits v7x VMEM.
    for k, shp in (("n1_g", (1, 1, D)), ("n1_b", (1, 1, D)),
                   ("in_w", (1, D, 3 * D)), ("in_b", (1, 1, 3 * D)),
                   ("out_w", (1, D, D)), ("out_b", (1, 1, D)),
                   ("n2_g", (1, 1, D)), ("n2_b", (1, 1, D)),
                   ("fc1_w", (1, D, 4 * D)), ("fc1_b", (1, 1, 4 * D)),
                   ("fc2_w", (1, 4 * D, D)), ("fc2_b", (1, 1, D))):
        operands.append(prep[k])
        in_specs.append(_per_block(shp))
    operands += [prep["head_g"], prep["head_b"], prep["head_w"]]
    in_specs += [_full((1, D)), _full((1, D)), _full((D, OUT))]

    return pl.pallas_call(
        functools.partial(_fused_vision_kernel, B=B),
        out_shape=jax.ShapeDtypeStruct((B, OUT), jnp.float32),
        grid_spec=pltpu.PrefetchScalarGridSpec(
            num_scalar_prefetch=0,
            grid=(BLOCKS,),
            in_specs=in_specs,
            out_specs=pl.BlockSpec((B, OUT), lambda i: (0, 0)),
            scratch_shapes=[pltpu.VMEM((B * LPAD, D), jnp.float32)]),
        # TODO(synk): add a leading 'parallel' batch-chunk axis to use both v7x TCs.
        compiler_params=pltpu.CompilerParams(
            dimension_semantics=("arbitrary",),          # residual carried across block axis
            vmem_limit_bytes=48 * 1024 * 1024),          # scoped default is 16/32 MiB
    )(*operands)


def imagebind_forward(inputs, prep):
    outputs = {}
    for modality_key, modality_value in inputs.items():
        if modality_key != "vision":
            # TODO(synk): text/audio/depth/thermal/imu branches reuse the same fused pattern.
            raise NotImplementedError(modality_key)
        reduce_list = modality_value.ndim >= 5
        if reduce_list:
            B, S = modality_value.shape[:2]
            modality_value = modality_value.reshape((B * S,) + modality_value.shape[2:])
        emb = vision_forward(modality_value, prep)
        if reduce_list:
            emb = emb.reshape(B, S, -1).mean(axis=1)
        outputs[modality_key] = emb
    return outputs


# ------------------ pure-JAX references (matched-precision & f32) -------------
def ref_vision_forward_prep(x_img, prep):
    """Matched-precision reference: same prepared (bf16) weights, bf16 matmul inputs,
    f32 accumulation / LN / softmax — mirrors the kernel's numerics policy."""
    B = x_img.shape[0]
    D, DH, HEADS, L, NPATCH = (CFG[k] for k in ("D", "DH", "HEADS", "L", "NPATCH"))
    patches = _patchify(_pad_im2video(x_img))                     # (B*NPATCH, CIN)
    tok = _mm(patches, prep["patch_w"]).reshape(B, NPATCH, D)
    x = jnp.concatenate([jnp.zeros((B, 1, D), jnp.float32), tok], axis=1)
    x = x + prep["cls_pos"][None, :L, :]
    x = _ln(x, prep["pre_g"], prep["pre_b"])
    for bi in range(CFG["BLOCKS"]):
        h = _ln(x, prep["n1_g"][bi], prep["n1_b"][bi])
        qkv = _mm(h.reshape(B * L, D), prep["in_w"][bi]) + prep["in_b"][bi]
        qkv = qkv.reshape(B, L, 3, HEADS, DH)
        q = qkv[:, :, 0].transpose(0, 2, 1, 3)                    # q already pre-scaled
        k = qkv[:, :, 1].transpose(0, 2, 1, 3)
        v = qkv[:, :, 2].transpose(0, 2, 1, 3)
        s = jnp.einsum("bhqd,bhkd->bhqk", q, k)
        a = jnp.einsum("bhqk,bhkd->bhqd", jax.nn.softmax(s, axis=-1), v)
        a = a.transpose(0, 2, 1, 3).reshape(B * L, D)
        a = _mm(a, prep["out_w"][bi]) + prep["out_b"][bi]
        x = x + a.reshape(B, L, D)
        h2 = _ln(x, prep["n2_g"][bi], prep["n2_b"][bi])
        z = _gelu(_mm(h2.reshape(B * L, D), prep["fc1_w"][bi]) + prep["fc1_b"][bi])
        z = _mm(z, prep["fc2_w"][bi]) + prep["fc2_b"][bi]
        x = x + z.reshape(B, L, D)
    hcls = _ln(x[:, 0, :], prep["head_g"], prep["head_b"])
    emb = _mm(hcls, prep["head_w"])
    n = jnp.maximum(jnp.sqrt(jnp.sum(emb * emb, axis=-1, keepdims=True)), 1e-12)
    return emb / n


def ref_vision_forward_f32(x_img, params):
    """Full-f32 reference of the original module semantics (coarse sanity check)."""
    B, D, L, Hh, Dh = x_img.shape[0], CFG["D"], CFG["L"], CFG["HEADS"], CFG["DH"]
    x = _pad_im2video(x_img)
    tok = (_patchify(x) @ params["patch_w"]).reshape(B, CFG["NPATCH"], D)
    tok = jnp.concatenate([jnp.broadcast_to(params["cls"], (B, 1, D)), tok], axis=1)
    tok = tok + params["pos"]
    h = _ln(tok, params["pre_ln_g"], params["pre_ln_b"])
    for p in params["blocks"]:
        z = _ln(h, p["n1_g"], p["n1_b"])
        qkv = (z.reshape(B * L, D) @ p["in_w"] + p["in_b"]).reshape(B, L, 3, Hh, Dh)
        q = qkv[:, :, 0].transpose(0, 2, 1, 3) * (float(Dh) ** -0.5)
        k = qkv[:, :, 1].transpose(0, 2, 1, 3)
        v = qkv[:, :, 2].transpose(0, 2, 1, 3)
        s = jnp.einsum("bhqd,bhkd->bhqk", q, k)
        a = jnp.einsum("bhqk,bhkd->bhqd", jax.nn.softmax(s, axis=-1), v)
        a = a.transpose(0, 2, 1, 3).reshape(B * L, D) @ p["out_w"] + p["out_b"]
        h = h + a.reshape(B, L, D)
        z = _ln(h, p["n2_g"], p["n2_b"])
        z = _gelu(z.reshape(B * L, D) @ p["fc1_w"] + p["fc1_b"])
        z = z @ p["fc2_w"] + p["fc2_b"]
        h = h + z.reshape(B, L, D)
    h = _ln(h, params["head_ln_g"], params["head_ln_b"])
    emb = h[:, 0, :] @ params["head_w"]
    n = jnp.maximum(jnp.sqrt(jnp.sum(emb * emb, axis=-1, keepdims=True)), 1e-12)
    return emb / n


# ----------------------------------- main -------------------------------------
if __name__ == "__main__":
    key = jax.random.PRNGKey(0)
    k_param, k_x = jax.random.split(key)
    params = init_params(k_param)
    prep = prepare_pallas_params(params)

    x = jax.random.normal(k_x, (CFG["B"], CFG["C"], CFG["H"], CFG["W"]), jnp.float32)
    inputs = {"vision": x}

    outputs = imagebind_forward(inputs, prep)
    out = jax.block_until_ready(outputs["vision"])
    assert out.shape == (CFG["B"], CFG["OUT"]), out.shape

    # matched-precision check (same bf16 weights / f32 accumulation policy)
    ref_m = np.asarray(ref_vision_forward_prep(x, prep))
    np.testing.assert_allclose(np.asarray(out), ref_m, rtol=3e-4, atol=3e-4)
    # coarse check against the full-f32 module semantics (bf16 weight rounding only)
    ref_f = np.asarray(ref_vision_forward_f32(x, params))
    np.testing.assert_allclose(np.asarray(out), ref_f, rtol=5e-2, atol=5e-2)

    print("KERNEL_OK")
</pallas_src>

<mosaic_0001>
module attributes {stable_mosaic.version = 11 : i64} {
  func.func @_fused_vision_kernel(%arg0: i32, %arg1: memref<48x96xbf16, #tpu.memory_space<vmem>>, %arg2: memref<96x32xbf16, #tpu.memory_space<vmem>>, %arg3: memref<48x32xf32, #tpu.memory_space<vmem>>, %arg4: memref<1x32xf32, #tpu.memory_space<vmem>>, %arg5: memref<1x32xf32, #tpu.memory_space<vmem>>, %arg6: memref<1x1x32xf32, #tpu.memory_space<vmem>>, %arg7: memref<1x1x32xf32, #tpu.memory_space<vmem>>, %arg8: memref<1x32x96xbf16, #tpu.memory_space<vmem>>, %arg9: memref<1x1x96xf32, #tpu.memory_space<vmem>>, %arg10: memref<1x32x32xbf16, #tpu.memory_space<vmem>>, %arg11: memref<1x1x32xf32, #tpu.memory_space<vmem>>, %arg12: memref<1x1x32xf32, #tpu.memory_space<vmem>>, %arg13: memref<1x1x32xf32, #tpu.memory_space<vmem>>, %arg14: memref<1x32x128xbf16, #tpu.memory_space<vmem>>, %arg15: memref<1x1x128xf32, #tpu.memory_space<vmem>>, %arg16: memref<1x128x32xbf16, #tpu.memory_space<vmem>>, %arg17: memref<1x1x32xf32, #tpu.memory_space<vmem>>, %arg18: memref<1x32xf32, #tpu.memory_space<vmem>>, %arg19: memref<1x32xf32, #tpu.memory_space<vmem>>, %arg20: memref<32x16xbf16, #tpu.memory_space<vmem>>, %arg21: memref<2x16xf32, #tpu.memory_space<vmem>>, %arg22: memref<48x32xf32, #tpu.memory_space<vmem>>) attributes {dimension_semantics = [#tpu.dimension_semantics<arbitrary>], iteration_bounds = array<i64: 2>, scalar_prefetch = 0 : i64, scratch_operands = 1 : i64, tpu.core_type = #tpu.core_type<tc>, window_params = [{pipeline_mode = #tpu.pipeline_mode<synchronous>, transform_indices = @transform_0, window_bounds = array<i64: 48, 96>}, {pipeline_mode = #tpu.pipeline_mode<synchronous>, transform_indices = @transform_1, window_bounds = array<i64: 96, 32>}, {pipeline_mode = #tpu.pipeline_mode<synchronous>, transform_indices = @transform_2, window_bounds = array<i64: 48, 32>}, {pipeline_mode = #tpu.pipeline_mode<synchronous>, transform_indices = @transform_3, window_bounds = array<i64: 1, 32>}, {pipeline_mode = #tpu.pipeline_mode<synchronous>, transform_indices = @transform_4, window_bounds = array<i64: 1, 32>}, {transform_indices = @transform_5, window_bounds = array<i64: 1, 1, 32>}, {transform_indices = @transform_6, window_bounds = array<i64: 1, 1, 32>}, {transform_indices = @transform_7, window_bounds = array<i64: 1, 32, 96>}, {transform_indices = @transform_8, window_bounds = array<i64: 1, 1, 96>}, {transform_indices = @transform_9, window_bounds = array<i64: 1, 32, 32>}, {transform_indices = @transform_10, window_bounds = array<i64: 1, 1, 32>}, {transform_indices = @transform_11, window_bounds = array<i64: 1, 1, 32>}, {transform_indices = @transform_12, window_bounds = array<i64: 1, 1, 32>}, {transform_indices = @transform_13, window_bounds = array<i64: 1, 32, 128>}, {transform_indices = @transform_14, window_bounds = array<i64: 1, 1, 128>}, {transform_indices = @transform_15, window_bounds = array<i64: 1, 128, 32>}, {transform_indices = @transform_16, window_bounds = array<i64: 1, 1, 32>}, {pipeline_mode = #tpu.pipeline_mode<synchronous>, transform_indices = @transform_17, window_bounds = array<i64: 1, 32>}, {pipeline_mode = #tpu.pipeline_mode<synchronous>, transform_indices = @transform_18, window_bounds = array<i64: 1, 32>}, {pipeline_mode = #tpu.pipeline_mode<synchronous>, transform_indices = @transform_19, window_bounds = array<i64: 32, 16>}, {pipeline_mode = #tpu.pipeline_mode<synchronous>, transform_indices = @transform_20, window_bounds = array<i64: 2, 16>}]} {
    %c0_i32 = arith.constant 0 : i32
    %0 = arith.cmpi eq, %arg0, %c0_i32 : i32
    %1 = arith.extui %0 : i1 to i32
    %c0_i32_0 = arith.constant 0 : i32
    %2 = arith.cmpi ne, %1, %c0_i32_0 : i32
    scf.if %2 {
      %c0_63 = arith.constant 0 : index
      %c0_64 = arith.constant 0 : index
      %159 = vector.load %arg1[%c0_63, %c0_64] : memref<48x96xbf16, #tpu.memory_space<vmem>>, vector<48x96xbf16>
      %c0_65 = arith.constant 0 : index
      %c0_66 = arith.constant 0 : index
      %160 = vector.load %arg2[%c0_65, %c0_66] : memref<96x32xbf16, #tpu.memory_space<vmem>>, vector<96x32xbf16>
      %cst_67 = arith.constant dense<0.000000e+00> : vector<48x32xf32>
      %161 = tpu.matmul %159, %160, %cst_67 {dimension_numbers = #tpu.dot_dimension_numbers<[1], [0], [0], [1], [0, 0, 1, 1], [], []>} : vector<48x96xbf16>, vector<96x32xbf16>, vector<48x32xf32> -> vector<48x32xf32>
      %c0_68 = arith.constant 0 : index
      %c0_69 = arith.constant 0 : index
      %162 = vector.load %arg3[%c0_68, %c0_69] : memref<48x32xf32, #tpu.memory_space<vmem>>, vector<48x32xf32>
      %163 = arith.addf %161, %162 : vector<48x32xf32>
      %c0_70 = arith.constant 0 : index
      %c0_71 = arith.constant 0 : index
      %164 = vector.load %arg4[%c0_70, %c0_71] : memref<1x32xf32, #tpu.memory_space<vmem>>, vector<1x32xf32>
      %c0_72 = arith.constant 0 : index
      %c0_73 = arith.constant 0 : index
      %165 = vector.load %arg5[%c0_72, %c0_73] : memref<1x32xf32, #tpu.memory_space<vmem>>, vector<1x32xf32>
      %cst_74 = arith.constant dense<0.000000e+00> : vector<48xf32>
      %166 = vector.multi_reduction <add>, %163, %cst_74 [1] : vector<48x32xf32> to vector<48xf32>
      %167 = vector.shape_cast %166 : vector<48xf32> to vector<48x1xf32>
      %cst_75 = arith.constant 3.200000e+01 : f32
      %168 = vector.broadcast %cst_75 : f32 to vector<48x1xf32>
      %169 = arith.divf %167, %168 : vector<48x1xf32>
      %170 = vector.broadcast %169 : vector<48x1xf32> to vector<48x32xf32>
      %171 = arith.subf %163, %170 : vector<48x32xf32>
      %172 = arith.mulf %171, %171 : vector<48x32xf32>
      %cst_76 = arith.constant dense<0.000000e+00> : vector<48xf32>
      %173 = vector.multi_reduction <add>, %172, %cst_76 [1] : vector<48x32xf32> to vector<48xf32>
      %174 = vector.shape_cast %173 : vector<48xf32> to vector<48x1xf32>
      %cst_77 = arith.constant 3.200000e+01 : f32
      %175 = vector.broadcast %cst_77 : f32 to vector<48x1xf32>
      %176 = arith.divf %174, %175 : vector<48x1xf32>
      %177 = vector.broadcast %169 : vector<48x1xf32> to vector<48x32xf32>
      %178 = arith.subf %163, %177 : vector<48x32xf32>
      %cst_78 = arith.constant 9.99999997E-7 : f32
      %179 = vector.broadcast %cst_78 : f32 to vector<48x1xf32>
      %180 = arith.addf %176, %179 : vector<48x1xf32>
      %181 = math.rsqrt %180 : vector<48x1xf32>
      %182 = vector.broadcast %181 : vector<48x1xf32> to vector<48x32xf32>
      %183 = arith.mulf %178, %182 : vector<48x32xf32>
      %184 = vector.broadcast %164 : vector<1x32xf32> to vector<48x32xf32>
      %185 = arith.mulf %183, %184 : vector<48x32xf32>
      %186 = vector.broadcast %165 : vector<1x32xf32> to vector<48x32xf32>
      %187 = arith.addf %185, %186 : vector<48x32xf32>
      %c0_79 = arith.constant 0 : index
      %c0_80 = arith.constant 0 : index
      %188 = vector.load %arg22[%c0_79, %c0_80] : memref<48x32xf32, #tpu.memory_space<vmem>>, vector<48x32xf32>
      tpu.vector_store %arg22[%c0_79, %c0_80], %187 {strides = array<i32>} : memref<48x32xf32, #tpu.memory_space<vmem>>, vector<48x32xf32>,
    } else {
    }
    %c0 = arith.constant 0 : index
    %c0_1 = arith.constant 0 : index
    %3 = vector.load %arg22[%c0, %c0_1] : memref<48x32xf32, #tpu.memory_space<vmem>>, vector<48x32xf32>
    %c0_2 = arith.constant 0 : index
    %c0_3 = arith.constant 0 : index
    %c0_4 = arith.constant 0 : index
    %4 = vector.load %arg6[%c0_2, %c0_3, %c0_4] : memref<1x1x32xf32, #tpu.memory_space<vmem>>, vector<1x1x32xf32>
    %5 = vector.shape_cast %4 : vector<1x1x32xf32> to vector<1x32xf32>
    %c0_5 = arith.constant 0 : index
    %c0_6 = arith.constant 0 : index
    %c0_7 = arith.constant 0 : index
    %6 = vector.load %arg7[%c0_5, %c0_6, %c0_7] : memref<1x1x32xf32, #tpu.memory_space<vmem>>, vector<1x1x32xf32>
    %7 = vector.shape_cast %6 : vector<1x1x32xf32> to vector<1x32xf32>
    %cst = arith.constant dense<0.000000e+00> : vector<48xf32>
    %8 = vector.multi_reduction <add>, %3, %cst [1] : vector<48x32xf32> to vector<48xf32>
    %9 = vector.shape_cast %8 : vector<48xf32> to vector<48x1xf32>
    %cst_8 = arith.constant 3.200000e+01 : f32
    %10 = vector.broadcast %cst_8 : f32 to vector<48x1xf32>
    %11 = arith.divf %9, %10 : vector<48x1xf32>
    %12 = vector.broadcast %11 : vector<48x1xf32> to vector<48x32xf32>
    %13 = arith.subf %3, %12 : vector<48x32xf32>
    %14 = arith.mulf %13, %13 : vector<48x32xf32>
    %cst_9 = arith.constant dense<0.000000e+00> : vector<48xf32>
    %15 = vector.multi_reduction <add>, %14, %cst_9 [1] : vector<48x32xf32> to vector<48xf32>
    %16 = vector.shape_cast %15 : vector<48xf32> to vector<48x1xf32>
    %cst_10 = arith.constant 3.200000e+01 : f32
    %17 = vector.broadcast %cst_10 : f32 to vector<48x1xf32>
    %18 = arith.divf %16, %17 : vector<48x1xf32>
    %19 = vector.broadcast %11 : vector<48x1xf32> to vector<48x32xf32>
    %20 = arith.subf %3, %19 : vector<48x32xf32>
    %cst_11 = arith.constant 9.99999997E-7 : f32
    %21 = vector.broadcast %cst_11 : f32 to vector<48x1xf32>
    %22 = arith.addf %18, %21 : vector<48x1xf32>
    %23 = math.rsqrt %22 : vector<48x1xf32>
    %24 = vector.broadcast %23 : vector<48x1xf32> to vector<48x32xf32>
    %25 = arith.mulf %20, %24 : vector<48x32xf32>
    %26 = vector.broadcast %5 : vector<1x32xf32> to vector<48x32xf32>
    %27 = arith.mulf %25, %26 : vector<48x32xf32>
    %28 = vector.broadcast %7 : vector<1x32xf32> to vector<48x32xf32>
    %29 = arith.addf %27, %28 : vector<48x32xf32>
    %c0_12 = arith.constant 0 : index
    %c0_13 = arith.constant 0 : index
    %c0_14 = arith.constant 0 : index
    %30 = vector.load %arg8[%c0_12, %c0_13, %c0_14] : memref<1x32x96xbf16, #tpu.memory_space<vmem>>, vector<1x32x96xbf16>
    %31 = vector.shape_cast %30 : vector<1x32x96xbf16> to vector<32x96xbf16>
    %32 = arith.truncf %29 : vector<48x32xf32> to vector<48x32xbf16>
    %cst_15 = arith.constant dense<0.000000e+00> : vector<48x96xf32>
    %33 = tpu.matmul %32, %31, %cst_15 {dimension_numbers = #tpu.dot_dimension_numbers<[1], [0], [0], [1], [0, 0, 1, 1], [], []>} : vector<48x32xbf16>, vector<32x96xbf16>, vector<48x96xf32> -> vector<48x96xf32>
    %c0_16 = arith.constant 0 : index
    %c0_17 = arith.constant 0 : index
    %c0_18 = arith.constant 0 : index
    %34 = vector.load %arg9[%c0_16, %c0_17, %c0_18] : memref<1x1x96xf32, #tpu.memory_space<vmem>>, vector<1x1x96xf32>
    %35 = vector.shape_cast %34 : vector<1x1x96xf32> to vector<1x96xf32>
    %36 = vector.broadcast %35 : vector<1x96xf32> to vector<48x96xf32>
    %37 = arith.addf %33, %36 : vector<48x96xf32>
    %38 = vector.extract_strided_slice %37 {offsets = [0, 0], sizes = [48, 8], strides = [1, 1]} : vector<48x96xf32> to vector<48x8xf32>
    %39 = vector.shape_cast %38 : vector<48x8xf32> to vector<2x24x8xf32>
    %40 = vector.extract_strided_slice %37 {offsets = [0, 8], sizes = [48, 8], strides = [1, 1]} : vector<48x96xf32> to vector<48x8xf32>
    %41 = vector.shape_cast %40 : vector<48x8xf32> to vector<2x24x8xf32>
    %42 = vector.extract_strided_slice %37 {offsets = [0, 16], sizes = [48, 8], strides = [1, 1]} : vector<48x96xf32> to vector<48x8xf32>
    %43 = vector.shape_cast %42 : vector<48x8xf32> to vector<2x24x8xf32>
    %44 = vector.extract_strided_slice %37 {offsets = [0, 24], sizes = [48, 8], strides = [1, 1]} : vector<48x96xf32> to vector<48x8xf32>
    %45 = vector.shape_cast %44 : vector<48x8xf32> to vector<2x24x8xf32>
    %46 = tpu.concatenate %39, %41, %43, %45 in 0 : vector<2x24x8xf32>, vector<2x24x8xf32>, vector<2x24x8xf32>, vector<2x24x8xf32> -> vector<8x24x8xf32>
    %47 = vector.extract_strided_slice %37 {offsets = [0, 32], sizes = [48, 8], strides = [1, 1]} : vector<48x96xf32> to vector<48x8xf32>
    %48 = vector.shape_cast %47 : vector<48x8xf32> to vector<2x24x8xf32>
    %49 = vector.extract_strided_slice %37 {offsets = [0, 40], sizes = [48, 8], strides = [1, 1]} : vector<48x96xf32> to vector<48x8xf32>
    %50 = vector.shape_cast %49 : vector<48x8xf32> to vector<2x24x8xf32>
    %51 = vector.extract_strided_slice %37 {offsets = [0, 48], sizes = [48, 8], strides = [1, 1]} : vector<48x96xf32> to vector<48x8xf32>
    %52 = vector.shape_cast %51 : vector<48x8xf32> to vector<2x24x8xf32>
    %53 = vector.extract_strided_slice %37 {offsets = [0, 56], sizes = [48, 8], strides = [1, 1]} : vector<48x96xf32> to vector<48x8xf32>
    %54 = vector.shape_cast %53 : vector<48x8xf32> to vector<2x24x8xf32>
    %55 = tpu.concatenate %48, %50, %52, %54 in 0 : vector<2x24x8xf32>, vector<2x24x8xf32>, vector<2x24x8xf32>, vector<2x24x8xf32> -> vector<8x24x8xf32>
    %56 = vector.extract_strided_slice %37 {offsets = [0, 64], sizes = [48, 8], strides = [1, 1]} : vector<48x96xf32> to vector<48x8xf32>
    %57 = vector.shape_cast %56 : vector<48x8xf32> to vector<2x24x8xf32>
    %58 = vector.extract_strided_slice %37 {offsets = [0, 72], sizes = [48, 8], strides = [1, 1]} : vector<48x96xf32> to vector<48x8xf32>
    %59 = vector.shape_cast %58 : vector<48x8xf32> to vector<2x24x8xf32>
    %60 = vector.extract_strided_slice %37 {offsets = [0, 80], sizes = [48, 8], strides = [1, 1]} : vector<48x96xf32> to vector<48x8xf32>
    %61 = vector.shape_cast %60 : vector<48x8xf32> to vector<2x24x8xf32>
    %62 = vector.extract_strided_slice %37 {offsets = [0, 88], sizes = [48, 8], strides = [1, 1]} : vector<48x96xf32> to vector<48x8xf32>
    %63 = vector.shape_cast %62 : vector<48x8xf32> to vector<2x24x8xf32>
    %64 = tpu.concatenate %57, %59, %61, %63 in 0 : vector<2x24x8xf32>, vector<2x24x8xf32>, vector<2x24x8xf32>, vector<2x24x8xf32> -> vector<8x24x8xf32>
    %65 = tpu.iota {dimensions = array<i32: 2>} : vector<1x1x24xi32>
    %c17_i32 = arith.constant 17 : i32
    %66 = vector.broadcast %c17_i32 : i32 to vector<1x1x24xi32>
    %67 = arith.cmpi slt, %65, %66 : vector<1x1x24xi32>
    "tpu.trace_start"() <{level = 10 : i32, message = "zqd,zkd->zqk"}> : () -> ()
    %cst_19 = arith.constant dense<0.000000e+00> : vector<8x24x24xf32>
    %68 = tpu.matmul %46, %55, %cst_19 {dimension_numbers = #tpu.dot_dimension_numbers<[2], [2], [1], [1], [0, 0, 0, 1, 1, 1], [0], [0]>} : vector<8x24x8xf32>, vector<8x24x8xf32>, vector<8x24x24xf32> -> vector<8x24x24xf32>
    %cst_20 = arith.constant -1.000000e+30 : f32
    "tpu.trace_stop"() : () -> ()
    %69 = vector.shape_cast %67 : vector<1x1x24xi1> to vector<1x1x24xi1>
    %70 = vector.broadcast %69 : vector<1x1x24xi1> to vector<8x24x24xi1>
    %71 = vector.broadcast %cst_20 : f32 to vector<8x24x24xf32>
    %72 = arith.select %70, %68, %71 : vector<8x24x24xi1>, vector<8x24x24xf32>
    %cst_21 = arith.constant dense<0xFF800000> : vector<8x24xf32>
    %73 = vector.multi_reduction <maximumf>, %72, %cst_21 [2] : vector<8x24x24xf32> to vector<8x24xf32>
    %74 = vector.shape_cast %73 : vector<8x24xf32> to vector<8x24x1xf32>
    %75 = vector.broadcast %74 : vector<8x24x1xf32> to vector<8x24x24xf32>
    %76 = arith.subf %72, %75 : vector<8x24x24xf32>
    %77 = math.exp %76 : vector<8x24x24xf32>
    %cst_22 = arith.constant dense<0.000000e+00> : vector<8x24xf32>
    %78 = vector.multi_reduction <add>, %77, %cst_22 [2] : vector<8x24x24xf32> to vector<8x24xf32>
    %79 = vector.shape_cast %78 : vector<8x24xf32> to vector<8x24x1xf32>
    "tpu.trace_start"() <{level = 10 : i32, message = "zqk,zkd->zqd"}> : () -> ()
    %cst_23 = arith.constant dense<0.000000e+00> : vector<8x24x8xf32>
    %80 = tpu.matmul %77, %64, %cst_23 {dimension_numbers = #tpu.dot_dimension_numbers<[2], [1], [1], [2], [0, 0, 0, 1, 1, 2], [0], [0]>} : vector<8x24x24xf32>, vector<8x24x8xf32>, vector<8x24x8xf32> -> vector<8x24x8xf32>
    "tpu.trace_stop"() : () -> ()
    %cst_24 = arith.constant 1.000000e+00 : f32
    %81 = vector.broadcast %cst_24 : f32 to vector<8x24x1xf32>
    %82 = arith.divf %81, %79 : vector<8x24x1xf32>
    %83 = vector.broadcast %82 : vector<8x24x1xf32> to vector<8x24x8xf32>
    %84 = arith.mulf %80, %83 : vector<8x24x8xf32>
    %85 = vector.shape_cast %84 : vector<8x24x8xf32> to vector<4x48x8xf32>
    %86 = vector.extract_strided_slice %85 {offsets = [0, 0, 0], sizes = [1, 48, 8], strides = [1, 1, 1]} : vector<4x48x8xf32> to vector<1x48x8xf32>
    %87 = vector.shape_cast %86 : vector<1x48x8xf32> to vector<48x8xf32>
    %88 = vector.extract_strided_slice %85 {offsets = [1, 0, 0], sizes = [1, 48, 8], strides = [1, 1, 1]} : vector<4x48x8xf32> to vector<1x48x8xf32>
    %89 = vector.shape_cast %88 : vector<1x48x8xf32> to vector<48x8xf32>
    %90 = vector.extract_strided_slice %85 {offsets = [2, 0, 0], sizes = [1, 48, 8], strides = [1, 1, 1]} : vector<4x48x8xf32> to vector<1x48x8xf32>
    %91 = vector.shape_cast %90 : vector<1x48x8xf32> to vector<48x8xf32>
    %92 = vector.extract_strided_slice %85 {offsets = [3, 0, 0], sizes = [1, 48, 8], strides = [1, 1, 1]} : vector<4x48x8xf32> to vector<1x48x8xf32>
    %93 = vector.shape_cast %92 : vector<1x48x8xf32> to vector<48x8xf32>
    %94 = tpu.concatenate %87, %89, %91, %93 in 1 : vector<48x8xf32>, vector<48x8xf32>, vector<48x8xf32>, vector<48x8xf32> -> vector<48x32xf32>
    %c0_25 = arith.constant 0 : index
    %c0_26 = arith.constant 0 : index
    %c0_27 = arith.constant 0 : index
    %95 = vector.load %arg10[%c0_25, %c0_26, %c0_27] : memref<1x32x32xbf16, #tpu.memory_space<vmem>>, vector<1x32x32xbf16>
    %96 = vector.shape_cast %95 : vector<1x32x32xbf16> to vector<32x32xbf16>
    %97 = arith.truncf %94 : vector<48x32xf32> to vector<48x32xbf16>
    %cst_28 = arith.constant dense<0.000000e+00> : vector<48x32xf32>
    %98 = tpu.matmul %97, %96, %cst_28 {dimension_numbers = #tpu.dot_dimension_numbers<[1], [0], [0], [1], [0, 0, 1, 1], [], []>} : vector<48x32xbf16>, vector<32x32xbf16>, vector<48x32xf32> -> vector<48x32xf32>
    %c0_29 = arith.constant 0 : index
    %c0_30 = arith.constant 0 : index
    %c0_31 = arith.constant 0 : index
    %99 = vector.load %arg11[%c0_29, %c0_30, %c0_31] : memref<1x1x32xf32, #tpu.memory_space<vmem>>, vector<1x1x32xf32>
    %100 = vector.shape_cast %99 : vector<1x1x32xf32> to vector<1x32xf32>
    %101 = vector.broadcast %100 : vector<1x32xf32> to vector<48x32xf32>
    %102 = arith.addf %98, %101 : vector<48x32xf32>
    %103 = arith.addf %3, %102 : vector<48x32xf32>
    %c0_32 = arith.constant 0 : index
    %c0_33 = arith.constant 0 : index
    %c0_34 = arith.constant 0 : index
    %104 = vector.load %arg12[%c0_32, %c0_33, %c0_34] : memref<1x1x32xf32, #tpu.memory_space<vmem>>, vector<1x1x32xf32>
    %105 = vector.shape_cast %104 : vector<1x1x32xf32> to vector<1x32xf32>
    %c0_35 = arith.constant 0 : index
    %c0_36 = arith.constant 0 : index
    %c0_37 = arith.constant 0 : index
    %106 = vector.load %arg13[%c0_35, %c0_36, %c0_37] : memref<1x1x32xf32, #tpu.memory_space<vmem>>, vector<1x1x32xf32>
    %107 = vector.shape_cast %106 : vector<1x1x32xf32> to vector<1x32xf32>
    %cst_38 = arith.constant dense<0.000000e+00> : vector<48xf32>
    %108 = vector.multi_reduction <add>, %103, %cst_38 [1] : vector<48x32xf32> to vector<48xf32>
    %109 = vector.shape_cast %108 : vector<48xf32> to vector<48x1xf32>
    %cst_39 = arith.constant 3.200000e+01 : f32
    %110 = vector.broadcast %cst_39 : f32 to vector<48x1xf32>
    %111 = arith.divf %109, %110 : vector<48x1xf32>
    %112 = vector.broadcast %111 : vector<48x1xf32> to vector<48x32xf32>
    %113 = arith.subf %103, %112 : vector<48x32xf32>
    %114 = arith.mulf %113, %113 : vector<48x32xf32>
    %cst_40 = arith.constant dense<0.000000e+00> : vector<48xf32>
    %115 = vector.multi_reduction <add>, %114, %cst_40 [1] : vector<48x32xf32> to vector<48xf32>
    %116 = vector.shape_cast %115 : vector<48xf32> to vector<48x1xf32>
    %cst_41 = arith.constant 3.200000e+01 : f32
    %117 = vector.broadcast %cst_41 : f32 to vector<48x1xf32>
    %118 = arith.divf %116, %117 : vector<48x1xf32>
    %119 = vector.broadcast %111 : vector<48x1xf32> to vector<48x32xf32>
    %120 = arith.subf %103, %119 : vector<48x32xf32>
    %cst_42 = arith.constant 9.99999997E-7 : f32
    %121 = vector.broadcast %cst_42 : f32 to vector<48x1xf32>
    %122 = arith.addf %118, %121 : vector<48x1xf32>
    %123 = math.rsqrt %122 : vector<48x1xf32>
    %124 = vector.broadcast %123 : vector<48x1xf32> to vector<48x32xf32>
    %125 = arith.mulf %120, %124 : vector<48x32xf32>
    %126 = vector.broadcast %105 : vector<1x32xf32> to vector<48x32xf32>
    %127 = arith.mulf %125, %126 : vector<48x32xf32>
    %128 = vector.broadcast %107 : vector<1x32xf32> to vector<48x32xf32>
    %129 = arith.addf %127, %128 : vector<48x32xf32>
    %c0_43 = arith.constant 0 : index
    %c0_44 = arith.constant 0 : index
    %c0_45 = arith.constant 0 : index
    %130 = vector.load %arg14[%c0_43, %c0_44, %c0_45] : memref<1x32x128xbf16, #tpu.memory_space<vmem>>, vector<1x32x128xbf16>
    %131 = vector.shape_cast %130 : vector<1x32x128xbf16> to vector<32x128xbf16>
    %132 = arith.truncf %129 : vector<48x32xf32> to vector<48x32xbf16>
    %cst_46 = arith.constant dense<0.000000e+00> : vector<48x128xf32>
    %133 = tpu.matmul %132, %131, %cst_46 {dimension_numbers = #tpu.dot_dimension_numbers<[1], [0], [0], [1], [0, 0, 1, 1], [], []>} : vector<48x32xbf16>, vector<32x128xbf16>, vector<48x128xf32> -> vector<48x128xf32>
    %c0_47 = arith.constant 0 : index
    %c0_48 = arith.constant 0 : index
    %c0_49 = arith.constant 0 : index
    %134 = vector.load %arg15[%c0_47, %c0_48, %c0_49] : memref<1x1x128xf32, #tpu.memory_space<vmem>>, vector<1x1x128xf32>
    %135 = vector.shape_cast %134 : vector<1x1x128xf32> to vector<1x128xf32>
    %136 = vector.broadcast %135 : vector<1x128xf32> to vector<48x128xf32>
    %137 = arith.addf %133, %136 : vector<48x128xf32>
    %cst_50 = arith.constant 5.000000e-01 : f32
    %138 = vector.broadcast %cst_50 : f32 to vector<48x128xf32>
    %139 = arith.mulf %138, %137 : vector<48x128xf32>
    %cst_51 = arith.constant 0.707106769 : f32
    %140 = vector.broadcast %cst_51 : f32 to vector<48x128xf32>
    %141 = arith.mulf %137, %140 : vector<48x128xf32>
    %142 = math.erf %141 : vector<48x128xf32>
    %cst_52 = arith.constant 1.000000e+00 : f32
    %143 = vector.broadcast %cst_52 : f32 to vector<48x128xf32>
    %144 = arith.addf %143, %142 : vector<48x128xf32>
    %145 = arith.mulf %139, %144 : vector<48x128xf32>
    %c0_53 = arith.constant 0 : index
    %c0_54 = arith.constant 0 : index
    %c0_55 = arith.constant 0 : index
    %146 = vector.load %arg16[%c0_53, %c0_54, %c0_55] : memref<1x128x32xbf16, #tpu.memory_space<vmem>>, vector<1x128x32xbf16>
    %147 = vector.shape_cast %146 : vector<1x128x32xbf16> to vector<128x32xbf16>
    %148 = arith.truncf %145 : vector<48x128xf32> to vector<48x128xbf16>
    %cst_56 = arith.constant dense<0.000000e+00> : vector<48x32xf32>
    %149 = tpu.matmul %148, %147, %cst_56 {dimension_numbers = #tpu.dot_dimension_numbers<[1], [0], [0], [1], [0, 0, 1, 1], [], []>} : vector<48x128xbf16>, vector<128x32xbf16>, vector<48x32xf32> -> vector<48x32xf32>
    %c0_57 = arith.constant 0 : index
    %c0_58 = arith.constant 0 : index
    %c0_59 = arith.constant 0 : index
    %150 = vector.load %arg17[%c0_57, %c0_58, %c0_59] : memref<1x1x32xf32, #tpu.memory_space<vmem>>, vector<1x1x32xf32>
    %151 = vector.shape_cast %150 : vector<1x1x32xf32> to vector<1x32xf32>
    %152 = vector.broadcast %151 : vector<1x32xf32> to vector<48x32xf32>
    %153 = arith.addf %149, %152 : vector<48x32xf32>
    %154 = arith.addf %103, %153 : vector<48x32xf32>
    %c0_60 = arith.constant 0 : index
    %c0_61 = arith.constant 0 : index
    %155 = vector.load %arg22[%c0_60, %c0_61] : memref<48x32xf32, #tpu.memory_space<vmem>>, vector<48x32xf32>
    tpu.vector_store %arg22[%c0_60, %c0_61], %154 {strides = array<i32>} : memref<48x32xf32, #tpu.memory_space<vmem>>, vector<48x32xf32>,
    %c1_i32 = arith.constant 1 : i32
    %156 = arith.cmpi eq, %arg0, %c1_i32 : i32
    %157 = arith.extui %156 : i1 to i32
    %c0_i32_62 = arith.constant 0 : i32
    %158 = arith.cmpi ne, %157, %c0_i32_62 : i32
    scf.if %158 {
      %159 = vector.shape_cast %154 : vector<48x32xf32> to vector<2x24x32xf32>
      %160 = vector.extract_strided_slice %159 {offsets = [0, 0, 0], sizes = [2, 1, 32], strides = [1, 1, 1]} : vector<2x24x32xf32> to vector<2x1x32xf32>
      %161 = vector.shape_cast %160 : vector<2x1x32xf32> to vector<2x32xf32>
      %c0_63 = arith.constant 0 : index
      %c0_64 = arith.constant 0 : index
      %162 = vector.load %arg18[%c0_63, %c0_64] : memref<1x32xf32, #tpu.memory_space<vmem>>, vector<1x32xf32>
      %c0_65 = arith.constant 0 : index
      %c0_66 = arith.constant 0 : index
      %163 = vector.load %arg19[%c0_65, %c0_66] : memref<1x32xf32, #tpu.memory_space<vmem>>, vector<1x32xf32>
      %cst_67 = arith.constant dense<0.000000e+00> : vector<2xf32>
      %164 = vector.multi_reduction <add>, %161, %cst_67 [1] : vector<2x32xf32> to vector<2xf32>
      %165 = vector.shape_cast %164 : vector<2xf32> to vector<2x1xf32>
      %cst_68 = arith.constant 3.200000e+01 : f32
      %166 = vector.broadcast %cst_68 : f32 to vector<2x1xf32>
      %167 = arith.divf %165, %166 : vector<2x1xf32>
      %168 = vector.broadcast %167 : vector<2x1xf32> to vector<2x32xf32>
      %169 = arith.subf %161, %168 : vector<2x32xf32>
      %170 = arith.mulf %169, %169 : vector<2x32xf32>
      %cst_69 = arith.constant dense<0.000000e+00> : vector<2xf32>
      %171 = vector.multi_reduction <add>, %170, %cst_69 [1] : vector<2x32xf32> to vector<2xf32>
      %172 = vector.shape_cast %171 : vector<2xf32> to vector<2x1xf32>
      %cst_70 = arith.constant 3.200000e+01 : f32
      %173 = vector.broadcast %cst_70 : f32 to vector<2x1xf32>
      %174 = arith.divf %172, %173 : vector<2x1xf32>
      %175 = vector.broadcast %167 : vector<2x1xf32> to vector<2x32xf32>
      %176 = arith.subf %161, %175 : vector<2x32xf32>
      %cst_71 = arith.constant 9.99999997E-7 : f32
      %177 = vector.broadcast %cst_71 : f32 to vector<2x1xf32>
      %178 = arith.addf %174, %177 : vector<2x1xf32>
      %179 = math.rsqrt %178 : vector<2x1xf32>
      %180 = vector.broadcast %179 : vector<2x1xf32> to vector<2x32xf32>
      %181 = arith.mulf %176, %180 : vector<2x32xf32>
      %182 = vector.broadcast %162 : vector<1x32xf32> to vector<2x32xf32>
      %183 = arith.mulf %181, %182 : vector<2x32xf32>
      %184 = vector.broadcast %163 : vector<1x32xf32> to vector<2x32xf32>
      %185 = arith.addf %183, %184 : vector<2x32xf32>
      %c0_72 = arith.constant 0 : index
      %c0_73 = arith.constant 0 : index
      %186 = vector.load %arg20[%c0_72, %c0_73] : memref<32x16xbf16, #tpu.memory_space<vmem>>, vector<32x16xbf16>
      %187 = arith.truncf %185 : vector<2x32xf32> to vector<2x32xbf16>
      %cst_74 = arith.constant dense<0.000000e+00> : vector<2x16xf32>
      %188 = tpu.matmul %187, %186, %cst_74 {dimension_numbers = #tpu.dot_dimension_numbers<[1], [0], [0], [1], [0, 0, 1, 1], [], []>} : vector<2x32xbf16>, vector<32x16xbf16>, vector<2x16xf32> -> vector<2x16xf32>
      %189 = arith.mulf %188, %188 : vector<2x16xf32>
      %cst_75 = arith.constant dense<0.000000e+00> : vector<2xf32>
      %190 = vector.multi_reduction <add>, %189, %cst_75 [1] : vector<2x16xf32> to vector<2xf32>
      %191 = vector.shape_cast %190 : vector<2xf32> to vector<2x1xf32>
      %cst_76 = arith.constant 1.000000e-24 : f32
      %192 = vector.broadcast %cst_76 : f32 to vector<2x1xf32>
      %193 = arith.maximumf %191, %192 : vector<2x1xf32>
      %194 = math.rsqrt %193 : vector<2x1xf32>
      %195 = vector.broadcast %194 : vector<2x1xf32> to vector<2x16xf32>
      %196 = arith.mulf %188, %195 : vector<2x16xf32>
      %c0_77 = arith.constant 0 : index
      %c0_78 = arith.constant 0 : index
      %197 = vector.load %arg21[%c0_77, %c0_78] : memref<2x16xf32, #tpu.memory_space<vmem>>, vector<2x16xf32>
      tpu.vector_store %arg21[%c0_77, %c0_78], %196 {strides = array<i32>} : memref<2x16xf32, #tpu.memory_space<vmem>>, vector<2x16xf32>,
    } else {
    }
    return
  }
  func.func @transform_0(%arg0: i32) -> (i32, i32) {
    %c0_i32 = arith.constant 0 : i32
    %c0_i32_0 = arith.constant 0 : i32
    %c0_i32_1 = arith.constant 0 : i32
    return %c0_i32, %c0_i32_0 : i32, i32
  }
  func.func @transform_1(%arg0: i32) -> (i32, i32) {
    %c0_i32 = arith.constant 0 : i32
    %c0_i32_0 = arith.constant 0 : i32
    %c0_i32_1 = arith.constant 0 : i32
    return %c0_i32, %c0_i32_0 : i32, i32
  }
  func.func @transform_2(%arg0: i32) -> (i32, i32) {
    %c0_i32 = arith.constant 0 : i32
    %c0_i32_0 = arith.constant 0 : i32
    %c0_i32_1 = arith.constant 0 : i32
    return %c0_i32, %c0_i32_0 : i32, i32
  }
  func.func @transform_3(%arg0: i32) -> (i32, i32) {
    %c0_i32 = arith.constant 0 : i32
    %c0_i32_0 = arith.constant 0 : i32
    %c0_i32_1 = arith.constant 0 : i32
    return %c0_i32, %c0_i32_0 : i32, i32
  }
  func.func @transform_4(%arg0: i32) -> (i32, i32) {
    %c0_i32 = arith.constant 0 : i32
    %c0_i32_0 = arith.constant 0 : i32
    %c0_i32_1 = arith.constant 0 : i32
    return %c0_i32, %c0_i32_0 : i32, i32
  }
  func.func @transform_5(%arg0: i32) -> (i32, i32, i32) {
    %c0_i32 = arith.constant 0 : i32
    %c0_i32_0 = arith.constant 0 : i32
    %c0_i32_1 = arith.constant 0 : i32
    return %arg0, %c0_i32, %c0_i32_0 : i32, i32, i32
  }
  func.func @transform_6(%arg0: i32) -> (i32, i32, i32) {
    %c0_i32 = arith.constant 0 : i32
    %c0_i32_0 = arith.constant 0 : i32
    %c0_i32_1 = arith.constant 0 : i32
    return %arg0, %c0_i32, %c0_i32_0 : i32, i32, i32
  }
  func.func @transform_7(%arg0: i32) -> (i32, i32, i32) {
    %c0_i32 = arith.constant 0 : i32
    %c0_i32_0 = arith.constant 0 : i32
    %c0_i32_1 = arith.constant 0 : i32
    return %arg0, %c0_i32, %c0_i32_0 : i32, i32, i32
  }
  func.func @transform_8(%arg0: i32) -> (i32, i32, i32) {
    %c0_i32 = arith.constant 0 : i32
    %c0_i32_0 = arith.constant 0 : i32
    %c0_i32_1 = arith.constant 0 : i32
    return %arg0, %c0_i32, %c0_i32_0 : i32, i32, i32
  }
  func.func @transform_9(%arg0: i32) -> (i32, i32, i32) {
    %c0_i32 = arith.constant 0 : i32
    %c0_i32_0 = arith.constant 0 : i32
    %c0_i32_1 = arith.constant 0 : i32
    return %arg0, %c0_i32, %c0_i32_0 : i32, i32, i32
  }
  func.func @transform_10(%arg0: i32) -> (i32, i32, i32) {
    %c0_i32 = arith.constant 0 : i32
    %c0_i32_0 = arith.constant 0 : i32
    %c0_i32_1 = arith.constant 0 : i32
    return %arg0, %c0_i32, %c0_i32_0 : i32, i32, i32
  }
  func.func @transform_11(%arg0: i32) -> (i32, i32, i32) {
    %c0_i32 = arith.constant 0 : i32
    %c0_i32_0 = arith.constant 0 : i32
    %c0_i32_1 = arith.constant 0 : i32
    return %arg0, %c0_i32, %c0_i32_0 : i32, i32, i32
  }
  func.func @transform_12(%arg0: i32) -> (i32, i32, i32) {
    %c0_i32 = arith.constant 0 : i32
    %c0_i32_0 = arith.constant 0 : i32
    %c0_i32_1 = arith.constant 0 : i32
    return %arg0, %c0_i32, %c0_i32_0 : i32, i32, i32
  }
  func.func @transform_13(%arg0: i32) -> (i32, i32, i32) {
    %c0_i32 = arith.constant 0 : i32
    %c0_i32_0 = arith.constant 0 : i32
    %c0_i32_1 = arith.constant 0 : i32
    return %arg0, %c0_i32, %c0_i32_0 : i32, i32, i32
  }
  func.func @transform_14(%arg0: i32) -> (i32, i32, i32) {
    %c0_i32 = arith.constant 0 : i32
    %c0_i32_0 = arith.constant 0 : i32
    %c0_i32_1 = arith.constant 0 : i32
    return %arg0, %c0_i32, %c0_i32_0 : i32, i32, i32
  }
  func.func @transform_15(%arg0: i32) -> (i32, i32, i32) {
    %c0_i32 = arith.constant 0 : i32
    %c0_i32_0 = arith.constant 0 : i32
    %c0_i32_1 = arith.constant 0 : i32
    return %arg0, %c0_i32, %c0_i32_0 : i32, i32, i32
  }
  func.func @transform_16(%arg0: i32) -> (i32, i32, i32) {
    %c0_i32 = arith.constant 0 : i32
    %c0_i32_0 = arith.constant 0 : i32
    %c0_i32_1 = arith.constant 0 : i32
    return %arg0, %c0_i32, %c0_i32_0 : i32, i32, i32
  }
  func.func @transform_17(%arg0: i32) -> (i32, i32) {
    %c0_i32 = arith.constant 0 : i32
    %c0_i32_0 = arith.constant 0 : i32
    %c0_i32_1 = arith.constant 0 : i32
    return %c0_i32, %c0_i32_0 : i32, i32
  }
  func.func @transform_18(%arg0: i32) -> (i32, i32) {
    %c0_i32 = arith.constant 0 : i32
    %c0_i32_0 = arith.constant 0 : i32
    %c0_i32_1 = arith.constant 0 : i32
    return %c0_i32, %c0_i32_0 : i32, i32
  }
  func.func @transform_19(%arg0: i32) -> (i32, i32) {
    %c0_i32 = arith.constant 0 : i32
    %c0_i32_0 = arith.constant 0 : i32
    %c0_i32_1 = arith.constant 0 : i32
    return %c0_i32, %c0_i32_0 : i32, i32
  }
  func.func @transform_20(%arg0: i32) -> (i32, i32) {
    %c0_i32 = arith.constant 0 : i32
    %c0_i32_0 = arith.constant 0 : i32
    %c0_i32_1 = arith.constant 0 : i32
    return %c0_i32, %c0_i32_0 : i32, i32
  }
}

</mosaic_0001>

<llo_original>
// kernel: tpu_custom_call.1
$region0: #{tpu_custom_call.1}
  #allocation0 [shape = 'u32[]', space=smem, size = 0x4, offset = 0x4, fixed_abs, tag = 'smem constant byte address 0x4 - core index']
  #allocation1 [shape = 'u32[72,128]{1,0:T(1,128)}', space=vmem, size = 0x9000, scoped, tag = 'internal scratch']
  #allocation2 [shape = 'f32[48,32]{1,0:T(8,128)}', space=vmem, size = 0x6000, scoped, tag = 'scratch operand']
  %s0 = inlined_call_operand.vmem [shape: bf16[48,96], index: 0, kind: input, shape index: {}]
  %s1 = inlined_call_operand.vmem [shape: bf16[96,32], index: 1, kind: input, shape index: {}]
  %s2 = inlined_call_operand.vmem [shape: f32[48,32], index: 2, kind: input, shape index: {}]
  %s3 = inlined_call_operand.vmem [shape: f32[1,32], index: 3, kind: input, shape index: {}]
  %s4 = inlined_call_operand.vmem [shape: f32[1,32], index: 4, kind: input, shape index: {}]
  %s5 = inlined_call_operand.vmem [shape: f32[2,1,32], index: 5, kind: input, shape index: {}]
  %s6 = inlined_call_operand.vmem [shape: f32[2,1,32], index: 6, kind: input, shape index: {}]
  %s7 = inlined_call_operand.vmem [shape: bf16[2,32,96], index: 7, kind: input, shape index: {}]
  %s8 = inlined_call_operand.vmem [shape: f32[2,1,96], index: 8, kind: input, shape index: {}]
  %s9 = inlined_call_operand.vmem [shape: bf16[2,32,32], index: 9, kind: input, shape index: {}]
  %s10 = inlined_call_operand.vmem [shape: f32[2,1,32], index: 10, kind: input, shape index: {}]
  %s11 = inlined_call_operand.vmem [shape: f32[2,1,32], index: 11, kind: input, shape index: {}]
  %s12 = inlined_call_operand.vmem [shape: f32[2,1,32], index: 12, kind: input, shape index: {}]
  %s13 = inlined_call_operand.vmem [shape: bf16[2,32,128], index: 13, kind: input, shape index: {}]
  %s14 = inlined_call_operand.vmem [shape: f32[2,1,128], index: 14, kind: input, shape index: {}]
  %s15 = inlined_call_operand.vmem [shape: bf16[2,128,32], index: 15, kind: input, shape index: {}]
  %s16 = inlined_call_operand.vmem [shape: f32[2,1,32], index: 16, kind: input, shape index: {}]
  %s17 = inlined_call_operand.vmem [shape: f32[1,32], index: 17, kind: input, shape index: {}]
  %s18 = inlined_call_operand.vmem [shape: f32[1,32], index: 18, kind: input, shape index: {}]
  %s19 = inlined_call_operand.vmem [shape: bf16[32,16], index: 19, kind: input, shape index: {}]
  %s20 = inlined_call_operand.hbm [shape: f32[2,16], index: 20, kind: output, shape index: {}]
  %s21 = sld [smem:[#allocation0]]
  $region121: #{tpu_custom_call.1} parent=0
    _
  %s23 = ssub.s32 1, %s21
  %s24 = scalar_select 0, %s23, %s21
  $region1: #{tpu_custom_call.1} parent=0
    #allocation3 [shape = 'u8[1024]{0}', space=vmem, size = 0x400, scoped, tag = 'output window, operand 0, single buffered']
    #allocation4 [shape = 's32[2]{0}', space=sflag, size = 0x8, scoped, tag = 'scoped memory for tpu_custom_call.1']
    %25 = vsyncpa [#allocation4], 0
    loop: start=0, step=1, limit=4
    $region2: #{tpu_custom_call.1} parent=1 // loop_pre_header
      _
    $region3: #{tpu_custom_call.1} parent=1 // loop_header
      %s27 = sphi 0, %s31
      %p28 = scmp.ge.s32.totalorder %s27, 4
      %s35 = sphi 0, %s35
      %s37 = sphi 0, %s35
      %s38 = sphi 0, %s37
      %s52 = sphi 0, %s38
      %s56 = sphi 0, %s56
      %s58 = sphi 0, %s56
      %s59 = sphi 0, %s58
      %s73 = sphi 0, %s59
      %s77 = sphi 0, %s77
      %s79 = sphi 0, %s77
      %s80 = sphi 0, %s79
      %s94 = sphi 0, %s80
      %s98 = sphi 0, %s98
      %s100 = sphi 0, %s98
      %s101 = sphi 0, %s100
      %s115 = sphi 0, %s101
      %s119 = sphi 0, %s119
      %s121 = sphi 0, %s119
      %s122 = sphi 0, %s121
      %s136 = sphi 0, %s122
      %s142 = sphi 0, %s144
      %s145 = sphi 0, %s142
      %s146 = sphi 0, %s145
      %s162 = sphi 0, %s146
      %s168 = sphi 0, %s170
      %s171 = sphi 0, %s168
      %s172 = sphi 0, %s171
      %s188 = sphi 0, %s172
      %s194 = sphi 0, %s196
      %s197 = sphi 0, %s194
      %s198 = sphi 0, %s197
      %s214 = sphi 0, %s198
      %s220 = sphi 0, %s222
      %s223 = sphi 0, %s220
      %s224 = sphi 0, %s223
      %s240 = sphi 0, %s224
      %s246 = sphi 0, %s248
      %s249 = sphi 0, %s246
      %s250 = sphi 0, %s249
      %s266 = sphi 0, %s250
      %s272 = sphi 0, %s274
      %s275 = sphi 0, %s272
      %s276 = sphi 0, %s275
      %s292 = sphi 0, %s276
      %s298 = sphi 0, %s300
      %s301 = sphi 0, %s298
      %s302 = sphi 0, %s301
      %s318 = sphi 0, %s302
      %s324 = sphi 0, %s326
      %s327 = sphi 0, %s324
      %s328 = sphi 0, %s327
      %s344 = sphi 0, %s328
      %s350 = sphi 0, %s352
      %s353 = sphi 0, %s350
      %s354 = sphi 0, %s353
      %s370 = sphi 0, %s354
      %s376 = sphi 0, %s378
      %s379 = sphi 0, %s376
      %s380 = sphi 0, %s379
      %s396 = sphi 0, %s380
      %s402 = sphi 0, %s404
      %s405 = sphi 0, %s402
      %s406 = sphi 0, %s405
      %s422 = sphi 0, %s406
      %s428 = sphi 0, %s430
      %s431 = sphi 0, %s428
      %s432 = sphi 0, %s431
      %s448 = sphi 0, %s432
      %s452 = sphi 0, %s452
      %s454 = sphi 0, %s452
      %s455 = sphi 0, %s454
      %s469 = sphi 0, %s455
      %s473 = sphi 0, %s473
      %s475 = sphi 0, %s473
      %s476 = sphi 0, %s475
      %s490 = sphi 0, %s476
      %s494 = sphi 0, %s494
      %s496 = sphi 0, %s494
      %s497 = sphi 0, %s496
      %s511 = sphi 0, %s497
      %s515 = sphi 0, %s515
      %s517 = sphi 0, %s515
      %s518 = sphi 0, %s517
      %s532 = sphi 0, %s518
    $region4: #{tpu_custom_call.1} parent=1 // loop_header_branch
      %30 = sbr.rel (%p28) target = $region8
    $region5: #{tpu_custom_call.1} parent=1 // loop_body
      %s32 = ssub.s32 %s27, 1
      %s33 = ssub.s32 %s27, 2
      %s34 = sadd.s32 %s27, 1
      %s36 = sadd.s32 %s35, 1
      %p39 = scmp.eq.s32.totalorder %s27, 1
      %p40 = scmp.ne.s32.totalorder %s35, %s37
      %p41 = scmp.eq.s32.totalorder %s27, 0
      %p42 = por %p40, %p41
      %p43 = scmp.ne.s32.totalorder %s35, %s37
      %p44 = scmp.eq.s32.totalorder %s32, 1
      %p45 = por %p43, %p44
      %p46 = scmp.ne.s32.totalorder %s37, %s38
      %p47 = scmp.eq.s32.totalorder %s32, 0
      %p48 = por %p46, %p47
      %p49 = scmp.ne.s32.totalorder %s37, %s38
      %p50 = scmp.eq.s32.totalorder %s33, 1
      %p51 = por %p49, %p50
      %p53 = scmp.ne.s32.totalorder %s38, %s52
      %p54 = scmp.eq.s32.totalorder %s33, 0
      %p55 = por %p53, %p54
      %s57 = sadd.s32 %s56, 1
      %p60 = scmp.eq.s32.totalorder %s27, 1
      %p61 = scmp.ne.s32.totalorder %s56, %s58
      %p62 = scmp.eq.s32.totalorder %s27, 0
      %p63 = por %p61, %p62
      %p64 = scmp.ne.s32.totalorder %s56, %s58
      %p65 = scmp.eq.s32.totalorder %s32, 1
      %p66 = por %p64, %p65
      %p67 = scmp.ne.s32.totalorder %s58, %s59
      %p68 = scmp.eq.s32.totalorder %s32, 0
      %p69 = por %p67, %p68
      %p70 = scmp.ne.s32.totalorder %s58, %s59
      %p71 = scmp.eq.s32.totalorder %s33, 1
      %p72 = por %p70, %p71
      %p74 = scmp.ne.s32.totalorder %s59, %s73
      %p75 = scmp.eq.s32.totalorder %s33, 0
      %p76 = por %p74, %p75
      %s78 = sadd.s32 %s77, 1
      %p81 = scmp.eq.s32.totalorder %s27, 1
      %p82 = scmp.ne.s32.totalorder %s77, %s79
      %p83 = scmp.eq.s32.totalorder %s27, 0
      %p84 = por %p82, %p83
      %p85 = scmp.ne.s32.totalorder %s77, %s79
      %p86 = scmp.eq.s32.totalorder %s32, 1
      %p87 = por %p85, %p86
      %p88 = scmp.ne.s32.totalorder %s79, %s80
      %p89 = scmp.eq.s32.totalorder %s32, 0
      %p90 = por %p88, %p89
      %p91 = scmp.ne.s32.totalorder %s79, %s80
      %p92 = scmp.eq.s32.totalorder %s33, 1
      %p93 = por %p91, %p92
      %p95 = scmp.ne.s32.totalorder %s80, %s94
      %p96 = scmp.eq.s32.totalorder %s33, 0
      %p97 = por %p95, %p96
      %s99 = sadd.s32 %s98, 1
      %p102 = scmp.eq.s32.totalorder %s27, 1
      %p103 = scmp.ne.s32.totalorder %s98, %s100
      %p104 = scmp.eq.s32.totalorder %s27, 0
      %p105 = por %p103, %p104
      %p106 = scmp.ne.s32.totalorder %s98, %s100
      %p107 = scmp.eq.s32.totalorder %s32, 1
      %p108 = por %p106, %p107
      %p109 = scmp.ne.s32.totalorder %s100, %s101
      %p110 = scmp.eq.s32.totalorder %s32, 0
      %p111 = por %p109, %p110
      %p112 = scmp.ne.s32.totalorder %s100, %s101
      %p113 = scmp.eq.s32.totalorder %s33, 1
      %p114 = por %p112, %p113
      %p116 = scmp.ne.s32.totalorder %s101, %s115
      %p117 = scmp.eq.s32.totalorder %s33, 0
      %p118 = por %p116, %p117
      %s120 = sadd.s32 %s119, 1
      %p123 = scmp.eq.s32.totalorder %s27, 1
      %p124 = scmp.ne.s32.totalorder %s119, %s121
      %p125 = scmp.eq.s32.totalorder %s27, 0
      %p126 = por %p124, %p125
      %p127 = scmp.ne.s32.totalorder %s119, %s121
      %p128 = scmp.eq.s32.totalorder %s32, 1
      %p129 = por %p127, %p128
      %p130 = scmp.ne.s32.totalorder %s121, %s122
      %p131 = scmp.eq.s32.totalorder %s32, 0
      %p132 = por %p130, %p131
      %p133 = scmp.ne.s32.totalorder %s121, %s122
      %p134 = scmp.eq.s32.totalorder %s33, 1
      %p135 = por %p133, %p134
      %p137 = scmp.ne.s32.totalorder %s122, %s136
      %p138 = scmp.eq.s32.totalorder %s33, 0
      %p139 = por %p137, %p138
      %s140 = ssub.s32 %s27, %s34
      %p141 = scmp.eq.s32.totalorder %s140, 0
      %s143 = sadd.s32 %s142, 1
      %s144 = scalar_select %p141, %s142, %s143
      %p147 = pneg %p141
      %p148 = scmp.eq.s32.totalorder %s27, 1
      %p149 = por %p147, %p148
      %p150 = scmp.ne.s32.totalorder %s142, %s145
      %p151 = scmp.eq.s32.totalorder %s27, 0
      %p152 = por %p150, %p151
      %p153 = scmp.ne.s32.totalorder %s142, %s145
      %p154 = scmp.eq.s32.totalorder %s32, 1
      %p155 = por %p153, %p154
      %p156 = scmp.ne.s32.totalorder %s145, %s146
      %p157 = scmp.eq.s32.totalorder %s32, 0
      %p158 = por %p156, %p157
      %p159 = scmp.ne.s32.totalorder %s145, %s146
      %p160 = scmp.eq.s32.totalorder %s33, 1
      %p161 = por %p159, %p160
      %p163 = scmp.ne.s32.totalorder %s146, %s162
      %p164 = scmp.eq.s32.totalorder %s33, 0
      %p165 = por %p163, %p164
      %s166 = ssub.s32 %s27, %s34
      %p167 = scmp.eq.s32.totalorder %s166, 0
      %s169 = sadd.s32 %s168, 1
      %s170 = scalar_select %p167, %s168, %s169
      %p173 = pneg %p167
      %p174 = scmp.eq.s32.totalorder %s27, 1
      %p175 = por %p173, %p174
      %p176 = scmp.ne.s32.totalorder %s168, %s171
      %p177 = scmp.eq.s32.totalorder %s27, 0
      %p178 = por %p176, %p177
      %p179 = scmp.ne.s32.totalorder %s168, %s171
      %p180 = scmp.eq.s32.totalorder %s32, 1
      %p181 = por %p179, %p180
      %p182 = scmp.ne.s32.totalorder %s171, %s172
      %p183 = scmp.eq.s32.totalorder %s32, 0
      %p184 = por %p182, %p183
      %p185 = scmp.ne.s32.totalorder %s171, %s172
      %p186 = scmp.eq.s32.totalorder %s33, 1
      %p187 = por %p185, %p186
      %p189 = scmp.ne.s32.totalorder %s172, %s188
      %p190 = scmp.eq.s32.totalorder %s33, 0
      %p191 = por %p189, %p190
      %s192 = ssub.s32 %s27, %s34
      %p193 = scmp.eq.s32.totalorder %s192, 0
      %s195 = sadd.s32 %s194, 1
      %s196 = scalar_select %p193, %s194, %s195
      %p199 = pneg %p193
      %p200 = scmp.eq.s32.totalorder %s27, 1
      %p201 = por %p199, %p200
      %p202 = scmp.ne.s32.totalorder %s194, %s197
      %p203 = scmp.eq.s32.totalorder %s27, 0
      %p204 = por %p202, %p203
      %p205 = scmp.ne.s32.totalorder %s194, %s197
      %p206 = scmp.eq.s32.totalorder %s32, 1
      %p207 = por %p205, %p206
      %p208 = scmp.ne.s32.totalorder %s197, %s198
      %p209 = scmp.eq.s32.totalorder %s32, 0
      %p210 = por %p208, %p209
      %p211 = scmp.ne.s32.totalorder %s197, %s198
      %p212 = scmp.eq.s32.totalorder %s33, 1
      %p213 = por %p211, %p212
      %p215 = scmp.ne.s32.totalorder %s198, %s214
      %p216 = scmp.eq.s32.totalorder %s33, 0
      %p217 = por %p215, %p216
      %s218 = ssub.s32 %s27, %s34
      %p219 = scmp.eq.s32.totalorder %s218, 0
      %s221 = sadd.s32 %s220, 1
      %s222 = scalar_select %p219, %s220, %s221
      %p225 = pneg %p219
      %p226 = scmp.eq.s32.totalorder %s27, 1
      %p227 = por %p225, %p226
      %p228 = scmp.ne.s32.totalorder %s220, %s223
      %p229 = scmp.eq.s32.totalorder %s27, 0
      %p230 = por %p228, %p229
      %p231 = scmp.ne.s32.totalorder %s220, %s223
      %p232 = scmp.eq.s32.totalorder %s32, 1
      %p233 = por %p231, %p232
      %p234 = scmp.ne.s32.totalorder %s223, %s224
      %p235 = scmp.eq.s32.totalorder %s32, 0
      %p236 = por %p234, %p235
      %p237 = scmp.ne.s32.totalorder %s223, %s224
      %p238 = scmp.eq.s32.totalorder %s33, 1
      %p239 = por %p237, %p238
      %p241 = scmp.ne.s32.totalorder %s224, %s240
      %p242 = scmp.eq.s32.totalorder %s33, 0
      %p243 = por %p241, %p242
      %s244 = ssub.s32 %s27, %s34
      %p245 = scmp.eq.s32.totalorder %s244, 0
      %s247 = sadd.s32 %s246, 1
      %s248 = scalar_select %p245, %s246, %s247
      %p251 = pneg %p245
      %p252 = scmp.eq.s32.totalorder %s27, 1
      %p253 = por %p251, %p252
      %p254 = scmp.ne.s32.totalorder %s246, %s249
      %p255 = scmp.eq.s32.totalorder %s27, 0
      %p256 = por %p254, %p255
      %p257 = scmp.ne.s32.totalorder %s246, %s249
      %p258 = scmp.eq.s32.totalorder %s32, 1
      %p259 = por %p257, %p258
      %p260 = scmp.ne.s32.totalorder %s249, %s250
      %p261 = scmp.eq.s32.totalorder %s32, 0
      %p262 = por %p260, %p261
      %p263 = scmp.ne.s32.totalorder %s249, %s250
      %p264 = scmp.eq.s32.totalorder %s33, 1
      %p265 = por %p263, %p264
      %p267 = scmp.ne.s32.totalorder %s250, %s266
      %p268 = scmp.eq.s32.totalorder %s33, 0
      %p269 = por %p267, %p268
      %s270 = ssub.s32 %s27, %s34
      %p271 = scmp.eq.s32.totalorder %s270, 0
      %s273 = sadd.s32 %s272, 1
      %s274 = scalar_select %p271, %s272, %s273
      %p277 = pneg %p271
      %p278 = scmp.eq.s32.totalorder %s27, 1
      %p279 = por %p277, %p278
      %p280 = scmp.ne.s32.totalorder %s272, %s275
      %p281 = scmp.eq.s32.totalorder %s27, 0
      %p282 = por %p280, %p281
      %p283 = scmp.ne.s32.totalorder %s272, %s275
      %p284 = scmp.eq.s32.totalorder %s32, 1
      %p285 = por %p283, %p284
      %p286 = scmp.ne.s32.totalorder %s275, %s276
      %p287 = scmp.eq.s32.totalorder %s32, 0
      %p288 = por %p286, %p287
      %p289 = scmp.ne.s32.totalorder %s275, %s276
      %p290 = scmp.eq.s32.totalorder %s33, 1
      %p291 = por %p289, %p290
      %p293 = scmp.ne.s32.totalorder %s276, %s292
      %p294 = scmp.eq.s32.totalorder %s33, 0
      %p295 = por %p293, %p294
      %s296 = ssub.s32 %s27, %s34
      %p297 = scmp.eq.s32.totalorder %s296, 0
      %s299 = sadd.s32 %s298, 1
      %s300 = scalar_select %p297, %s298, %s299
      %p303 = pneg %p297
      %p304 = scmp.eq.s32.totalorder %s27, 1
      %p305 = por %p303, %p304
      %p306 = scmp.ne.s32.totalorder %s298, %s301
      %p307 = scmp.eq.s32.totalorder %s27, 0
      %p308 = por %p306, %p307
      %p309 = scmp.ne.s32.totalorder %s298, %s301
      %p310 = scmp.eq.s32.totalorder %s32, 1
      %p311 = por %p309, %p310
      %p312 = scmp.ne.s32.totalorder %s301, %s302
      %p313 = scmp.eq.s32.totalorder %s32, 0
      %p314 = por %p312, %p313
      %p315 = scmp.ne.s32.totalorder %s301, %s302
      %p316 = scmp.eq.s32.totalorder %s33, 1
      %p317 = por %p315, %p316
      %p319 = scmp.ne.s32.totalorder %s302, %s318
      %p320 = scmp.eq.s32.totalorder %s33, 0
      %p321 = por %p319, %p320
      %s322 = ssub.s32 %s27, %s34
      %p323 = scmp.eq.s32.totalorder %s322, 0
      %s325 = sadd.s32 %s324, 1
      %s326 = scalar_select %p323, %s324, %s325
      %p329 = pneg %p323
      %p330 = scmp.eq.s32.totalorder %s27, 1
      %p331 = por %p329, %p330
      %p332 = scmp.ne.s32.totalorder %s324, %s327
      %p333 = scmp.eq.s32.totalorder %s27, 0
      %p334 = por %p332, %p333
      %p335 = scmp.ne.s32.totalorder %s324, %s327
      %p336 = scmp.eq.s32.totalorder %s32, 1
      %p337 = por %p335, %p336
      %p338 = scmp.ne.s32.totalorder %s327, %s328
      %p339 = scmp.eq.s32.totalorder %s32, 0
      %p340 = por %p338, %p339
      %p341 = scmp.ne.s32.totalorder %s327, %s328
      %p342 = scmp.eq.s32.totalorder %s33, 1
      %p343 = por %p341, %p342
      %p345 = scmp.ne.s32.totalorder %s328, %s344
      %p346 = scmp.eq.s32.totalorder %s33, 0
      %p347 = por %p345, %p346
      %s348 = ssub.s32 %s27, %s34
      %p349 = scmp.eq.s32.totalorder %s348, 0
      %s351 = sadd.s32 %s350, 1
      %s352 = scalar_select %p349, %s350, %s351
      %p355 = pneg %p349
      %p356 = scmp.eq.s32.totalorder %s27, 1
      %p357 = por %p355, %p356
      %p358 = scmp.ne.s32.totalorder %s350, %s353
      %p359 = scmp.eq.s32.totalorder %s27, 0
      %p360 = por %p358, %p359
      %p361 = scmp.ne.s32.totalorder %s350, %s353
      %p362 = scmp.eq.s32.totalorder %s32, 1
      %p363 = por %p361, %p362
      %p364 = scmp.ne.s32.totalorder %s353, %s354
      %p365 = scmp.eq.s32.totalorder %s32, 0
      %p366 = por %p364, %p365
      %p367 = scmp.ne.s32.totalorder %s353, %s354
      %p368 = scmp.eq.s32.totalorder %s33, 1
      %p369 = por %p367, %p368
      %p371 = scmp.ne.s32.totalorder %s354, %s370
      %p372 = scmp.eq.s32.totalorder %s33, 0
      %p373 = por %p371, %p372
      %s374 = ssub.s32 %s27, %s34
      %p375 = scmp.eq.s32.totalorder %s374, 0
      %s377 = sadd.s32 %s376, 1
      %s378 = scalar_select %p375, %s376, %s377
      %p381 = pneg %p375
      %p382 = scmp.eq.s32.totalorder %s27, 1
      %p383 = por %p381, %p382
      %p384 = scmp.ne.s32.totalorder %s376, %s379
      %p385 = scmp.eq.s32.totalorder %s27, 0
      %p386 = por %p384, %p385
      %p387 = scmp.ne.s32.totalorder %s376, %s379
      %p388 = scmp.eq.s32.totalorder %s32, 1
      %p389 = por %p387, %p388
      %p390 = scmp.ne.s32.totalorder %s379, %s380
      %p391 = scmp.eq.s32.totalorder %s32, 0
      %p392 = por %p390, %p391
      %p393 = scmp.ne.s32.totalorder %s379, %s380
      %p394 = scmp.eq.s32.totalorder %s33, 1
      %p395 = por %p393, %p394
      %p397 = scmp.ne.s32.totalorder %s380, %s396
      %p398 = scmp.eq.s32.totalorder %s33, 0
      %p399 = por %p397, %p398
      %s400 = ssub.s32 %s27, %s34
      %p401 = scmp.eq.s32.totalorder %s400, 0
      %s403 = sadd.s32 %s402, 1
      %s404 = scalar_select %p401, %s402, %s403
      %p407 = pneg %p401
      %p408 = scmp.eq.s32.totalorder %s27, 1
      %p409 = por %p407, %p408
      %p410 = scmp.ne.s32.totalorder %s402, %s405
      %p411 = scmp.eq.s32.totalorder %s27, 0
      %p412 = por %p410, %p411
      %p413 = scmp.ne.s32.totalorder %s402, %s405
      %p414 = scmp.eq.s32.totalorder %s32, 1
      %p415 = por %p413, %p414
      %p416 = scmp.ne.s32.totalorder %s405, %s406
      %p417 = scmp.eq.s32.totalorder %s32, 0
      %p418 = por %p416, %p417
      %p419 = scmp.ne.s32.totalorder %s405, %s406
      %p420 = scmp.eq.s32.totalorder %s33, 1
      %p421 = por %p419, %p420
      %p423 = scmp.ne.s32.totalorder %s406, %s422
      %p424 = scmp.eq.s32.totalorder %s33, 0
      %p425 = por %p423, %p424
      %s426 = ssub.s32 %s27, %s34
      %p427 = scmp.eq.s32.totalorder %s426, 0
      %s429 = sadd.s32 %s428, 1
      %s430 = scalar_select %p427, %s428, %s429
      %p433 = pneg %p427
      %p434 = scmp.eq.s32.totalorder %s27, 1
      %p435 = por %p433, %p434
      %p436 = scmp.ne.s32.totalorder %s428, %s431
      %p437 = scmp.eq.s32.totalorder %s27, 0
      %p438 = por %p436, %p437
      %p439 = scmp.ne.s32.totalorder %s428, %s431
      %p440 = scmp.eq.s32.totalorder %s32, 1
      %p441 = por %p439, %p440
      %p442 = scmp.ne.s32.totalorder %s431, %s432
      %p443 = scmp.eq.s32.totalorder %s32, 0
      %p444 = por %p442, %p443
      %p445 = scmp.ne.s32.totalorder %s431, %s432
      %p446 = scmp.eq.s32.totalorder %s33, 1
      %p447 = por %p445, %p446
      %p449 = scmp.ne.s32.totalorder %s432, %s448
      %p450 = scmp.eq.s32.totalorder %s33, 0
      %p451 = por %p449, %p450
      %s453 = sadd.s32 %s452, 1
      %p456 = scmp.eq.s32.totalorder %s27, 1
      %p457 = scmp.ne.s32.totalorder %s452, %s454
      %p458 = scmp.eq.s32.totalorder %s27, 0
      %p459 = por %p457, %p458
      %p460 = scmp.ne.s32.totalorder %s452, %s454
      %p461 = scmp.eq.s32.totalorder %s32, 1
      %p462 = por %p460, %p461
      %p463 = scmp.ne.s32.totalorder %s454, %s455
      %p464 = scmp.eq.s32.totalorder %s32, 0
      %p465 = por %p463, %p464
      %p466 = scmp.ne.s32.totalorder %s454, %s455
      %p467 = scmp.eq.s32.totalorder %s33, 1
      %p468 = por %p466, %p467
      %p470 = scmp.ne.s32.totalorder %s455, %s469
      %p471 = scmp.eq.s32.totalorder %s33, 0
      %p472 = por %p470, %p471
      %s474 = sadd.s32 %s473, 1
      %p477 = scmp.eq.s32.totalorder %s27, 1
      %p478 = scmp.ne.s32.totalorder %s473, %s475
      %p479 = scmp.eq.s32.totalorder %s27, 0
      %p480 = por %p478, %p479
      %p481 = scmp.ne.s32.totalorder %s473, %s475
      %p482 = scmp.eq.s32.totalorder %s32, 1
      %p483 = por %p481, %p482
      %p484 = scmp.ne.s32.totalorder %s475, %s476
      %p485 = scmp.eq.s32.totalorder %s32, 0
      %p486 = por %p484, %p485
      %p487 = scmp.ne.s32.totalorder %s475, %s476
      %p488 = scmp.eq.s32.totalorder %s33, 1
      %p489 = por %p487, %p488
      %p491 = scmp.ne.s32.totalorder %s476, %s490
      %p492 = scmp.eq.s32.totalorder %s33, 0
      %p493 = por %p491, %p492
      %s495 = sadd.s32 %s494, 1
      %p498 = scmp.eq.s32.totalorder %s27, 1
      %p499 = scmp.ne.s32.totalorder %s494, %s496
      %p500 = scmp.eq.s32.totalorder %s27, 0
      %p501 = por %p499, %p500
      %p502 = scmp.ne.s32.totalorder %s494, %s496
      %p503 = scmp.eq.s32.totalorder %s32, 1
      %p504 = por %p502, %p503
      %p505 = scmp.ne.s32.totalorder %s496, %s497
      %p506 = scmp.eq.s32.totalorder %s32, 0
      %p507 = por %p505, %p506
      %p508 = scmp.ne.s32.totalorder %s496, %s497
      %p509 = scmp.eq.s32.totalorder %s33, 1
      %p510 = por %p508, %p509
      %p512 = scmp.ne.s32.totalorder %s497, %s511
      %p513 = scmp.eq.s32.totalorder %s33, 0
      %p514 = por %p512, %p513
      %s516 = sadd.s32 %s515, 1
      %p519 = scmp.eq.s32.totalorder %s27, 1
      %p520 = scmp.ne.s32.totalorder %s515, %s517
      %p521 = scmp.eq.s32.totalorder %s27, 0
      %p522 = por %p520, %p521
      %p523 = scmp.ne.s32.totalorder %s515, %s517
      %p524 = scmp.eq.s32.totalorder %s32, 1
      %p525 = por %p523, %p524
      %p526 = scmp.ne.s32.totalorder %s517, %s518
      %p527 = scmp.eq.s32.totalorder %s32, 0
      %p528 = por %p526, %p527
      %p529 = scmp.ne.s32.totalorder %s517, %s518
      %p530 = scmp.eq.s32.totalorder %s33, 1
      %p531 = por %p529, %p530
      %p533 = scmp.ne.s32.totalorder %s518, %s532
      %p534 = scmp.eq.s32.totalorder %s33, 0
      %p535 = por %p533, %p534
      %p536 = scmp.le.s32.totalorder 1, %s27
      %p537 = scmp.lt.s32.totalorder %s27, 3
      %p538 = pnand %p536, %p537
      %p539 = pneg %p538
      // Predicated region
      $region9: #{tpu_custom_call.1} parent=5 // pred_check
        _
      $region10: #{tpu_custom_call.1} parent=5 // pred_check_branch
        %541 = sbr.rel (%p538) target = $region12
      $region11: #{tpu_custom_call.1} parent=5 // pred_region
        %s542 = ssub.s32 %s27, 1
        // Predicated region
        $region13: #{tpu_custom_call.1} parent=11 // pred_check
          %p543 = pneg %p48
        $region14: #{tpu_custom_call.1} parent=11 // pred_check_branch
          %545 = sbr.rel (%p543) target = $region16
        $region15: #{tpu_custom_call.1} parent=11 // pred_region
          _
        $region16: #{tpu_custom_call.1} parent=11 // pred_fallthru
          _
        // Predicated region
        $region17: #{tpu_custom_call.1} parent=11 // pred_check
          %p546 = pneg %p69
        $region18: #{tpu_custom_call.1} parent=11 // pred_check_branch
          %548 = sbr.rel (%p546) target = $region20
        $region19: #{tpu_custom_call.1} parent=11 // pred_region
          _
        $region20: #{tpu_custom_call.1} parent=11 // pred_fallthru
          _
        // Predicated region
        $region21: #{tpu_custom_call.1} parent=11 // pred_check
          %p549 = pneg %p90
        $region22: #{tpu_custom_call.1} parent=11 // pred_check_branch
          %551 = sbr.rel (%p549) target = $region24
        $region23: #{tpu_custom_call.1} parent=11 // pred_region
          _
        $region24: #{tpu_custom_call.1} parent=11 // pred_fallthru
          _
        // Predicated region
        $region25: #{tpu_custom_call.1} parent=11 // pred_check
          %p552 = pneg %p111
        $region26: #{tpu_custom_call.1} parent=11 // pred_check_branch
          %554 = sbr.rel (%p552) target = $region28
        $region27: #{tpu_custom_call.1} parent=11 // pred_region
          _
        $region28: #{tpu_custom_call.1} parent=11 // pred_fallthru
          _
        // Predicated region
        $region29: #{tpu_custom_call.1} parent=11 // pred_check
          %p555 = pneg %p132
        $region30: #{tpu_custom_call.1} parent=11 // pred_check_branch
          %557 = sbr.rel (%p555) target = $region32
        $region31: #{tpu_custom_call.1} parent=11 // pred_region
          _
        $region32: #{tpu_custom_call.1} parent=11 // pred_fallthru
          _
        // Predicated region
        $region33: #{tpu_custom_call.1} parent=11 // pred_check
          %p558 = pneg %p465
        $region34: #{tpu_custom_call.1} parent=11 // pred_check_branch
          %560 = sbr.rel (%p558) target = $region36
        $region35: #{tpu_custom_call.1} parent=11 // pred_region
          _
        $region36: #{tpu_custom_call.1} parent=11 // pred_fallthru
          _
        // Predicated region
        $region37: #{tpu_custom_call.1} parent=11 // pred_check
          %p561 = pneg %p486
        $region38: #{tpu_custom_call.1} parent=11 // pred_check_branch
          %563 = sbr.rel (%p561) target = $region40
        $region39: #{tpu_custom_call.1} parent=11 // pred_region
          _
        $region40: #{tpu_custom_call.1} parent=11 // pred_fallthru
          _
        // Predicated region
        $region41: #{tpu_custom_call.1} parent=11 // pred_check
          %p564 = pneg %p507
        $region42: #{tpu_custom_call.1} parent=11 // pred_check_branch
          %566 = sbr.rel (%p564) target = $region44
        $region43: #{tpu_custom_call.1} parent=11 // pred_region
          _
        $region44: #{tpu_custom_call.1} parent=11 // pred_fallthru
          _
      $region12: #{tpu_custom_call.1} parent=5 // pred_fallthru
        _
      %p567 = scmp.lt.s32.totalorder %s27, 2
      // Predicated region
      $region45: #{tpu_custom_call.1} parent=5 // pred_check
        %p568 = pneg %p567
      $region46: #{tpu_custom_call.1} parent=5 // pred_check_branch
        %570 = sbr.rel (%p568) target = $region48
      $region47: #{tpu_custom_call.1} parent=5 // pred_region
        // Predicated region
        $region49: #{tpu_custom_call.1} parent=47 // pred_check
          %p571 = pneg %p152
        $region50: #{tpu_custom_call.1} parent=47 // pred_check_branch
          %573 = sbr.rel (%p571) target = $region52
        $region51: #{tpu_custom_call.1} parent=47 // pred_region
          %p574 = scmp.lt.s32.totalorder %s27, 1
          %s575 = scalar_select %p574, %s27, 1
          %s576 = scalar_lea.vmem %s5, %s575
        $region52: #{tpu_custom_call.1} parent=47 // pred_fallthru
          _
        // Predicated region
        $region53: #{tpu_custom_call.1} parent=47 // pred_check
          %p577 = pneg %p178
        $region54: #{tpu_custom_call.1} parent=47 // pred_check_branch
          %579 = sbr.rel (%p577) target = $region56
        $region55: #{tpu_custom_call.1} parent=47 // pred_region
          %p580 = scmp.lt.s32.totalorder %s27, 1
          %s581 = scalar_select %p580, %s27, 1
          %s582 = scalar_lea.vmem %s6, %s581
        $region56: #{tpu_custom_call.1} parent=47 // pred_fallthru
          _
        // Predicated region
        $region57: #{tpu_custom_call.1} parent=47 // pred_check
          %p583 = pneg %p204
        $region58: #{tpu_custom_call.1} parent=47 // pred_check_branch
          %585 = sbr.rel (%p583) target = $region60
        $region59: #{tpu_custom_call.1} parent=47 // pred_region
          %p586 = scmp.lt.s32.totalorder %s27, 1
          %s587 = scalar_select %p586, %s27, 1
          %s588 = smul.addr %s587, 4
          %s589 = smul.addr %s588, 4
          %s590 = scalar_lea.vmem %s7, %s589
        $region60: #{tpu_custom_call.1} parent=47 // pred_fallthru
          _
        // Predicated region
        $region61: #{tpu_custom_call.1} parent=47 // pred_check
          %p591 = pneg %p230
        $region62: #{tpu_custom_call.1} parent=47 // pred_check_branch
          %593 = sbr.rel (%p591) target = $region64
        $region63: #{tpu_custom_call.1} parent=47 // pred_region
          %p594 = scmp.lt.s32.totalorder %s27, 1
          %s595 = scalar_select %p594, %s27, 1
          %s596 = scalar_lea.vmem %s8, %s595
        $region64: #{tpu_custom_call.1} parent=47 // pred_fallthru
          _
        // Predicated region
        $region65: #{tpu_custom_call.1} parent=47 // pred_check
          %p597 = pneg %p256
        $region66: #{tpu_custom_call.1} parent=47 // pred_check_branch
          %599 = sbr.rel (%p597) target = $region68
        $region67: #{tpu_custom_call.1} parent=47 // pred_region
          %p600 = scmp.lt.s32.totalorder %s27, 1
          %s601 = scalar_select %p600, %s27, 1
          %s602 = smul.addr %s601, 4
          %s603 = smul.addr %s602, 4
          %s604 = scalar_lea.vmem %s9, %s603
        $region68: #{tpu_custom_call.1} parent=47 // pred_fallthru
          _
        // Predicated region
        $region69: #{tpu_custom_call.1} parent=47 // pred_check
          %p605 = pneg %p282
        $region70: #{tpu_custom_call.1} parent=47 // pred_check_branch
          %607 = sbr.rel (%p605) target = $region72
        $region71: #{tpu_custom_call.1} parent=47 // pred_region
          %p608 = scmp.lt.s32.totalorder %s27, 1
          %s609 = scalar_select %p608, %s27, 1
          %s610 = scalar_lea.vmem %s10, %s609
        $region72: #{tpu_custom_call.1} parent=47 // pred_fallthru
          _
        // Predicated region
        $region73: #{tpu_custom_call.1} parent=47 // pred_check
          %p611 = pneg %p308
        $region74: #{tpu_custom_call.1} parent=47 // pred_check_branch
          %613 = sbr.rel (%p611) target = $region76
        $region75: #{tpu_custom_call.1} parent=47 // pred_region
          %p614 = scmp.lt.s32.totalorder %s27, 1
          %s615 = scalar_select %p614, %s27, 1
          %s616 = scalar_lea.vmem %s11, %s615
        $region76: #{tpu_custom_call.1} parent=47 // pred_fallthru
          _
        // Predicated region
        $region77: #{tpu_custom_call.1} parent=47 // pred_check
          %p617 = pneg %p334
        $region78: #{tpu_custom_call.1} parent=47 // pred_check_branch
          %619 = sbr.rel (%p617) target = $region80
        $region79: #{tpu_custom_call.1} parent=47 // pred_region
          %p620 = scmp.lt.s32.totalorder %s27, 1
          %s621 = scalar_select %p620, %s27, 1
          %s622 = scalar_lea.vmem %s12, %s621
        $region80: #{tpu_custom_call.1} parent=47 // pred_fallthru
          _
        // Predicated region
        $region81: #{tpu_custom_call.1} parent=47 // pred_check
          %p623 = pneg %p360
        $region82: #{tpu_custom_call.1} parent=47 // pred_check_branch
          %625 = sbr.rel (%p623) target = $region84
        $region83: #{tpu_custom_call.1} parent=47 // pred_region
          %p626 = scmp.lt.s32.totalorder %s27, 1
          %s627 = scalar_select %p626, %s27, 1
          %s628 = smul.addr %s627, 4
          %s629 = smul.addr %s628, 4
          %s630 = scalar_lea.vmem %s13, %s629
        $region84: #{tpu_custom_call.1} parent=47 // pred_fallthru
          _
        // Predicated region
        $region85: #{tpu_custom_call.1} parent=47 // pred_check
          %p631 = pneg %p386
        $region86: #{tpu_custom_call.1} parent=47 // pred_check_branch
          %633 = sbr.rel (%p631) target = $region88
        $region87: #{tpu_custom_call.1} parent=47 // pred_region
          %p634 = scmp.lt.s32.totalorder %s27, 1
          %s635 = scalar_select %p634, %s27, 1
          %s636 = scalar_lea.vmem %s14, %s635
        $region88: #{tpu_custom_call.1} parent=47 // pred_fallthru
          _
        // Predicated region
        $region89: #{tpu_custom_call.1} parent=47 // pred_check
          %p637 = pneg %p412
        $region90: #{tpu_custom_call.1} parent=47 // pred_check_branch
          %639 = sbr.rel (%p637) target = $region92
        $region91: #{tpu_custom_call.1} parent=47 // pred_region
          %p640 = scmp.lt.s32.totalorder %s27, 1
          %s641 = scalar_select %p640, %s27, 1
          %s642 = smul.addr %s641, 16
          %s643 = smul.addr %s642, 4
          %s644 = scalar_lea.vmem %s15, %s643
        $region92: #{tpu_custom_call.1} parent=47 // pred_fallthru
          _
        // Predicated region
        $region93: #{tpu_custom_call.1} parent=47 // pred_check
          %p645 = pneg %p438
        $region94: #{tpu_custom_call.1} parent=47 // pred_check_branch
          %647 = sbr.rel (%p645) target = $region96
        $region95: #{tpu_custom_call.1} parent=47 // pred_region
          %p648 = scmp.lt.s32.totalorder %s27, 1
          %s649 = scalar_select %p648, %s27, 1
          %s650 = scalar_lea.vmem %s16, %s649
        $region96: #{tpu_custom_call.1} parent=47 // pred_fallthru
          _
      $region48: #{tpu_custom_call.1} parent=5 // pred_fallthru
        _
      %p651 = scmp.le.s32.totalorder 1, %s27
      %p652 = scmp.lt.s32.totalorder %s27, 3
      %p653 = pnand %p651, %p652
      %p654 = pneg %p653
      // Predicated region
      $region97: #{tpu_custom_call.1} parent=5 // pred_check
        _
      $region98: #{tpu_custom_call.1} parent=5 // pred_check_branch
        %656 = sbr.rel (%p653) target = $region100
      $region99: #{tpu_custom_call.1} parent=5 // pred_region
        %s657 = ssub.s32 %s27, 1
        %p658 = pneg %p48
        %p659 = pneg %p45
        %p660 = pneg %p69
        %p661 = pneg %p66
        %p662 = pneg %p90
        %p663 = pneg %p87
        %p664 = pneg %p111
        %p665 = pneg %p108
        %p666 = pneg %p132
        %p667 = pneg %p129
        %p668 = scmp.lt.s32.totalorder %s32, 1
        %s669 = scalar_select %p668, %s32, 1
        %s670 = scalar_lea.vmem %s5, %s669
        %p671 = pneg %p158
        %p672 = pneg %p155
        %p673 = scmp.lt.s32.totalorder %s32, 1
        %s674 = scalar_select %p673, %s32, 1
        %s675 = scalar_lea.vmem %s6, %s674
        %p676 = pneg %p184
        %p677 = pneg %p181
        %p678 = scmp.lt.s32.totalorder %s32, 1
        %s679 = scalar_select %p678, %s32, 1
        %s680 = smul.addr %s679, 4
        %s681 = smul.addr %s680, 4
        %s682 = scalar_lea.vmem %s7, %s681
        %p683 = pneg %p210
        %p684 = pneg %p207
        %p685 = scmp.lt.s32.totalorder %s32, 1
        %s686 = scalar_select %p685, %s32, 1
        %s687 = scalar_lea.vmem %s8, %s686
        %p688 = pneg %p236
        %p689 = pneg %p233
        %p690 = scmp.lt.s32.totalorder %s32, 1
        %s691 = scalar_select %p690, %s32, 1
        %s692 = smul.addr %s691, 4
        %s693 = smul.addr %s692, 4
        %s694 = scalar_lea.vmem %s9, %s693
        %p695 = pneg %p262
        %p696 = pneg %p259
        %p697 = scmp.lt.s32.totalorder %s32, 1
        %s698 = scalar_select %p697, %s32, 1
        %s699 = scalar_lea.vmem %s10, %s698
        %p700 = pneg %p288
        %p701 = pneg %p285
        %p702 = scmp.lt.s32.totalorder %s32, 1
        %s703 = scalar_select %p702, %s32, 1
        %s704 = scalar_lea.vmem %s11, %s703
        %p705 = pneg %p314
        %p706 = pneg %p311
        %p707 = scmp.lt.s32.totalorder %s32, 1
        %s708 = scalar_select %p707, %s32, 1
        %s709 = scalar_lea.vmem %s12, %s708
        %p710 = pneg %p340
        %p711 = pneg %p337
        %p712 = scmp.lt.s32.totalorder %s32, 1
        %s713 = scalar_select %p712, %s32, 1
        %s714 = smul.addr %s713, 4
        %s715 = smul.addr %s714, 4
        %s716 = scalar_lea.vmem %s13, %s715
        %p717 = pneg %p366
        %p718 = pneg %p363
        %p719 = scmp.lt.s32.totalorder %s32, 1
        %s720 = scalar_select %p719, %s32, 1
        %s721 = scalar_lea.vmem %s14, %s720
        %p722 = pneg %p392
        %p723 = pneg %p389
        %p724 = scmp.lt.s32.totalorder %s32, 1
        %s725 = scalar_select %p724, %s32, 1
        %s726 = smul.addr %s725, 16
        %s727 = smul.addr %s726, 4
        %s728 = scalar_lea.vmem %s15, %s727
        %p729 = pneg %p418
        %p730 = pneg %p415
        %p731 = scmp.lt.s32.totalorder %s32, 1
        %s732 = scalar_select %p731, %s32, 1
        %s733 = scalar_lea.vmem %s16, %s732
        %p734 = pneg %p444
        %p735 = pneg %p441
        %p736 = pneg %p465
        %p737 = pneg %p462
        %p738 = pneg %p486
        %p739 = pneg %p483
        %p740 = pneg %p507
        %p741 = pneg %p504
        %p742 = pneg %p528
        %p743 = pneg %p525
        %p744 = scmp.lt.s32.totalorder %s32, 1
        %s745 = scalar_select %p744, %s32, 1
        %s746 = scalar_lea.vmem %s5, %s745
        %p747 = scmp.lt.s32.totalorder %s32, 1
        %s748 = scalar_select %p747, %s32, 1
        %s749 = scalar_lea.vmem %s6, %s748
        %p750 = scmp.lt.s32.totalorder %s32, 1
        %s751 = scalar_select %p750, %s32, 1
        %s752 = smul.addr %s751, 4
        %s753 = smul.addr %s752, 4
        %s754 = scalar_lea.vmem %s7, %s753
        %p755 = scmp.lt.s32.totalorder %s32, 1
        %s756 = scalar_select %p755, %s32, 1
        %s757 = scalar_lea.vmem %s8, %s756
        %p758 = scmp.lt.s32.totalorder %s32, 1
        %s759 = scalar_select %p758, %s32, 1
        %s760 = smul.addr %s759, 4
        %s761 = smul.addr %s760, 4
        %s762 = scalar_lea.vmem %s9, %s761
        %p763 = scmp.lt.s32.totalorder %s32, 1
        %s764 = scalar_select %p763, %s32, 1
        %s765 = scalar_lea.vmem %s10, %s764
        %p766 = scmp.lt.s32.totalorder %s32, 1
        %s767 = scalar_select %p766, %s32, 1
        %s768 = scalar_lea.vmem %s11, %s767
        %p769 = scmp.lt.s32.totalorder %s32, 1
        %s770 = scalar_select %p769, %s32, 1
        %s771 = scalar_lea.vmem %s12, %s770
        %p772 = scmp.lt.s32.totalorder %s32, 1
        %s773 = scalar_select %p772, %s32, 1
        %s774 = smul.addr %s773, 4
        %s775 = smul.addr %s774, 4
        %s776 = scalar_lea.vmem %s13, %s775
        %p777 = scmp.lt.s32.totalorder %s32, 1
        %s778 = scalar_select %p777, %s32, 1
        %s779 = scalar_lea.vmem %s14, %s778
        %p780 = scmp.lt.s32.totalorder %s32, 1
        %s781 = scalar_select %p780, %s32, 1
        %s782 = smul.addr %s781, 16
        %s783 = smul.addr %s782, 4
        %s784 = scalar_lea.vmem %s15, %s783
        %p785 = scmp.lt.s32.totalorder %s32, 1
        %s786 = scalar_select %p785, %s32, 1
        %s787 = scalar_lea.vmem %s16, %s786
        %p789 = scmp.eq.s32.totalorder %s32, 0
        // Predicated region
        $region101: #{tpu_custom_call.1} parent=99 // pred_check
          %p790 = pneg %p789
        $region102: #{tpu_custom_call.1} parent=99 // pred_check_branch
          %792 = sbr.rel (%p790) target = $region104
        $region103: #{tpu_custom_call.1} parent=99 // pred_region
          %v793 = vld [vmem:[%s0] sm:$0xf]
          %v794 = vld [vmem:[%s0 + $0x4] sm:$0xf]
          %v795 = vld [vmem:[%s0 + $0x8] sm:$0xf]
          %v796 = vld [vmem:[%s0 + $0xc] sm:$0xf]
          %v797 = vld [vmem:[%s0 + $0x10] sm:$0xf]
          %v798 = vld [vmem:[%s0 + $0x14] sm:$0xf]
          %v799 = vld [vmem:[%s1] sm:$0xf]
          %v800 = vld [vmem:[%s1 + $0x4] sm:$0xf]
          %v801 = vld [vmem:[%s1 + $0x8] sm:$0xf]
          %v802 = vld [vmem:[%s1 + $0xc] sm:$0xf]
          %v803 = vld [vmem:[%s1 + $0x10] sm:$0xf]
          %v804 = vld [vmem:[%s1 + $0x14] sm:$0xf]
          %v805 = vld [vmem:[%s1 + $0x18] sm:$0xf]
          %v806 = vld [vmem:[%s1 + $0x1c] sm:$0xf]
          %v807 = vld [vmem:[%s1 + $0x20] sm:$0xf]
          %v808 = vld [vmem:[%s1 + $0x24] sm:$0xf]
          %v809 = vld [vmem:[%s1 + $0x28] sm:$0xf]
          %v810 = vld [vmem:[%s1 + $0x2c] sm:$0xf]
          %v811 = vld [vmem:[%s2] sm:$0xff]
          %v812 = vld [vmem:[%s2 + $0x8] sm:$0xff]
          %v813 = vld [vmem:[%s2 + $0x10] sm:$0xff]
          %v814 = vld [vmem:[%s2 + $0x18] sm:$0xff]
          %v815 = vld [vmem:[%s2 + $0x20] sm:$0xff]
          %v816 = vld [vmem:[%s2 + $0x28] sm:$0xff]
          %v823 = vunpack.c.l.b16 %v793
          %v824 = vunpack.c.l.b16 %v794
          %v825 = vunpack.c.l.b16 %v795
          %v826 = vunpack.c.l.b16 %v796
          %v827 = vunpack.c.l.b16 %v797
          %v828 = vunpack.c.l.b16 %v798
          %v829 = vpack.c.b16 %v824, %v823
          %v830 = vpack.c.b16 %v826, %v825
          %v831 = vpack.c.b16 %v828, %v827
          %v844 = vunpack.c.l.b16 %v799
          %v845 = vunpack.c.l.b16 %v800
          %v846 = vunpack.c.l.b16 %v801
          %v847 = vunpack.c.l.b16 %v802
          %v848 = vunpack.c.l.b16 %v803
          %v849 = vunpack.c.l.b16 %v804
          %v850 = vunpack.c.l.b16 %v805
          %v851 = vunpack.c.l.b16 %v806
          %v852 = vunpack.c.l.b16 %v807
          %v853 = vunpack.c.l.b16 %v808
          %v854 = vunpack.c.l.b16 %v809
          %v855 = vunpack.c.l.b16 %v810
          %v856 = vpack.c.b16 %v845, %v844
          %v857 = vpack.c.b16 %v847, %v846
          %v858 = vpack.c.b16 %v849, %v848
          %v859 = vpack.c.b16 %v851, %v850
          %v860 = vpack.c.b16 %v853, %v852
          %v861 = vpack.c.b16 %v855, %v854
          %vm868 = vcmask 785408
          %v870 = vsel %vm868, %v829, 0
          %v873 = vsel %vm868, %v830, 0
          %v876 = vsel %vm868, %v831, 0
          %878 = vmatpush.bf16.msra.mxu0 0
          %879 = vmatpush.bf16.msra.mxu0 0
          %880 = vmatpush.bf16.msra.mxu0 %v861
          %881 = vmatpush.bf16.msra.mxu0 %v860
          %882 = vmatpush.bf16.msra.mxu0 %v859
          %883 = vmatpush.bf16.msra.mxu0 %v858
          %884 = vmatpush.bf16.msra.mxu0 %v857
          %885 = vmatpush.bf16.msra.mxu0 %v856
          %886 = vmatmul.bf16.gmra.mxu0 %v870
          %v887 = vpop.f32.mrf.mxu0
          %v888 = vadd.f32 %v811, %v887
          %v889 = vpop.f32.mrf.mxu0
          %v890 = vadd.f32 %v812, %v889
          %891 = vmatmul.bf16.gmra.mxu0 %v873
          %v892 = vpop.f32.mrf.mxu0
          %v893 = vadd.f32 %v813, %v892
          %v894 = vpop.f32.mrf.mxu0
          %v895 = vadd.f32 %v814, %v894
          %896 = vmatmul.bf16.gmra.mxu0 %v876
          %v897 = vpop.f32.mrf.mxu0
          %v898 = vadd.f32 %v815, %v897
          %v899 = vpop.f32.mrf.mxu0
          %v900 = vadd.f32 %v816, %v899
          %901 = vdwg.mxu0
          %v902 = vld [vmem:[%s3] sm:$0x1]
          %v903 = vld [vmem:[%s4] sm:$0x1]
          %vm904 = vcmask 261120
          %v905 = vsel %vm904, %v888, 0.0
          %906 = vadd.xlane.f32.xlu0 %v905
          %v907 = vpop.xlane.xlu0 %906
          %v908 = vsel %vm904, %v890, 0.0
          %909 = vadd.xlane.f32.xlu0 %v908
          %v910 = vpop.xlane.xlu0 %909
          %v911 = vsel %vm904, %v893, 0.0
          %912 = vadd.xlane.f32.xlu0 %v911
          %v913 = vpop.xlane.xlu0 %912
          %v914 = vsel %vm904, %v895, 0.0
          %915 = vadd.xlane.f32.xlu0 %v914
          %v916 = vpop.xlane.xlu0 %915
          %v917 = vsel %vm904, %v898, 0.0
          %918 = vadd.xlane.f32.xlu0 %v917
          %v919 = vpop.xlane.xlu0 %918
          %v920 = vsel %vm904, %v900, 0.0
          %921 = vadd.xlane.f32.xlu0 %v920
          %v922 = vpop.xlane.xlu0 %921
          %v923 = vrcp.pop 32.0
          %v924 = vmul.f32 32.0, %v923
          %v925 = vsub.f32 1.0, %v924
          %v926 = vmul.f32 %v923, %v925
          %v927 = vadd.f32 %v923, %v926
          %vm928 = vweird.f32 %v923
          %v929 = vsel %vm928, %v923, %v927
          %v930 = vmul.f32 %v907, %v929
          %v931 = vmul.f32 %v910, %v929
          %v932 = vmul.f32 %v913, %v929
          %v933 = vmul.f32 %v916, %v929
          %v934 = vmul.f32 %v919, %v929
          %v935 = vmul.f32 %v922, %v929
          %v936 = vsub.f32 %v888, %v930
          %v937 = vsub.f32 %v890, %v931
          %v938 = vsub.f32 %v893, %v932
          %v939 = vsub.f32 %v895, %v933
          %v940 = vsub.f32 %v898, %v934
          %v941 = vsub.f32 %v900, %v935
          %v942 = vmul.f32 %v936, %v936
          %v943 = vmul.f32 %v937, %v937
          %v944 = vmul.f32 %v938, %v938
          %v945 = vmul.f32 %v939, %v939
          %v946 = vmul.f32 %v940, %v940
          %v947 = vmul.f32 %v941, %v941
          %v948 = vsel %vm904, %v942, 0.0
          %949 = vadd.xlane.f32.xlu0 %v948
          %v950 = vpop.xlane.xlu0 %949
          %v951 = vsel %vm904, %v943, 0.0
          %952 = vadd.xlane.f32.xlu0 %v951
          %v953 = vpop.xlane.xlu0 %952
          %v954 = vsel %vm904, %v944, 0.0
          %955 = vadd.xlane.f32.xlu0 %v954
          %v956 = vpop.xlane.xlu0 %955
          %v957 = vsel %vm904, %v945, 0.0
          %958 = vadd.xlane.f32.xlu0 %v957
          %v959 = vpop.xlane.xlu0 %958
          %v960 = vsel %vm904, %v946, 0.0
          %961 = vadd.xlane.f32.xlu0 %v960
          %v962 = vpop.xlane.xlu0 %961
          %v963 = vsel %vm904, %v947, 0.0
          %964 = vadd.xlane.f32.xlu0 %v963
          %v965 = vpop.xlane.xlu0 %964
          %v966 = vmul.f32 %v950, %v929
          %v967 = vmul.f32 %v953, %v929
          %v968 = vmul.f32 %v956, %v929
          %v969 = vmul.f32 %v959, %v929
          %v970 = vmul.f32 %v962, %v929
          %v971 = vmul.f32 %v965, %v929
          %v972 = vadd.f32 %v966, 1e-06
          %v973 = vadd.f32 %v967, 1e-06
          %v974 = vadd.f32 %v968, 1e-06
          %v975 = vadd.f32 %v969, 1e-06
          %v976 = vadd.f32 %v970, 1e-06
          %v977 = vadd.f32 %v971, 1e-06
          %v978 = vrsqrt.pop %v972
          %v979 = vmul.f32 %v978, %v972
          %v980 = vmul.f32 %v979, %v978
          %v981 = vmul.f32 0.5, %v980
          %v982 = vsub.f32 1.5, %v981
          %v983 = vmul.f32 %v978, %v982
          %vm984 = vweird.f32 %v972
          %vm985 = vweird.f32 %v978
          %vm986 = vmor %vm984, %vm985
          %v987 = vsel %vm986, %v978, %v983
          %v988 = vrsqrt.pop %v973
          %v989 = vmul.f32 %v988, %v973
          %v990 = vmul.f32 %v989, %v988
          %v991 = vmul.f32 0.5, %v990
          %v992 = vsub.f32 1.5, %v991
          %v993 = vmul.f32 %v988, %v992
          %vm994 = vweird.f32 %v973
          %vm995 = vweird.f32 %v988
          %vm996 = vmor %vm994, %vm995
          %v997 = vsel %vm996, %v988, %v993
          %v998 = vrsqrt.pop %v974
          %v999 = vmul.f32 %v998, %v974
          %v1000 = vmul.f32 %v999, %v998
          %v1001 = vmul.f32 0.5, %v1000
          %v1002 = vsub.f32 1.5, %v1001
          %v1003 = vmul.f32 %v998, %v1002
          %vm1004 = vweird.f32 %v974
          %vm1005 = vweird.f32 %v998
          %vm1006 = vmor %vm1004, %vm1005
          %v1007 = vsel %vm1006, %v998, %v1003
          %v1008 = vrsqrt.pop %v975
          %v1009 = vmul.f32 %v1008, %v975
          %v1010 = vmul.f32 %v1009, %v1008
          %v1011 = vmul.f32 0.5, %v1010
          %v1012 = vsub.f32 1.5, %v1011
          %v1013 = vmul.f32 %v1008, %v1012
          %vm1014 = vweird.f32 %v975
          %vm1015 = vweird.f32 %v1008
          %vm1016 = vmor %vm1014, %vm1015
          %v1017 = vsel %vm1016, %v1008, %v1013
          %v1018 = vrsqrt.pop %v976
          %v1019 = vmul.f32 %v1018, %v976
          %v1020 = vmul.f32 %v1019, %v1018
          %v1021 = vmul.f32 0.5, %v1020
          %v1022 = vsub.f32 1.5, %v1021
          %v1023 = vmul.f32 %v1018, %v1022
          %vm1024 = vweird.f32 %v976
          %vm1025 = vweird.f32 %v1018
          %vm1026 = vmor %vm1024, %vm1025
          %v1027 = vsel %vm1026, %v1018, %v1023
          %v1028 = vrsqrt.pop %v977
          %v1029 = vmul.f32 %v1028, %v977
          %v1030 = vmul.f32 %v1029, %v1028
          %v1031 = vmul.f32 0.5, %v1030
          %v1032 = vsub.f32 1.5, %v1031
          %v1033 = vmul.f32 %v1028, %v1032
          %vm1034 = vweird.f32 %v977
          %vm1035 = vweird.f32 %v1028
          %vm1036 = vmor %vm1034, %vm1035
          %v1037 = vsel %vm1036, %v1028, %v1033
          %v1038 = vmul.f32 %v936, %v987
          %v1039 = vmul.f32 %v937, %v997
          %v1040 = vmul.f32 %v938, %v1007
          %v1041 = vmul.f32 %v939, %v1017
          %v1042 = vmul.f32 %v940, %v1027
          %v1043 = vmul.f32 %v941, %v1037
          %v1045 = vperm.slane %v902, 0
          %v1047 = vmul.f32 %v1038, %v1045
          %v1048 = vmul.f32 %v1039, %v1045
          %v1049 = vmul.f32 %v1040, %v1045
          %v1050 = vmul.f32 %v1041, %v1045
          %v1051 = vmul.f32 %v1042, %v1045
          %v1052 = vmul.f32 %v1043, %v1045
          %v1054 = vperm.slane %v903, 0
          %v1056 = vadd.f32 %v1047, %v1054
          %v1057 = vadd.f32 %v1048, %v1054
          %v1058 = vadd.f32 %v1049, %v1054
          %v1059 = vadd.f32 %v1050, %v1054
          %v1060 = vadd.f32 %v1051, %v1054
          %v1061 = vadd.f32 %v1052, %v1054
          %1062 = vst.msk [vmem:[#allocation2] sm:$0xff] %vm904, %v1056
          %1063 = vst.msk [vmem:[#allocation2 + $0x8] sm:$0xff] %vm904, %v1057
          %1064 = vst.msk [vmem:[#allocation2 + $0x10] sm:$0xff] %vm904, %v1058
          %1065 = vst.msk [vmem:[#allocation2 + $0x18] sm:$0xff] %vm904, %v1059
          %1066 = vst.msk [vmem:[#allocation2 + $0x20] sm:$0xff] %vm904, %v1060
          %1067 = vst.msk [vmem:[#allocation2 + $0x28] sm:$0xff] %vm904, %v1061
        $region104: #{tpu_custom_call.1} parent=99 // pred_fallthru
          _
        %v1068 = vld [vmem:[#allocation2] sm:$0xff]
        %v1069 = vld [vmem:[#allocation2 + $0x8] sm:$0xff]
        %v1070 = vld [vmem:[#allocation2 + $0x10] sm:$0xff]
        %v1071 = vld [vmem:[#allocation2 + $0x18] sm:$0xff]
        %v1072 = vld [vmem:[#allocation2 + $0x20] sm:$0xff]
        %v1073 = vld [vmem:[#allocation2 + $0x28] sm:$0xff]
        %v1074 = vld [vmem:[%s746] sm:$0x1]
        %v1075 = vld [vmem:[%s749] sm:$0x1]
        %vm1076 = vcmask 261120
        %v1077 = vsel %vm1076, %v1068, 0.0
        %1078 = vadd.xlane.f32.xlu0 %v1077
        %v1079 = vpop.xlane.xlu0 %1078
        %v1080 = vsel %vm1076, %v1069, 0.0
        %1081 = vadd.xlane.f32.xlu0 %v1080
        %v1082 = vpop.xlane.xlu0 %1081
        %v1083 = vsel %vm1076, %v1070, 0.0
        %1084 = vadd.xlane.f32.xlu0 %v1083
        %v1085 = vpop.xlane.xlu0 %1084
        %v1086 = vsel %vm1076, %v1071, 0.0
        %1087 = vadd.xlane.f32.xlu0 %v1086
        %v1088 = vpop.xlane.xlu0 %1087
        %v1089 = vsel %vm1076, %v1072, 0.0
        %1090 = vadd.xlane.f32.xlu0 %v1089
        %v1091 = vpop.xlane.xlu0 %1090
        %v1092 = vsel %vm1076, %v1073, 0.0
        %1093 = vadd.xlane.f32.xlu0 %v1092
        %v1094 = vpop.xlane.xlu0 %1093
        %v1095 = vrcp.pop 32.0
        %v1096 = vmul.f32 32.0, %v1095
        %v1097 = vsub.f32 1.0, %v1096
        %v1098 = vmul.f32 %v1095, %v1097
        %v1099 = vadd.f32 %v1095, %v1098
        %vm1100 = vweird.f32 %v1095
        %v1101 = vsel %vm1100, %v1095, %v1099
        %v1102 = vmul.f32 %v1079, %v1101
        %v1103 = vmul.f32 %v1082, %v1101
        %v1104 = vmul.f32 %v1085, %v1101
        %v1105 = vmul.f32 %v1088, %v1101
        %v1106 = vmul.f32 %v1091, %v1101
        %v1107 = vmul.f32 %v1094, %v1101
        %v1108 = vsub.f32 %v1068, %v1102
        %v1109 = vsub.f32 %v1069, %v1103
        %v1110 = vsub.f32 %v1070, %v1104
        %v1111 = vsub.f32 %v1071, %v1105
        %v1112 = vsub.f32 %v1072, %v1106
        %v1113 = vsub.f32 %v1073, %v1107
        %v1114 = vmul.f32 %v1108, %v1108
        %v1115 = vmul.f32 %v1109, %v1109
        %v1116 = vmul.f32 %v1110, %v1110
        %v1117 = vmul.f32 %v1111, %v1111
        %v1118 = vmul.f32 %v1112, %v1112
        %v1119 = vmul.f32 %v1113, %v1113
        %v1120 = vsel %vm1076, %v1114, 0.0
        %1121 = vadd.xlane.f32.xlu0 %v1120
        %v1122 = vpop.xlane.xlu0 %1121
        %v1123 = vsel %vm1076, %v1115, 0.0
        %1124 = vadd.xlane.f32.xlu0 %v1123
        %v1125 = vpop.xlane.xlu0 %1124
        %v1126 = vsel %vm1076, %v1116, 0.0
        %1127 = vadd.xlane.f32.xlu0 %v1126
        %v1128 = vpop.xlane.xlu0 %1127
        %v1129 = vsel %vm1076, %v1117, 0.0
        %1130 = vadd.xlane.f32.xlu0 %v1129
        %v1131 = vpop.xlane.xlu0 %1130
        %v1132 = vsel %vm1076, %v1118, 0.0
        %1133 = vadd.xlane.f32.xlu0 %v1132
        %v1134 = vpop.xlane.xlu0 %1133
        %v1135 = vsel %vm1076, %v1119, 0.0
        %1136 = vadd.xlane.f32.xlu0 %v1135
        %v1137 = vpop.xlane.xlu0 %1136
        %v1138 = vmul.f32 %v1122, %v1101
        %v1139 = vmul.f32 %v1125, %v1101
        %v1140 = vmul.f32 %v1128, %v1101
        %v1141 = vmul.f32 %v1131, %v1101
        %v1142 = vmul.f32 %v1134, %v1101
        %v1143 = vmul.f32 %v1137, %v1101
        %v1144 = vadd.f32 %v1138, 1e-06
        %v1145 = vadd.f32 %v1139, 1e-06
        %v1146 = vadd.f32 %v1140, 1e-06
        %v1147 = vadd.f32 %v1141, 1e-06
        %v1148 = vadd.f32 %v1142, 1e-06
        %v1149 = vadd.f32 %v1143, 1e-06
        %v1150 = vrsqrt.pop %v1144
        %v1151 = vmul.f32 %v1150, %v1144
        %v1152 = vmul.f32 %v1151, %v1150
        %v1153 = vmul.f32 0.5, %v1152
        %v1154 = vsub.f32 1.5, %v1153
        %v1155 = vmul.f32 %v1150, %v1154
        %vm1156 = vweird.f32 %v1144
        %vm1157 = vweird.f32 %v1150
        %vm1158 = vmor %vm1156, %vm1157
        %v1159 = vsel %vm1158, %v1150, %v1155
        %v1160 = vrsqrt.pop %v1145
        %v1161 = vmul.f32 %v1160, %v1145
        %v1162 = vmul.f32 %v1161, %v1160
        %v1163 = vmul.f32 0.5, %v1162
        %v1164 = vsub.f32 1.5, %v1163
        %v1165 = vmul.f32 %v1160, %v1164
        %vm1166 = vweird.f32 %v1145
        %vm1167 = vweird.f32 %v1160
        %vm1168 = vmor %vm1166, %vm1167
        %v1169 = vsel %vm1168, %v1160, %v1165
        %v1170 = vrsqrt.pop %v1146
        %v1171 = vmul.f32 %v1170, %v1146
        %v1172 = vmul.f32 %v1171, %v1170
        %v1173 = vmul.f32 0.5, %v1172
        %v1174 = vsub.f32 1.5, %v1173
        %v1175 = vmul.f32 %v1170, %v1174
        %vm1176 = vweird.f32 %v1146
        %vm1177 = vweird.f32 %v1170
        %vm1178 = vmor %vm1176, %vm1177
        %v1179 = vsel %vm1178, %v1170, %v1175
        %v1180 = vrsqrt.pop %v1147
        %v1181 = vmul.f32 %v1180, %v1147
        %v1182 = vmul.f32 %v1181, %v1180
        %v1183 = vmul.f32 0.5, %v1182
        %v1184 = vsub.f32 1.5, %v1183
        %v1185 = vmul.f32 %v1180, %v1184
        %vm1186 = vweird.f32 %v1147
        %vm1187 = vweird.f32 %v1180
        %vm1188 = vmor %vm1186, %vm1187
        %v1189 = vsel %vm1188, %v1180, %v1185
        %v1190 = vrsqrt.pop %v1148
        %v1191 = vmul.f32 %v1190, %v1148
        %v1192 = vmul.f32 %v1191, %v1190
        %v1193 = vmul.f32 0.5, %v1192
        %v1194 = vsub.f32 1.5, %v1193
        %v1195 = vmul.f32 %v1190, %v1194
        %vm1196 = vweird.f32 %v1148
        %vm1197 = vweird.f32 %v1190
        %vm1198 = vmor %vm1196, %vm1197
        %v1199 = vsel %vm1198, %v1190, %v1195
        %v1200 = vrsqrt.pop %v1149
        %v1201 = vmul.f32 %v1200, %v1149
        %v1202 = vmul.f32 %v1201, %v1200
        %v1203 = vmul.f32 0.5, %v1202
        %v1204 = vsub.f32 1.5, %v1203
        %v1205 = vmul.f32 %v1200, %v1204
        %vm1206 = vweird.f32 %v1149
        %vm1207 = vweird.f32 %v1200
        %vm1208 = vmor %vm1206, %vm1207
        %v1209 = vsel %vm1208, %v1200, %v1205
        %v1210 = vmul.f32 %v1108, %v1159
        %v1211 = vmul.f32 %v1109, %v1169
        %v1212 = vmul.f32 %v1110, %v1179
        %v1213 = vmul.f32 %v1111, %v1189
        %v1214 = vmul.f32 %v1112, %v1199
        %v1215 = vmul.f32 %v1113, %v1209
        %v1217 = vperm.slane %v1074, 0
        %v1219 = vmul.f32 %v1210, %v1217
        %v1220 = vmul.f32 %v1211, %v1217
        %v1221 = vmul.f32 %v1212, %v1217
        %v1222 = vmul.f32 %v1213, %v1217
        %v1223 = vmul.f32 %v1214, %v1217
        %v1224 = vmul.f32 %v1215, %v1217
        %v1226 = vperm.slane %v1075, 0
        %v1228 = vadd.f32 %v1219, %v1226
        %v1229 = vadd.f32 %v1220, %v1226
        %v1230 = vadd.f32 %v1221, %v1226
        %v1231 = vadd.f32 %v1222, %v1226
        %v1232 = vadd.f32 %v1223, %v1226
        %v1233 = vadd.f32 %v1224, %v1226
        %v1234 = vld [vmem:[%s754] sm:$0xf]
        %v1235 = vld [vmem:[%s754 + $0x4] sm:$0xf]
        %v1236 = vld [vmem:[%s754 + $0x8] sm:$0xf]
        %v1237 = vld [vmem:[%s754 + $0xc] sm:$0xf]
        %v1238 = vpack.c.bf16 %v1229, %v1228
        %v1239 = vpack.c.bf16 %v1231, %v1230
        %v1240 = vpack.c.bf16 %v1233, %v1232
        %v1241 = vld [vmem:[%s757] sm:$0x1]
        %v1243 = vperm.slane %v1241, 0
        %v1249 = vunpack.c.l.b16 %v1234
        %v1250 = vunpack.c.l.b16 %v1235
        %v1251 = vunpack.c.l.b16 %v1236
        %v1252 = vunpack.c.l.b16 %v1237
        %v1253 = vpack.c.b16 %v1250, %v1249
        %v1254 = vpack.c.b16 %v1252, %v1251
        %v1258 = vsel %vm1076, %v1238, 0
        %v1261 = vsel %vm1076, %v1239, 0
        %v1264 = vsel %vm1076, %v1240, 0
        %1266 = vmatpush.bf16.msra.mxu0 0
        %1267 = vmatpush.bf16.msra.mxu0 0
        %1268 = vmatpush.bf16.msra.mxu0 0
        %1269 = vmatpush.bf16.msra.mxu0 0
        %1270 = vmatpush.bf16.msra.mxu0 0
        %1271 = vmatpush.bf16.msra.mxu0 0
        %1272 = vmatpush.bf16.msra.mxu0 %v1254
        %1273 = vmatpush.bf16.msra.mxu0 %v1253
        %1274 = vmatmul.bf16.gmra.mxu0 %v1258
        %v1275 = vpop.f32.mrf.mxu0
        %v1276 = vadd.f32 %v1243, %v1275
        %v1277 = vpop.f32.mrf.mxu0
        %v1278 = vadd.f32 %v1243, %v1277
        %1279 = vmatmul.bf16.gmra.mxu0 %v1261
        %v1280 = vpop.f32.mrf.mxu0
        %v1281 = vadd.f32 %v1243, %v1280
        %v1282 = vpop.f32.mrf.mxu0
        %v1283 = vadd.f32 %v1243, %v1282
        %1284 = vmatmul.bf16.gmra.mxu0 %v1264
        %v1285 = vpop.f32.mrf.mxu0
        %v1286 = vadd.f32 %v1243, %v1285
        %v1287 = vpop.f32.mrf.mxu0
        %v1288 = vadd.f32 %v1243, %v1287
        %1289 = vdwg.mxu0
        %1296 = vrot.lane.b32.xlu0 %v1276, 120
        %v1297 = vpop.permute.xlu0 %1296
        %1298 = vrot.lane.b32.xlu0 %v1278, 120
        %v1299 = vpop.permute.xlu0 %1298
        %1300 = vrot.lane.b32.xlu0 %v1281, 120
        %v1301 = vpop.permute.xlu0 %1300
        %1302 = vrot.lane.b32.xlu0 %v1283, 120
        %v1303 = vpop.permute.xlu0 %1302
        %1304 = vrot.lane.b32.xlu0 %v1286, 120
        %v1305 = vpop.permute.xlu0 %1304
        %1306 = vrot.lane.b32.xlu0 %v1288, 120
        %v1307 = vpop.permute.xlu0 %1306
        %1308 = vrot.lane.b32.xlu0 %v1276, 112
        %v1309 = vpop.permute.xlu0 %1308
        %1310 = vrot.lane.b32.xlu0 %v1278, 112
        %v1311 = vpop.permute.xlu0 %1310
        %1312 = vrot.lane.b32.xlu0 %v1281, 112
        %v1313 = vpop.permute.xlu0 %1312
        %1314 = vrot.lane.b32.xlu0 %v1283, 112
        %v1315 = vpop.permute.xlu0 %1314
        %1316 = vrot.lane.b32.xlu0 %v1286, 112
        %v1317 = vpop.permute.xlu0 %1316
        %1318 = vrot.lane.b32.xlu0 %v1288, 112
        %v1319 = vpop.permute.xlu0 %1318
        %1320 = vrot.lane.b32.xlu0 %v1276, 104
        %v1321 = vpop.permute.xlu0 %1320
        %1322 = vrot.lane.b32.xlu0 %v1278, 104
        %v1323 = vpop.permute.xlu0 %1322
        %1324 = vrot.lane.b32.xlu0 %v1281, 104
        %v1325 = vpop.permute.xlu0 %1324
        %1326 = vrot.lane.b32.xlu0 %v1283, 104
        %v1327 = vpop.permute.xlu0 %1326
        %1328 = vrot.lane.b32.xlu0 %v1286, 104
        %v1329 = vpop.permute.xlu0 %1328
        %1330 = vrot.lane.b32.xlu0 %v1288, 104
        %v1331 = vpop.permute.xlu0 %1330
        %v1332 = vlaneseq
        %v1333 = vand.u32 %v1332, 127
        %vm1334 = vcmp.lt.s32.totalorder %v1333, 17
        %1335 = vrot.lane.b32.xlu0 %v1276, 96
        %v1336 = vpop.permute.xlu0 %1335
        %1337 = vrot.lane.b32.xlu0 %v1278, 96
        %v1338 = vpop.permute.xlu0 %1337
        %1339 = vrot.lane.b32.xlu0 %v1281, 96
        %v1340 = vpop.permute.xlu0 %1339
        %vm1341 = vcmask 64512
        %v1342 = vsel %vm1341, %v1276, 0
        %v1344 = vsel %vm1341, %v1278, 0
        %v1346 = vsel %vm1341, %v1281, 0
        %v1348 = vsel %vm1341, %v1336, 0
        %v1350 = vsel %vm1341, %v1338, 0
        %v1352 = vsel %vm1341, %v1340, 0
        %1354 = vmatpush.xpose.msra.mxu0 0.0
        %1355 = vmatpush.xpose.msra.mxu0 0.0
        %1356 = vmatpush.xpose.msra.mxu0 0.0
        %1357 = vmatpush.xpose.msra.mxu0 0.0
        %1358 = vmatpush.xpose.msra.mxu0 0.0
        %1359 = vmatpush.xpose.msra.mxu0 0.0
        %1360 = vmatpush.xpose.msra.mxu0 0.0
        %1361 = vmatpush.xpose.msra.mxu0 0.0
        %1362 = vmatpush.xpose.msra.mxu0 0.0
        %1363 = vmatpush.xpose.msra.mxu0 0.0
        %1364 = vmatpush.xpose.msra.mxu0 0.0
        %1365 = vmatpush.xpose.msra.mxu0 0.0
        %1366 = vmatpush.xpose.msra.mxu0 0.0
        %1367 = vmatpush.xpose.msra.mxu0 %v1352
        %1368 = vmatpush.xpose.msra.mxu0 %v1350
        %1369 = vmatpush.xpose.msra.mxu0 %v1348
        %1370 = vmatmul.f32.gmra.mxu0 %v1342
        %v1371 = vpop.f32.mrf.mxu0
        %v1372 = vadd.f32 0.0, %v1371
        %1373 = vmatmul.f32.gmra.mxu0 %v1344
        %v1374 = vpop.f32.mrf.mxu0
        %v1375 = vadd.f32 0.0, %v1374
        %1376 = vmatmul.f32.gmra.mxu0 %v1346
        %v1377 = vpop.f32.mrf.mxu0
        %v1378 = vadd.f32 0.0, %v1377
        %1379 = vdwg.mxu0
        %1380 = vrot.lane.b32.xlu0 %v1283, 96
        %v1381 = vpop.permute.xlu0 %1380
        %1382 = vrot.lane.b32.xlu0 %v1286, 96
        %v1383 = vpop.permute.xlu0 %1382
        %1384 = vrot.lane.b32.xlu0 %v1288, 96
        %v1385 = vpop.permute.xlu0 %1384
        %v1386 = vsel %vm1341, %v1283, 0
        %v1388 = vsel %vm1341, %v1286, 0
        %v1390 = vsel %vm1341, %v1288, 0
        %v1392 = vsel %vm1341, %v1381, 0
        %v1394 = vsel %vm1341, %v1383, 0
        %v1396 = vsel %vm1341, %v1385, 0
        %1398 = vmatpush.xpose.msra.mxu0 0.0
        %1399 = vmatpush.xpose.msra.mxu0 0.0
        %1400 = vmatpush.xpose.msra.mxu0 0.0
        %1401 = vmatpush.xpose.msra.mxu0 0.0
        %1402 = vmatpush.xpose.msra.mxu0 0.0
        %1403 = vmatpush.xpose.msra.mxu0 0.0
        %1404 = vmatpush.xpose.msra.mxu0 0.0
        %1405 = vmatpush.xpose.msra.mxu0 0.0
        %1406 = vmatpush.xpose.msra.mxu0 0.0
        %1407 = vmatpush.xpose.msra.mxu0 0.0
        %1408 = vmatpush.xpose.msra.mxu0 0.0
        %1409 = vmatpush.xpose.msra.mxu0 0.0
        %1410 = vmatpush.xpose.msra.mxu0 0.0
        %1411 = vmatpush.xpose.msra.mxu0 %v1396
        %1412 = vmatpush.xpose.msra.mxu0 %v1394
        %1413 = vmatpush.xpose.msra.mxu0 %v1392
        %1414 = vmatmul.f32.gmra.mxu0 %v1386
        %v1415 = vpop.f32.mrf.mxu0
        %v1416 = vadd.f32 0.0, %v1415
        %1417 = vmatmul.f32.gmra.mxu0 %v1388
        %v1418 = vpop.f32.mrf.mxu0
        %v1419 = vadd.f32 0.0, %v1418
        %1420 = vmatmul.f32.gmra.mxu0 %v1390
        %v1421 = vpop.f32.mrf.mxu0
        %v1422 = vadd.f32 0.0, %v1421
        %1423 = vdwg.mxu0
        %1424 = vrot.lane.b32.xlu0 %v1297, 96
        %v1425 = vpop.permute.xlu0 %1424
        %1426 = vrot.lane.b32.xlu0 %v1299, 96
        %v1427 = vpop.permute.xlu0 %1426
        %1428 = vrot.lane.b32.xlu0 %v1301, 96
        %v1429 = vpop.permute.xlu0 %1428
        %v1430 = vsel %vm1341, %v1297, 0
        %v1432 = vsel %vm1341, %v1299, 0
        %v1434 = vsel %vm1341, %v1301, 0
        %v1436 = vsel %vm1341, %v1425, 0
        %v1438 = vsel %vm1341, %v1427, 0
        %v1440 = vsel %vm1341, %v1429, 0
        %1442 = vmatpush.xpose.msra.mxu0 0.0
        %1443 = vmatpush.xpose.msra.mxu0 0.0
        %1444 = vmatpush.xpose.msra.mxu0 0.0
        %1445 = vmatpush.xpose.msra.mxu0 0.0
        %1446 = vmatpush.xpose.msra.mxu0 0.0
        %1447 = vmatpush.xpose.msra.mxu0 0.0
        %1448 = vmatpush.xpose.msra.mxu0 0.0
        %1449 = vmatpush.xpose.msra.mxu0 0.0
        %1450 = vmatpush.xpose.msra.mxu0 0.0
        %1451 = vmatpush.xpose.msra.mxu0 0.0
        %1452 = vmatpush.xpose.msra.mxu0 0.0
        %1453 = vmatpush.xpose.msra.mxu0 0.0
        %1454 = vmatpush.xpose.msra.mxu0 0.0
        %1455 = vmatpush.xpose.msra.mxu0 %v1440
        %1456 = vmatpush.xpose.msra.mxu0 %v1438
        %1457 = vmatpush.xpose.msra.mxu0 %v1436
        %1458 = vmatmul.f32.gmra.mxu0 %v1430
        %v1459 = vpop.f32.mrf.mxu0
        %v1460 = vadd.f32 0.0, %v1459
        %1461 = vmatmul.f32.gmra.mxu0 %v1432
        %v1462 = vpop.f32.mrf.mxu0
        %v1463 = vadd.f32 0.0, %v1462
        %1464 = vmatmul.f32.gmra.mxu0 %v1434
        %v1465 = vpop.f32.mrf.mxu0
        %v1466 = vadd.f32 0.0, %v1465
        %1467 = vdwg.mxu0
        %1468 = vrot.lane.b32.xlu0 %v1303, 96
        %v1469 = vpop.permute.xlu0 %1468
        %1470 = vrot.lane.b32.xlu0 %v1305, 96
        %v1471 = vpop.permute.xlu0 %1470
        %1472 = vrot.lane.b32.xlu0 %v1307, 96
        %v1473 = vpop.permute.xlu0 %1472
        %v1474 = vsel %vm1341, %v1303, 0
        %v1476 = vsel %vm1341, %v1305, 0
        %v1478 = vsel %vm1341, %v1307, 0
        %v1480 = vsel %vm1341, %v1469, 0
        %v1482 = vsel %vm1341, %v1471, 0
        %v1484 = vsel %vm1341, %v1473, 0
        %1486 = vmatpush.xpose.msra.mxu0 0.0
        %1487 = vmatpush.xpose.msra.mxu0 0.0
        %1488 = vmatpush.xpose.msra.mxu0 0.0
        %1489 = vmatpush.xpose.msra.mxu0 0.0
        %1490 = vmatpush.xpose.msra.mxu0 0.0
        %1491 = vmatpush.xpose.msra.mxu0 0.0
        %1492 = vmatpush.xpose.msra.mxu0 0.0
        %1493 = vmatpush.xpose.msra.mxu0 0.0
        %1494 = vmatpush.xpose.msra.mxu0 0.0
        %1495 = vmatpush.xpose.msra.mxu0 0.0
        %1496 = vmatpush.xpose.msra.mxu0 0.0
        %1497 = vmatpush.xpose.msra.mxu0 0.0
        %1498 = vmatpush.xpose.msra.mxu0 0.0
        %1499 = vmatpush.xpose.msra.mxu0 %v1484
        %1500 = vmatpush.xpose.msra.mxu0 %v1482
        %1501 = vmatpush.xpose.msra.mxu0 %v1480
        %1502 = vmatmul.f32.gmra.mxu0 %v1474
        %v1503 = vpop.f32.mrf.mxu0
        %v1504 = vadd.f32 0.0, %v1503
        %1505 = vmatmul.f32.gmra.mxu0 %v1476
        %v1506 = vpop.f32.mrf.mxu0
        %v1507 = vadd.f32 0.0, %v1506
        %1508 = vmatmul.f32.gmra.mxu0 %v1478
        %v1509 = vpop.f32.mrf.mxu0
        %v1510 = vadd.f32 0.0, %v1509
        %1511 = vdwg.mxu0
        %1512 = vrot.lane.b32.xlu0 %v1309, 96
        %v1513 = vpop.permute.xlu0 %1512
        %1514 = vrot.lane.b32.xlu0 %v1311, 96
        %v1515 = vpop.permute.xlu0 %1514
        %1516 = vrot.lane.b32.xlu0 %v1313, 96
        %v1517 = vpop.permute.xlu0 %1516
        %v1518 = vsel %vm1341, %v1309, 0
        %v1520 = vsel %vm1341, %v1311, 0
        %v1522 = vsel %vm1341, %v1313, 0
        %v1524 = vsel %vm1341, %v1513, 0
        %v1526 = vsel %vm1341, %v1515, 0
        %v1528 = vsel %vm1341, %v1517, 0
        %1530 = vmatpush.xpose.msra.mxu0 0.0
        %1531 = vmatpush.xpose.msra.mxu0 0.0
        %1532 = vmatpush.xpose.msra.mxu0 0.0
        %1533 = vmatpush.xpose.msra.mxu0 0.0
        %1534 = vmatpush.xpose.msra.mxu0 0.0
        %1535 = vmatpush.xpose.msra.mxu0 0.0
        %1536 = vmatpush.xpose.msra.mxu0 0.0
        %1537 = vmatpush.xpose.msra.mxu0 0.0
        %1538 = vmatpush.xpose.msra.mxu0 0.0
        %1539 = vmatpush.xpose.msra.mxu0 0.0
        %1540 = vmatpush.xpose.msra.mxu0 0.0
        %1541 = vmatpush.xpose.msra.mxu0 0.0
        %1542 = vmatpush.xpose.msra.mxu0 0.0
        %1543 = vmatpush.xpose.msra.mxu0 %v1528
        %1544 = vmatpush.xpose.msra.mxu0 %v1526
        %1545 = vmatpush.xpose.msra.mxu0 %v1524
        %1546 = vmatmul.f32.gmra.mxu0 %v1518
        %v1547 = vpop.f32.mrf.mxu0
        %v1548 = vadd.f32 0.0, %v1547
        %1549 = vmatmul.f32.gmra.mxu0 %v1520
        %v1550 = vpop.f32.mrf.mxu0
        %v1551 = vadd.f32 0.0, %v1550
        %1552 = vmatmul.f32.gmra.mxu0 %v1522
        %v1553 = vpop.f32.mrf.mxu0
        %v1554 = vadd.f32 0.0, %v1553
        %1555 = vdwg.mxu0
        %1556 = vrot.lane.b32.xlu0 %v1315, 96
        %v1557 = vpop.permute.xlu0 %1556
        %1558 = vrot.lane.b32.xlu0 %v1317, 96
        %v1559 = vpop.permute.xlu0 %1558
        %1560 = vrot.lane.b32.xlu0 %v1319, 96
        %v1561 = vpop.permute.xlu0 %1560
        %v1562 = vsel %vm1341, %v1315, 0
        %v1564 = vsel %vm1341, %v1317, 0
        %v1566 = vsel %vm1341, %v1319, 0
        %v1568 = vsel %vm1341, %v1557, 0
        %v1570 = vsel %vm1341, %v1559, 0
        %v1572 = vsel %vm1341, %v1561, 0
        %1574 = vmatpush.xpose.msra.mxu0 0.0
        %1575 = vmatpush.xpose.msra.mxu0 0.0
        %1576 = vmatpush.xpose.msra.mxu0 0.0
        %1577 = vmatpush.xpose.msra.mxu0 0.0
        %1578 = vmatpush.xpose.msra.mxu0 0.0
        %1579 = vmatpush.xpose.msra.mxu0 0.0
        %1580 = vmatpush.xpose.msra.mxu0 0.0
        %1581 = vmatpush.xpose.msra.mxu0 0.0
        %1582 = vmatpush.xpose.msra.mxu0 0.0
        %1583 = vmatpush.xpose.msra.mxu0 0.0
        %1584 = vmatpush.xpose.msra.mxu0 0.0
        %1585 = vmatpush.xpose.msra.mxu0 0.0
        %1586 = vmatpush.xpose.msra.mxu0 0.0
        %1587 = vmatpush.xpose.msra.mxu0 %v1572
        %1588 = vmatpush.xpose.msra.mxu0 %v1570
        %1589 = vmatpush.xpose.msra.mxu0 %v1568
        %1590 = vmatmul.f32.gmra.mxu0 %v1562
        %v1591 = vpop.f32.mrf.mxu0
        %v1592 = vadd.f32 0.0, %v1591
        %1593 = vmatmul.f32.gmra.mxu0 %v1564
        %v1594 = vpop.f32.mrf.mxu0
        %v1595 = vadd.f32 0.0, %v1594
        %1596 = vmatmul.f32.gmra.mxu0 %v1566
        %v1597 = vpop.f32.mrf.mxu0
        %v1598 = vadd.f32 0.0, %v1597
        %1599 = vdwg.mxu0
        %1600 = vrot.lane.b32.xlu0 %v1321, 96
        %v1601 = vpop.permute.xlu0 %1600
        %1602 = vrot.lane.b32.xlu0 %v1323, 96
        %v1603 = vpop.permute.xlu0 %1602
        %1604 = vrot.lane.b32.xlu0 %v1325, 96
        %v1605 = vpop.permute.xlu0 %1604
        %v1606 = vsel %vm1341, %v1321, 0
        %v1608 = vsel %vm1341, %v1323, 0
        %v1610 = vsel %vm1341, %v1325, 0
        %v1612 = vsel %vm1341, %v1601, 0
        %v1614 = vsel %vm1341, %v1603, 0
        %v1616 = vsel %vm1341, %v1605, 0
        %1618 = vmatpush.xpose.msra.mxu0 0.0
        %1619 = vmatpush.xpose.msra.mxu0 0.0
        %1620 = vmatpush.xpose.msra.mxu0 0.0
        %1621 = vmatpush.xpose.msra.mxu0 0.0
        %1622 = vmatpush.xpose.msra.mxu0 0.0
        %1623 = vmatpush.xpose.msra.mxu0 0.0
        %1624 = vmatpush.xpose.msra.mxu0 0.0
        %1625 = vmatpush.xpose.msra.mxu0 0.0
        %1626 = vmatpush.xpose.msra.mxu0 0.0
        %1627 = vmatpush.xpose.msra.mxu0 0.0
        %1628 = vmatpush.xpose.msra.mxu0 0.0
        %1629 = vmatpush.xpose.msra.mxu0 0.0
        %1630 = vmatpush.xpose.msra.mxu0 0.0
        %1631 = vmatpush.xpose.msra.mxu0 %v1616
        %1632 = vmatpush.xpose.msra.mxu0 %v1614
        %1633 = vmatpush.xpose.msra.mxu0 %v1612
        %1634 = vmatmul.f32.gmra.mxu0 %v1606
        %v1635 = vpop.f32.mrf.mxu0
        %v1636 = vadd.f32 0.0, %v1635
        %1637 = vmatmul.f32.gmra.mxu0 %v1608
        %v1638 = vpop.f32.mrf.mxu0
        %v1639 = vadd.f32 0.0, %v1638
        %1640 = vmatmul.f32.gmra.mxu0 %v1610
        %v1641 = vpop.f32.mrf.mxu0
        %v1642 = vadd.f32 0.0, %v1641
        %1643 = vdwg.mxu0
        %1644 = vrot.lane.b32.xlu0 %v1327, 96
        %v1645 = vpop.permute.xlu0 %1644
        %1646 = vrot.lane.b32.xlu0 %v1329, 96
        %v1647 = vpop.permute.xlu0 %1646
        %1648 = vrot.lane.b32.xlu0 %v1331, 96
        %v1649 = vpop.permute.xlu0 %1648
        %v1650 = vsel %vm1341, %v1327, 0
        %v1652 = vsel %vm1341, %v1329, 0
        %v1654 = vsel %vm1341, %v1331, 0
        %v1656 = vsel %vm1341, %v1645, 0
        %v1658 = vsel %vm1341, %v1647, 0
        %v1660 = vsel %vm1341, %v1649, 0
        %1662 = vmatpush.xpose.msra.mxu0 0.0
        %1663 = vmatpush.xpose.msra.mxu0 0.0
        %1664 = vmatpush.xpose.msra.mxu0 0.0
        %1665 = vmatpush.xpose.msra.mxu0 0.0
        %1666 = vmatpush.xpose.msra.mxu0 0.0
        %1667 = vmatpush.xpose.msra.mxu0 0.0
        %1668 = vmatpush.xpose.msra.mxu0 0.0
        %1669 = vmatpush.xpose.msra.mxu0 0.0
        %1670 = vmatpush.xpose.msra.mxu0 0.0
        %1671 = vmatpush.xpose.msra.mxu0 0.0
        %1672 = vmatpush.xpose.msra.mxu0 0.0
        %1673 = vmatpush.xpose.msra.mxu0 0.0
        %1674 = vmatpush.xpose.msra.mxu0 0.0
        %1675 = vmatpush.xpose.msra.mxu0 %v1660
        %1676 = vmatpush.xpose.msra.mxu0 %v1658
        %1677 = vmatpush.xpose.msra.mxu0 %v1656
        %1678 = vmatmul.f32.gmra.mxu0 %v1650
        %v1679 = vpop.f32.mrf.mxu0
        %v1680 = vadd.f32 0.0, %v1679
        %1681 = vmatmul.f32.gmra.mxu0 %v1652
        %v1682 = vpop.f32.mrf.mxu0
        %v1683 = vadd.f32 0.0, %v1682
        %1684 = vmatmul.f32.gmra.mxu0 %v1654
        %v1685 = vpop.f32.mrf.mxu0
        %v1686 = vadd.f32 0.0, %v1685
        %1687 = vdwg.mxu0
        %v1688 = vsel %vm1334, 1, 0
        %vm1689 = vcmp.eq.s32.totalorder %v1688, 1
        %v1690 = vsel %vm1689, %v1372, -1e+30
        %v1691 = vsel %vm1689, %v1375, -1e+30
        %v1692 = vsel %vm1689, %v1378, -1e+30
        %v1693 = vsel %vm1689, %v1416, -1e+30
        %v1694 = vsel %vm1689, %v1419, -1e+30
        %v1695 = vsel %vm1689, %v1422, -1e+30
        %v1696 = vsel %vm1689, %v1460, -1e+30
        %v1697 = vsel %vm1689, %v1463, -1e+30
        %v1698 = vsel %vm1689, %v1466, -1e+30
        %v1699 = vsel %vm1689, %v1504, -1e+30
        %v1700 = vsel %vm1689, %v1507, -1e+30
        %v1701 = vsel %vm1689, %v1510, -1e+30
        %v1702 = vsel %vm1689, %v1548, -1e+30
        %v1703 = vsel %vm1689, %v1551, -1e+30
        %v1704 = vsel %vm1689, %v1554, -1e+30
        %v1705 = vsel %vm1689, %v1592, -1e+30
        %v1706 = vsel %vm1689, %v1595, -1e+30
        %v1707 = vsel %vm1689, %v1598, -1e+30
        %v1708 = vsel %vm1689, %v1636, -1e+30
        %v1709 = vsel %vm1689, %v1639, -1e+30
        %v1710 = vsel %vm1689, %v1642, -1e+30
        %v1711 = vsel %vm1689, %v1680, -1e+30
        %v1712 = vsel %vm1689, %v1683, -1e+30
        %v1713 = vsel %vm1689, %v1686, -1e+30
        %vm1714 = vcmask 195584
        %v1715 = vsel %vm1714, %v1690, -inf
        %1716 = vmax.xlane.f32.xlu0 %v1715
        %v1717 = vpop.xlane.xlu0 %1716
        %v1718 = vsel %vm1714, %v1691, -inf
        %1719 = vmax.xlane.f32.xlu0 %v1718
        %v1720 = vpop.xlane.xlu0 %1719
        %v1721 = vsel %vm1714, %v1692, -inf
        %1722 = vmax.xlane.f32.xlu0 %v1721
        %v1723 = vpop.xlane.xlu0 %1722
        %v1724 = vsel %vm1714, %v1693, -inf
        %1725 = vmax.xlane.f32.xlu0 %v1724
        %v1726 = vpop.xlane.xlu0 %1725
        %v1727 = vsel %vm1714, %v1694, -inf
        %1728 = vmax.xlane.f32.xlu0 %v1727
        %v1729 = vpop.xlane.xlu0 %1728
        %v1730 = vsel %vm1714, %v1695, -inf
        %1731 = vmax.xlane.f32.xlu0 %v1730
        %v1732 = vpop.xlane.xlu0 %1731
        %v1733 = vsel %vm1714, %v1696, -inf
        %1734 = vmax.xlane.f32.xlu0 %v1733
        %v1735 = vpop.xlane.xlu0 %1734
        %v1736 = vsel %vm1714, %v1697, -inf
        %1737 = vmax.xlane.f32.xlu0 %v1736
        %v1738 = vpop.xlane.xlu0 %1737
        %v1739 = vsel %vm1714, %v1698, -inf
        %1740 = vmax.xlane.f32.xlu0 %v1739
        %v1741 = vpop.xlane.xlu0 %1740
        %v1742 = vsel %vm1714, %v1699, -inf
        %1743 = vmax.xlane.f32.xlu0 %v1742
        %v1744 = vpop.xlane.xlu0 %1743
        %v1745 = vsel %vm1714, %v1700, -inf
        %1746 = vmax.xlane.f32.xlu0 %v1745
        %v1747 = vpop.xlane.xlu0 %1746
        %v1748 = vsel %vm1714, %v1701, -inf
        %1749 = vmax.xlane.f32.xlu0 %v1748
        %v1750 = vpop.xlane.xlu0 %1749
        %v1751 = vsel %vm1714, %v1702, -inf
        %1752 = vmax.xlane.f32.xlu0 %v1751
        %v1753 = vpop.xlane.xlu0 %1752
        %v1754 = vsel %vm1714, %v1703, -inf
        %1755 = vmax.xlane.f32.xlu0 %v1754
        %v1756 = vpop.xlane.xlu0 %1755
        %v1757 = vsel %vm1714, %v1704, -inf
        %1758 = vmax.xlane.f32.xlu0 %v1757
        %v1759 = vpop.xlane.xlu0 %1758
        %v1760 = vsel %vm1714, %v1705, -inf
        %1761 = vmax.xlane.f32.xlu0 %v1760
        %v1762 = vpop.xlane.xlu0 %1761
        %v1763 = vsel %vm1714, %v1706, -inf
        %1764 = vmax.xlane.f32.xlu0 %v1763
        %v1765 = vpop.xlane.xlu0 %1764
        %v1766 = vsel %vm1714, %v1707, -inf
        %1767 = vmax.xlane.f32.xlu0 %v1766
        %v1768 = vpop.xlane.xlu0 %1767
        %v1769 = vsel %vm1714, %v1708, -inf
        %1770 = vmax.xlane.f32.xlu0 %v1769
        %v1771 = vpop.xlane.xlu0 %1770
        %v1772 = vsel %vm1714, %v1709, -inf
        %1773 = vmax.xlane.f32.xlu0 %v1772
        %v1774 = vpop.xlane.xlu0 %1773
        %v1775 = vsel %vm1714, %v1710, -inf
        %1776 = vmax.xlane.f32.xlu0 %v1775
        %v1777 = vpop.xlane.xlu0 %1776
        %v1778 = vsel %vm1714, %v1711, -inf
        %1779 = vmax.xlane.f32.xlu0 %v1778
        %v1780 = vpop.xlane.xlu0 %1779
        %v1781 = vsel %vm1714, %v1712, -inf
        %1782 = vmax.xlane.f32.xlu0 %v1781
        %v1783 = vpop.xlane.xlu0 %1782
        %v1784 = vsel %vm1714, %v1713, -inf
        %1785 = vmax.xlane.f32.xlu0 %v1784
        %v1786 = vpop.xlane.xlu0 %1785
        %v1787 = vsub.f32 %v1690, %v1717
        %v1788 = vsub.f32 %v1691, %v1720
        %v1789 = vsub.f32 %v1692, %v1723
        %v1790 = vsub.f32 %v1693, %v1726
        %v1791 = vsub.f32 %v1694, %v1729
        %v1792 = vsub.f32 %v1695, %v1732
        %v1793 = vsub.f32 %v1696, %v1735
        %v1794 = vsub.f32 %v1697, %v1738
        %v1795 = vsub.f32 %v1698, %v1741
        %v1796 = vsub.f32 %v1699, %v1744
        %v1797 = vsub.f32 %v1700, %v1747
        %v1798 = vsub.f32 %v1701, %v1750
        %v1799 = vsub.f32 %v1702, %v1753
        %v1800 = vsub.f32 %v1703, %v1756
        %v1801 = vsub.f32 %v1704, %v1759
        %v1802 = vsub.f32 %v1705, %v1762
        %v1803 = vsub.f32 %v1706, %v1765
        %v1804 = vsub.f32 %v1707, %v1768
        %v1805 = vsub.f32 %v1708, %v1771
        %v1806 = vsub.f32 %v1709, %v1774
        %v1807 = vsub.f32 %v1710, %v1777
        %v1808 = vsub.f32 %v1711, %v1780
        %v1809 = vsub.f32 %v1712, %v1783
        %v1810 = vsub.f32 %v1713, %v1786
        %v1811 = vmul.f32 %v1787, 1.442695
        %v1812 = vpow.pop %v1811
        %v1813 = vmul.f32 %v1788, 1.442695
        %v1814 = vpow.pop %v1813
        %v1815 = vmul.f32 %v1789, 1.442695
        %v1816 = vpow.pop %v1815
        %v1817 = vmul.f32 %v1790, 1.442695
        %v1818 = vpow.pop %v1817
        %v1819 = vmul.f32 %v1791, 1.442695
        %v1820 = vpow.pop %v1819
        %v1821 = vmul.f32 %v1792, 1.442695
        %v1822 = vpow.pop %v1821
        %v1823 = vmul.f32 %v1793, 1.442695
        %v1824 = vpow.pop %v1823
        %v1825 = vmul.f32 %v1794, 1.442695
        %v1826 = vpow.pop %v1825
        %v1827 = vmul.f32 %v1795, 1.442695
        %v1828 = vpow.pop %v1827
        %v1829 = vmul.f32 %v1796, 1.442695
        %v1830 = vpow.pop %v1829
        %v1831 = vmul.f32 %v1797, 1.442695
        %v1832 = vpow.pop %v1831
        %v1833 = vmul.f32 %v1798, 1.442695
        %v1834 = vpow.pop %v1833
        %v1835 = vmul.f32 %v1799, 1.442695
        %v1836 = vpow.pop %v1835
        %v1837 = vmul.f32 %v1800, 1.442695
        %v1838 = vpow.pop %v1837
        %v1839 = vmul.f32 %v1801, 1.442695
        %v1840 = vpow.pop %v1839
        %v1841 = vmul.f32 %v1802, 1.442695
        %v1842 = vpow.pop %v1841
        %v1843 = vmul.f32 %v1803, 1.442695
        %v1844 = vpow.pop %v1843
        %v1845 = vmul.f32 %v1804, 1.442695
        %v1846 = vpow.pop %v1845
        %v1847 = vmul.f32 %v1805, 1.442695
        %v1848 = vpow.pop %v1847
        %v1849 = vmul.f32 %v1806, 1.442695
        %v1850 = vpow.pop %v1849
        %v1851 = vmul.f32 %v1807, 1.442695
        %v1852 = vpow.pop %v1851
        %v1853 = vmul.f32 %v1808, 1.442695
        %v1854 = vpow.pop %v1853
        %v1855 = vmul.f32 %v1809, 1.442695
        %v1856 = vpow.pop %v1855
        %v1857 = vmul.f32 %v1810, 1.442695
        %v1858 = vpow.pop %v1857
        %v1859 = vsel %vm1714, %v1812, 0.0
        %1860 = vadd.xlane.f32.xlu0 %v1859
        %v1861 = vpop.xlane.xlu0 %1860
        %v1862 = vsel %vm1714, %v1814, 0.0
        %1863 = vadd.xlane.f32.xlu0 %v1862
        %v1864 = vpop.xlane.xlu0 %1863
        %v1865 = vsel %vm1714, %v1816, 0.0
        %1866 = vadd.xlane.f32.xlu0 %v1865
        %v1867 = vpop.xlane.xlu0 %1866
        %v1868 = vsel %vm1714, %v1818, 0.0
        %1869 = vadd.xlane.f32.xlu0 %v1868
        %v1870 = vpop.xlane.xlu0 %1869
        %v1871 = vsel %vm1714, %v1820, 0.0
        %1872 = vadd.xlane.f32.xlu0 %v1871
        %v1873 = vpop.xlane.xlu0 %1872
        %v1874 = vsel %vm1714, %v1822, 0.0
        %1875 = vadd.xlane.f32.xlu0 %v1874
        %v1876 = vpop.xlane.xlu0 %1875
        %v1877 = vsel %vm1714, %v1824, 0.0
        %1878 = vadd.xlane.f32.xlu0 %v1877
        %v1879 = vpop.xlane.xlu0 %1878
        %v1880 = vsel %vm1714, %v1826, 0.0
        %1881 = vadd.xlane.f32.xlu0 %v1880
        %v1882 = vpop.xlane.xlu0 %1881
        %v1883 = vsel %vm1714, %v1828, 0.0
        %1884 = vadd.xlane.f32.xlu0 %v1883
        %v1885 = vpop.xlane.xlu0 %1884
        %v1886 = vsel %vm1714, %v1830, 0.0
        %1887 = vadd.xlane.f32.xlu0 %v1886
        %v1888 = vpop.xlane.xlu0 %1887
        %v1889 = vsel %vm1714, %v1832, 0.0
        %1890 = vadd.xlane.f32.xlu0 %v1889
        %v1891 = vpop.xlane.xlu0 %1890
        %v1892 = vsel %vm1714, %v1834, 0.0
        %1893 = vadd.xlane.f32.xlu0 %v1892
        %v1894 = vpop.xlane.xlu0 %1893
        %v1895 = vsel %vm1714, %v1836, 0.0
        %1896 = vadd.xlane.f32.xlu0 %v1895
        %v1897 = vpop.xlane.xlu0 %1896
        %v1898 = vsel %vm1714, %v1838, 0.0
        %1899 = vadd.xlane.f32.xlu0 %v1898
        %v1900 = vpop.xlane.xlu0 %1899
        %v1901 = vsel %vm1714, %v1840, 0.0
        %1902 = vadd.xlane.f32.xlu0 %v1901
        %v1903 = vpop.xlane.xlu0 %1902
        %v1904 = vsel %vm1714, %v1842, 0.0
        %1905 = vadd.xlane.f32.xlu0 %v1904
        %v1906 = vpop.xlane.xlu0 %1905
        %v1907 = vsel %vm1714, %v1844, 0.0
        %1908 = vadd.xlane.f32.xlu0 %v1907
        %v1909 = vpop.xlane.xlu0 %1908
        %v1910 = vsel %vm1714, %v1846, 0.0
        %1911 = vadd.xlane.f32.xlu0 %v1910
        %v1912 = vpop.xlane.xlu0 %1911
        %v1913 = vsel %vm1714, %v1848, 0.0
        %1914 = vadd.xlane.f32.xlu0 %v1913
        %v1915 = vpop.xlane.xlu0 %1914
        %v1916 = vsel %vm1714, %v1850, 0.0
        %1917 = vadd.xlane.f32.xlu0 %v1916
        %v1918 = vpop.xlane.xlu0 %1917
        %v1919 = vsel %vm1714, %v1852, 0.0
        %1920 = vadd.xlane.f32.xlu0 %v1919
        %v1921 = vpop.xlane.xlu0 %1920
        %v1922 = vsel %vm1714, %v1854, 0.0
        %1923 = vadd.xlane.f32.xlu0 %v1922
        %v1924 = vpop.xlane.xlu0 %1923
        %v1925 = vsel %vm1714, %v1856, 0.0
        %1926 = vadd.xlane.f32.xlu0 %v1925
        %v1927 = vpop.xlane.xlu0 %1926
        %v1928 = vsel %vm1714, %v1858, 0.0
        %1929 = vadd.xlane.f32.xlu0 %v1928
        %v1930 = vpop.xlane.xlu0 %1929
        %1931 = vrot.lane.b32.xlu0 %v1276, 64
        %v1932 = vpop.permute.xlu0 %1931
        %1933 = vrot.lane.b32.xlu0 %v1278, 64
        %v1934 = vpop.permute.xlu0 %1933
        %1935 = vrot.lane.b32.xlu0 %v1281, 64
        %v1936 = vpop.permute.xlu0 %1935
        %v1941 = vsel %vm1714, %v1812, 0
        %v1944 = vsel %vm1714, %v1814, 0
        %v1947 = vsel %vm1714, %v1816, 0
        %1949 = vmatpush.msra.mxu0 0.0
        %1950 = vmatpush.msra.mxu0 0.0
        %1951 = vmatpush.msra.mxu0 0.0
        %1952 = vmatpush.msra.mxu0 0.0
        %1953 = vmatpush.msra.mxu0 0.0
        %1954 = vmatpush.msra.mxu0 0.0
        %1955 = vmatpush.msra.mxu0 0.0
        %1956 = vmatpush.msra.mxu0 0.0
        %1957 = vmatpush.msra.mxu0 0.0
        %1958 = vmatpush.msra.mxu0 0.0
        %1959 = vmatpush.msra.mxu0 0.0
        %1960 = vmatpush.msra.mxu0 0.0
        %1961 = vmatpush.msra.mxu0 0.0
        %1962 = vmatpush.msra.mxu0 %v1936
        %1963 = vmatpush.msra.mxu0 %v1934
        %1964 = vmatpush.msra.mxu0 %v1932
        %1965 = vmatmul.f32.gmra.mxu0 %v1941
        %v1966 = vpop.f32.mrf.mxu0
        %v1967 = vadd.f32 0.0, %v1966
        %1968 = vmatmul.f32.gmra.mxu0 %v1944
        %v1969 = vpop.f32.mrf.mxu0
        %v1970 = vadd.f32 0.0, %v1969
        %1971 = vmatmul.f32.gmra.mxu0 %v1947
        %v1972 = vpop.f32.mrf.mxu0
        %v1973 = vadd.f32 0.0, %v1972
        %1974 = vdwg.mxu0
        %1975 = vrot.lane.b32.xlu0 %v1283, 64
        %v1976 = vpop.permute.xlu0 %1975
        %1977 = vrot.lane.b32.xlu0 %v1286, 64
        %v1978 = vpop.permute.xlu0 %1977
        %1979 = vrot.lane.b32.xlu0 %v1288, 64
        %v1980 = vpop.permute.xlu0 %1979
        %v1985 = vsel %vm1714, %v1818, 0
        %v1988 = vsel %vm1714, %v1820, 0
        %v1991 = vsel %vm1714, %v1822, 0
        %1993 = vmatpush.msra.mxu0 0.0
        %1994 = vmatpush.msra.mxu0 0.0
        %1995 = vmatpush.msra.mxu0 0.0
        %1996 = vmatpush.msra.mxu0 0.0
        %1997 = vmatpush.msra.mxu0 0.0
        %1998 = vmatpush.msra.mxu0 0.0
        %1999 = vmatpush.msra.mxu0 0.0
        %2000 = vmatpush.msra.mxu0 0.0
        %2001 = vmatpush.msra.mxu0 0.0
        %2002 = vmatpush.msra.mxu0 0.0
        %2003 = vmatpush.msra.mxu0 0.0
        %2004 = vmatpush.msra.mxu0 0.0
        %2005 = vmatpush.msra.mxu0 0.0
        %2006 = vmatpush.msra.mxu0 %v1980
        %2007 = vmatpush.msra.mxu0 %v1978
        %2008 = vmatpush.msra.mxu0 %v1976
        %2009 = vmatmul.f32.gmra.mxu0 %v1985
        %v2010 = vpop.f32.mrf.mxu0
        %v2011 = vadd.f32 0.0, %v2010
        %2012 = vmatmul.f32.gmra.mxu0 %v1988
        %v2013 = vpop.f32.mrf.mxu0
        %v2014 = vadd.f32 0.0, %v2013
        %2015 = vmatmul.f32.gmra.mxu0 %v1991
        %v2016 = vpop.f32.mrf.mxu0
        %v2017 = vadd.f32 0.0, %v2016
        %2018 = vdwg.mxu0
        %2019 = vrot.lane.b32.xlu0 %v1297, 64
        %v2020 = vpop.permute.xlu0 %2019
        %2021 = vrot.lane.b32.xlu0 %v1299, 64
        %v2022 = vpop.permute.xlu0 %2021
        %2023 = vrot.lane.b32.xlu0 %v1301, 64
        %v2024 = vpop.permute.xlu0 %2023
        %v2029 = vsel %vm1714, %v1824, 0
        %v2032 = vsel %vm1714, %v1826, 0
        %v2035 = vsel %vm1714, %v1828, 0
        %2037 = vmatpush.msra.mxu0 0.0
        %2038 = vmatpush.msra.mxu0 0.0
        %2039 = vmatpush.msra.mxu0 0.0
        %2040 = vmatpush.msra.mxu0 0.0
        %2041 = vmatpush.msra.mxu0 0.0
        %2042 = vmatpush.msra.mxu0 0.0
        %2043 = vmatpush.msra.mxu0 0.0
        %2044 = vmatpush.msra.mxu0 0.0
        %2045 = vmatpush.msra.mxu0 0.0
        %2046 = vmatpush.msra.mxu0 0.0
        %2047 = vmatpush.msra.mxu0 0.0
        %2048 = vmatpush.msra.mxu0 0.0
        %2049 = vmatpush.msra.mxu0 0.0
        %2050 = vmatpush.msra.mxu0 %v2024
        %2051 = vmatpush.msra.mxu0 %v2022
        %2052 = vmatpush.msra.mxu0 %v2020
        %2053 = vmatmul.f32.gmra.mxu0 %v2029
        %v2054 = vpop.f32.mrf.mxu0
        %v2055 = vadd.f32 0.0, %v2054
        %2056 = vmatmul.f32.gmra.mxu0 %v2032
        %v2057 = vpop.f32.mrf.mxu0
        %v2058 = vadd.f32 0.0, %v2057
        %2059 = vmatmul.f32.gmra.mxu0 %v2035
        %v2060 = vpop.f32.mrf.mxu0
        %v2061 = vadd.f32 0.0, %v2060
        %2062 = vdwg.mxu0
        %2063 = vrot.lane.b32.xlu0 %v1303, 64
        %v2064 = vpop.permute.xlu0 %2063
        %2065 = vrot.lane.b32.xlu0 %v1305, 64
        %v2066 = vpop.permute.xlu0 %2065
        %2067 = vrot.lane.b32.xlu0 %v1307, 64
        %v2068 = vpop.permute.xlu0 %2067
        %v2073 = vsel %vm1714, %v1830, 0
        %v2076 = vsel %vm1714, %v1832, 0
        %v2079 = vsel %vm1714, %v1834, 0
        %2081 = vmatpush.msra.mxu0 0.0
        %2082 = vmatpush.msra.mxu0 0.0
        %2083 = vmatpush.msra.mxu0 0.0
        %2084 = vmatpush.msra.mxu0 0.0
        %2085 = vmatpush.msra.mxu0 0.0
        %2086 = vmatpush.msra.mxu0 0.0
        %2087 = vmatpush.msra.mxu0 0.0
        %2088 = vmatpush.msra.mxu0 0.0
        %2089 = vmatpush.msra.mxu0 0.0
        %2090 = vmatpush.msra.mxu0 0.0
        %2091 = vmatpush.msra.mxu0 0.0
        %2092 = vmatpush.msra.mxu0 0.0
        %2093 = vmatpush.msra.mxu0 0.0
        %2094 = vmatpush.msra.mxu0 %v2068
        %2095 = vmatpush.msra.mxu0 %v2066
        %2096 = vmatpush.msra.mxu0 %v2064
        %2097 = vmatmul.f32.gmra.mxu0 %v2073
        %v2098 = vpop.f32.mrf.mxu0
        %v2099 = vadd.f32 0.0, %v2098
        %2100 = vmatmul.f32.gmra.mxu0 %v2076
        %v2101 = vpop.f32.mrf.mxu0
        %v2102 = vadd.f32 0.0, %v2101
        %2103 = vmatmul.f32.gmra.mxu0 %v2079
        %v2104 = vpop.f32.mrf.mxu0
        %v2105 = vadd.f32 0.0, %v2104
        %2106 = vdwg.mxu0
        %2107 = vrot.lane.b32.xlu0 %v1309, 64
        %v2108 = vpop.permute.xlu0 %2107
        %2109 = vrot.lane.b32.xlu0 %v1311, 64
        %v2110 = vpop.permute.xlu0 %2109
        %2111 = vrot.lane.b32.xlu0 %v1313, 64
        %v2112 = vpop.permute.xlu0 %2111
        %v2117 = vsel %vm1714, %v1836, 0
        %v2120 = vsel %vm1714, %v1838, 0
        %v2123 = vsel %vm1714, %v1840, 0
        %2125 = vmatpush.msra.mxu0 0.0
        %2126 = vmatpush.msra.mxu0 0.0
        %2127 = vmatpush.msra.mxu0 0.0
        %2128 = vmatpush.msra.mxu0 0.0
        %2129 = vmatpush.msra.mxu0 0.0
        %2130 = vmatpush.msra.mxu0 0.0
        %2131 = vmatpush.msra.mxu0 0.0
        %2132 = vmatpush.msra.mxu0 0.0
        %2133 = vmatpush.msra.mxu0 0.0
        %2134 = vmatpush.msra.mxu0 0.0
        %2135 = vmatpush.msra.mxu0 0.0
        %2136 = vmatpush.msra.mxu0 0.0
        %2137 = vmatpush.msra.mxu0 0.0
        %2138 = vmatpush.msra.mxu0 %v2112
        %2139 = vmatpush.msra.mxu0 %v2110
        %2140 = vmatpush.msra.mxu0 %v2108
        %2141 = vmatmul.f32.gmra.mxu0 %v2117
        %v2142 = vpop.f32.mrf.mxu0
        %v2143 = vadd.f32 0.0, %v2142
        %2144 = vmatmul.f32.gmra.mxu0 %v2120
        %v2145 = vpop.f32.mrf.mxu0
        %v2146 = vadd.f32 0.0, %v2145
        %2147 = vmatmul.f32.gmra.mxu0 %v2123
        %v2148 = vpop.f32.mrf.mxu0
        %v2149 = vadd.f32 0.0, %v2148
        %2150 = vdwg.mxu0
        %2151 = vrot.lane.b32.xlu0 %v1315, 64
        %v2152 = vpop.permute.xlu0 %2151
        %2153 = vrot.lane.b32.xlu0 %v1317, 64
        %v2154 = vpop.permute.xlu0 %2153
        %2155 = vrot.lane.b32.xlu0 %v1319, 64
        %v2156 = vpop.permute.xlu0 %2155
        %v2161 = vsel %vm1714, %v1842, 0
        %v2164 = vsel %vm1714, %v1844, 0
        %v2167 = vsel %vm1714, %v1846, 0
        %2169 = vmatpush.msra.mxu0 0.0
        %2170 = vmatpush.msra.mxu0 0.0
        %2171 = vmatpush.msra.mxu0 0.0
        %2172 = vmatpush.msra.mxu0 0.0
        %2173 = vmatpush.msra.mxu0 0.0
        %2174 = vmatpush.msra.mxu0 0.0
        %2175 = vmatpush.msra.mxu0 0.0
        %2176 = vmatpush.msra.mxu0 0.0
        %2177 = vmatpush.msra.mxu0 0.0
        %2178 = vmatpush.msra.mxu0 0.0
        %2179 = vmatpush.msra.mxu0 0.0
        %2180 = vmatpush.msra.mxu0 0.0
        %2181 = vmatpush.msra.mxu0 0.0
        %2182 = vmatpush.msra.mxu0 %v2156
        %2183 = vmatpush.msra.mxu0 %v2154
        %2184 = vmatpush.msra.mxu0 %v2152
        %2185 = vmatmul.f32.gmra.mxu0 %v2161
        %v2186 = vpop.f32.mrf.mxu0
        %v2187 = vadd.f32 0.0, %v2186
        %2188 = vmatmul.f32.gmra.mxu0 %v2164
        %v2189 = vpop.f32.mrf.mxu0
        %v2190 = vadd.f32 0.0, %v2189
        %2191 = vmatmul.f32.gmra.mxu0 %v2167
        %v2192 = vpop.f32.mrf.mxu0
        %v2193 = vadd.f32 0.0, %v2192
        %2194 = vdwg.mxu0
        %2195 = vrot.lane.b32.xlu0 %v1321, 64
        %v2196 = vpop.permute.xlu0 %2195
        %2197 = vrot.lane.b32.xlu0 %v1323, 64
        %v2198 = vpop.permute.xlu0 %2197
        %2199 = vrot.lane.b32.xlu0 %v1325, 64
        %v2200 = vpop.permute.xlu0 %2199
        %v2205 = vsel %vm1714, %v1848, 0
        %v2208 = vsel %vm1714, %v1850, 0
        %v2211 = vsel %vm1714, %v1852, 0
        %2213 = vmatpush.msra.mxu0 0.0
        %2214 = vmatpush.msra.mxu0 0.0
        %2215 = vmatpush.msra.mxu0 0.0
        %2216 = vmatpush.msra.mxu0 0.0
        %2217 = vmatpush.msra.mxu0 0.0
        %2218 = vmatpush.msra.mxu0 0.0
        %2219 = vmatpush.msra.mxu0 0.0
        %2220 = vmatpush.msra.mxu0 0.0
        %2221 = vmatpush.msra.mxu0 0.0
        %2222 = vmatpush.msra.mxu0 0.0
        %2223 = vmatpush.msra.mxu0 0.0
        %2224 = vmatpush.msra.mxu0 0.0
        %2225 = vmatpush.msra.mxu0 0.0
        %2226 = vmatpush.msra.mxu0 %v2200
        %2227 = vmatpush.msra.mxu0 %v2198
        %2228 = vmatpush.msra.mxu0 %v2196
        %2229 = vmatmul.f32.gmra.mxu0 %v2205
        %v2230 = vpop.f32.mrf.mxu0
        %v2231 = vadd.f32 0.0, %v2230
        %2232 = vmatmul.f32.gmra.mxu0 %v2208
        %v2233 = vpop.f32.mrf.mxu0
        %v2234 = vadd.f32 0.0, %v2233
        %2235 = vmatmul.f32.gmra.mxu0 %v2211
        %v2236 = vpop.f32.mrf.mxu0
        %v2237 = vadd.f32 0.0, %v2236
        %2238 = vdwg.mxu0
        %2239 = vrot.lane.b32.xlu0 %v1327, 64
        %v2240 = vpop.permute.xlu0 %2239
        %2241 = vrot.lane.b32.xlu0 %v1329, 64
        %v2242 = vpop.permute.xlu0 %2241
        %2243 = vrot.lane.b32.xlu0 %v1331, 64
        %v2244 = vpop.permute.xlu0 %2243
        %v2249 = vsel %vm1714, %v1854, 0
        %v2252 = vsel %vm1714, %v1856, 0
        %v2255 = vsel %vm1714, %v1858, 0
        %2257 = vmatpush.msra.mxu0 0.0
        %2258 = vmatpush.msra.mxu0 0.0
        %2259 = vmatpush.msra.mxu0 0.0
        %2260 = vmatpush.msra.mxu0 0.0
        %2261 = vmatpush.msra.mxu0 0.0
        %2262 = vmatpush.msra.mxu0 0.0
        %2263 = vmatpush.msra.mxu0 0.0
        %2264 = vmatpush.msra.mxu0 0.0
        %2265 = vmatpush.msra.mxu0 0.0
        %2266 = vmatpush.msra.mxu0 0.0
        %2267 = vmatpush.msra.mxu0 0.0
        %2268 = vmatpush.msra.mxu0 0.0
        %2269 = vmatpush.msra.mxu0 0.0
        %2270 = vmatpush.msra.mxu0 %v2244
        %2271 = vmatpush.msra.mxu0 %v2242
        %2272 = vmatpush.msra.mxu0 %v2240
        %2273 = vmatmul.f32.gmra.mxu0 %v2249
        %v2274 = vpop.f32.mrf.mxu0
        %v2275 = vadd.f32 0.0, %v2274
        %2276 = vmatmul.f32.gmra.mxu0 %v2252
        %v2277 = vpop.f32.mrf.mxu0
        %v2278 = vadd.f32 0.0, %v2277
        %2279 = vmatmul.f32.gmra.mxu0 %v2255
        %v2280 = vpop.f32.mrf.mxu0
        %v2281 = vadd.f32 0.0, %v2280
        %2282 = vdwg.mxu0
        %v2283 = vrcp.pop %v1861
        %v2284 = vmul.f32 %v1861, %v2283
        %v2285 = vsub.f32 1.0, %v2284
        %v2286 = vmul.f32 %v2283, %v2285
        %v2287 = vadd.f32 %v2283, %v2286
        %vm2288 = vweird.f32 %v1861
        %vm2289 = vweird.f32 %v2283
        %vm2290 = vmor %vm2288, %vm2289
        %v2291 = vsel %vm2290, %v2283, %v2287
        %v2292 = vand.u32 2147483647, %v1861
        %vm2293 = vcmp.eq.f32.partialorder %v2292, 8.507059e+37
        %v2294 = vand.u32 %v1861, 2147483648
        %v2295 = vor.u32 1.1754944e-38, %v2294
        %v2296 = vsel %vm2293, %v2295, %v2291
        %v2297 = vmul.f32 1.0, %v2296
        %v2298 = vrcp.pop %v1864
        %v2299 = vmul.f32 %v1864, %v2298
        %v2300 = vsub.f32 1.0, %v2299
        %v2301 = vmul.f32 %v2298, %v2300
        %v2302 = vadd.f32 %v2298, %v2301
        %vm2303 = vweird.f32 %v1864
        %vm2304 = vweird.f32 %v2298
        %vm2305 = vmor %vm2303, %vm2304
        %v2306 = vsel %vm2305, %v2298, %v2302
        %v2307 = vand.u32 2147483647, %v1864
        %vm2308 = vcmp.eq.f32.partialorder %v2307, 8.507059e+37
        %v2309 = vand.u32 %v1864, 2147483648
        %v2310 = vor.u32 1.1754944e-38, %v2309
        %v2311 = vsel %vm2308, %v2310, %v2306
        %v2312 = vmul.f32 1.0, %v2311
        %v2313 = vrcp.pop %v1867
        %v2314 = vmul.f32 %v1867, %v2313
        %v2315 = vsub.f32 1.0, %v2314
        %v2316 = vmul.f32 %v2313, %v2315
        %v2317 = vadd.f32 %v2313, %v2316
        %vm2318 = vweird.f32 %v1867
        %vm2319 = vweird.f32 %v2313
        %vm2320 = vmor %vm2318, %vm2319
        %v2321 = vsel %vm2320, %v2313, %v2317
        %v2322 = vand.u32 2147483647, %v1867
        %vm2323 = vcmp.eq.f32.partialorder %v2322, 8.507059e+37
        %v2324 = vand.u32 %v1867, 2147483648
        %v2325 = vor.u32 1.1754944e-38, %v2324
        %v2326 = vsel %vm2323, %v2325, %v2321
        %v2327 = vmul.f32 1.0, %v2326
        %v2328 = vrcp.pop %v1870
        %v2329 = vmul.f32 %v1870, %v2328
        %v2330 = vsub.f32 1.0, %v2329
        %v2331 = vmul.f32 %v2328, %v2330
        %v2332 = vadd.f32 %v2328, %v2331
        %vm2333 = vweird.f32 %v1870
        %vm2334 = vweird.f32 %v2328
        %vm2335 = vmor %vm2333, %vm2334
        %v2336 = vsel %vm2335, %v2328, %v2332
        %v2337 = vand.u32 2147483647, %v1870
        %vm2338 = vcmp.eq.f32.partialorder %v2337, 8.507059e+37
        %v2339 = vand.u32 %v1870, 2147483648
        %v2340 = vor.u32 1.1754944e-38, %v2339
        %v2341 = vsel %vm2338, %v2340, %v2336
        %v2342 = vmul.f32 1.0, %v2341
        %v2343 = vrcp.pop %v1873
        %v2344 = vmul.f32 %v1873, %v2343
        %v2345 = vsub.f32 1.0, %v2344
        %v2346 = vmul.f32 %v2343, %v2345
        %v2347 = vadd.f32 %v2343, %v2346
        %vm2348 = vweird.f32 %v1873
        %vm2349 = vweird.f32 %v2343
        %vm2350 = vmor %vm2348, %vm2349
        %v2351 = vsel %vm2350, %v2343, %v2347
        %v2352 = vand.u32 2147483647, %v1873
        %vm2353 = vcmp.eq.f32.partialorder %v2352, 8.507059e+37
        %v2354 = vand.u32 %v1873, 2147483648
        %v2355 = vor.u32 1.1754944e-38, %v2354
        %v2356 = vsel %vm2353, %v2355, %v2351
        %v2357 = vmul.f32 1.0, %v2356
        %v2358 = vrcp.pop %v1876
        %v2359 = vmul.f32 %v1876, %v2358
        %v2360 = vsub.f32 1.0, %v2359
        %v2361 = vmul.f32 %v2358, %v2360
        %v2362 = vadd.f32 %v2358, %v2361
        %vm2363 = vweird.f32 %v1876
        %vm2364 = vweird.f32 %v2358
        %vm2365 = vmor %vm2363, %vm2364
        %v2366 = vsel %vm2365, %v2358, %v2362
        %v2367 = vand.u32 2147483647, %v1876
        %vm2368 = vcmp.eq.f32.partialorder %v2367, 8.507059e+37
        %v2369 = vand.u32 %v1876, 2147483648
        %v2370 = vor.u32 1.1754944e-38, %v2369
        %v2371 = vsel %vm2368, %v2370, %v2366
        %v2372 = vmul.f32 1.0, %v2371
        %v2373 = vrcp.pop %v1879
        %v2374 = vmul.f32 %v1879, %v2373
        %v2375 = vsub.f32 1.0, %v2374
        %v2376 = vmul.f32 %v2373, %v2375
        %v2377 = vadd.f32 %v2373, %v2376
        %vm2378 = vweird.f32 %v1879
        %vm2379 = vweird.f32 %v2373
        %vm2380 = vmor %vm2378, %vm2379
        %v2381 = vsel %vm2380, %v2373, %v2377
        %v2382 = vand.u32 2147483647, %v1879
        %vm2383 = vcmp.eq.f32.partialorder %v2382, 8.507059e+37
        %v2384 = vand.u32 %v1879, 2147483648
        %v2385 = vor.u32 1.1754944e-38, %v2384
        %v2386 = vsel %vm2383, %v2385, %v2381
        %v2387 = vmul.f32 1.0, %v2386
        %v2388 = vrcp.pop %v1882
        %v2389 = vmul.f32 %v1882, %v2388
        %v2390 = vsub.f32 1.0, %v2389
        %v2391 = vmul.f32 %v2388, %v2390
        %v2392 = vadd.f32 %v2388, %v2391
        %vm2393 = vweird.f32 %v1882
        %vm2394 = vweird.f32 %v2388
        %vm2395 = vmor %vm2393, %vm2394
        %v2396 = vsel %vm2395, %v2388, %v2392
        %v2397 = vand.u32 2147483647, %v1882
        %vm2398 = vcmp.eq.f32.partialorder %v2397, 8.507059e+37
        %v2399 = vand.u32 %v1882, 2147483648
        %v2400 = vor.u32 1.1754944e-38, %v2399
        %v2401 = vsel %vm2398, %v2400, %v2396
        %v2402 = vmul.f32 1.0, %v2401
        %v2403 = vrcp.pop %v1885
        %v2404 = vmul.f32 %v1885, %v2403
        %v2405 = vsub.f32 1.0, %v2404
        %v2406 = vmul.f32 %v2403, %v2405
        %v2407 = vadd.f32 %v2403, %v2406
        %vm2408 = vweird.f32 %v1885
        %vm2409 = vweird.f32 %v2403
        %vm2410 = vmor %vm2408, %vm2409
        %v2411 = vsel %vm2410, %v2403, %v2407
        %v2412 = vand.u32 2147483647, %v1885
        %vm2413 = vcmp.eq.f32.partialorder %v2412, 8.507059e+37
        %v2414 = vand.u32 %v1885, 2147483648
        %v2415 = vor.u32 1.1754944e-38, %v2414
        %v2416 = vsel %vm2413, %v2415, %v2411
        %v2417 = vmul.f32 1.0, %v2416
        %v2418 = vrcp.pop %v1888
        %v2419 = vmul.f32 %v1888, %v2418
        %v2420 = vsub.f32 1.0, %v2419
        %v2421 = vmul.f32 %v2418, %v2420
        %v2422 = vadd.f32 %v2418, %v2421
        %vm2423 = vweird.f32 %v1888
        %vm2424 = vweird.f32 %v2418
        %vm2425 = vmor %vm2423, %vm2424
        %v2426 = vsel %vm2425, %v2418, %v2422
        %v2427 = vand.u32 2147483647, %v1888
        %vm2428 = vcmp.eq.f32.partialorder %v2427, 8.507059e+37
        %v2429 = vand.u32 %v1888, 2147483648
        %v2430 = vor.u32 1.1754944e-38, %v2429
        %v2431 = vsel %vm2428, %v2430, %v2426
        %v2432 = vmul.f32 1.0, %v2431
        %v2433 = vrcp.pop %v1891
        %v2434 = vmul.f32 %v1891, %v2433
        %v2435 = vsub.f32 1.0, %v2434
        %v2436 = vmul.f32 %v2433, %v2435
        %v2437 = vadd.f32 %v2433, %v2436
        %vm2438 = vweird.f32 %v1891
        %vm2439 = vweird.f32 %v2433
        %vm2440 = vmor %vm2438, %vm2439
        %v2441 = vsel %vm2440, %v2433, %v2437
        %v2442 = vand.u32 2147483647, %v1891
        %vm2443 = vcmp.eq.f32.partialorder %v2442, 8.507059e+37
        %v2444 = vand.u32 %v1891, 2147483648
        %v2445 = vor.u32 1.1754944e-38, %v2444
        %v2446 = vsel %vm2443, %v2445, %v2441
        %v2447 = vmul.f32 1.0, %v2446
        %v2448 = vrcp.pop %v1894
        %v2449 = vmul.f32 %v1894, %v2448
        %v2450 = vsub.f32 1.0, %v2449
        %v2451 = vmul.f32 %v2448, %v2450
        %v2452 = vadd.f32 %v2448, %v2451
        %vm2453 = vweird.f32 %v1894
        %vm2454 = vweird.f32 %v2448
        %vm2455 = vmor %vm2453, %vm2454
        %v2456 = vsel %vm2455, %v2448, %v2452
        %v2457 = vand.u32 2147483647, %v1894
        %vm2458 = vcmp.eq.f32.partialorder %v2457, 8.507059e+37
        %v2459 = vand.u32 %v1894, 2147483648
        %v2460 = vor.u32 1.1754944e-38, %v2459
        %v2461 = vsel %vm2458, %v2460, %v2456
        %v2462 = vmul.f32 1.0, %v2461
        %v2463 = vrcp.pop %v1897
        %v2464 = vmul.f32 %v1897, %v2463
        %v2465 = vsub.f32 1.0, %v2464
        %v2466 = vmul.f32 %v2463, %v2465
        %v2467 = vadd.f32 %v2463, %v2466
        %vm2468 = vweird.f32 %v1897
        %vm2469 = vweird.f32 %v2463
        %vm2470 = vmor %vm2468, %vm2469
        %v2471 = vsel %vm2470, %v2463, %v2467
        %v2472 = vand.u32 2147483647, %v1897
        %vm2473 = vcmp.eq.f32.partialorder %v2472, 8.507059e+37
        %v2474 = vand.u32 %v1897, 2147483648
        %v2475 = vor.u32 1.1754944e-38, %v2474
        %v2476 = vsel %vm2473, %v2475, %v2471
        %v2477 = vmul.f32 1.0, %v2476
        %v2478 = vrcp.pop %v1900
        %v2479 = vmul.f32 %v1900, %v2478
        %v2480 = vsub.f32 1.0, %v2479
        %v2481 = vmul.f32 %v2478, %v2480
        %v2482 = vadd.f32 %v2478, %v2481
        %vm2483 = vweird.f32 %v1900
        %vm2484 = vweird.f32 %v2478
        %vm2485 = vmor %vm2483, %vm2484
        %v2486 = vsel %vm2485, %v2478, %v2482
        %v2487 = vand.u32 2147483647, %v1900
        %vm2488 = vcmp.eq.f32.partialorder %v2487, 8.507059e+37
        %v2489 = vand.u32 %v1900, 2147483648
        %v2490 = vor.u32 1.1754944e-38, %v2489
        %v2491 = vsel %vm2488, %v2490, %v2486
        %v2492 = vmul.f32 1.0, %v2491
        %v2493 = vrcp.pop %v1903
        %v2494 = vmul.f32 %v1903, %v2493
        %v2495 = vsub.f32 1.0, %v2494
        %v2496 = vmul.f32 %v2493, %v2495
        %v2497 = vadd.f32 %v2493, %v2496
        %vm2498 = vweird.f32 %v1903
        %vm2499 = vweird.f32 %v2493
        %vm2500 = vmor %vm2498, %vm2499
        %v2501 = vsel %vm2500, %v2493, %v2497
        %v2502 = vand.u32 2147483647, %v1903
        %vm2503 = vcmp.eq.f32.partialorder %v2502, 8.507059e+37
        %v2504 = vand.u32 %v1903, 2147483648
        %v2505 = vor.u32 1.1754944e-38, %v2504
        %v2506 = vsel %vm2503, %v2505, %v2501
        %v2507 = vmul.f32 1.0, %v2506
        %v2508 = vrcp.pop %v1906
        %v2509 = vmul.f32 %v1906, %v2508
        %v2510 = vsub.f32 1.0, %v2509
        %v2511 = vmul.f32 %v2508, %v2510
        %v2512 = vadd.f32 %v2508, %v2511
        %vm2513 = vweird.f32 %v1906
        %vm2514 = vweird.f32 %v2508
        %vm2515 = vmor %vm2513, %vm2514
        %v2516 = vsel %vm2515, %v2508, %v2512
        %v2517 = vand.u32 2147483647, %v1906
        %vm2518 = vcmp.eq.f32.partialorder %v2517, 8.507059e+37
        %v2519 = vand.u32 %v1906, 2147483648
        %v2520 = vor.u32 1.1754944e-38, %v2519
        %v2521 = vsel %vm2518, %v2520, %v2516
        %v2522 = vmul.f32 1.0, %v2521
        %v2523 = vrcp.pop %v1909
        %v2524 = vmul.f32 %v1909, %v2523
        %v2525 = vsub.f32 1.0, %v2524
        %v2526 = vmul.f32 %v2523, %v2525
        %v2527 = vadd.f32 %v2523, %v2526
        %vm2528 = vweird.f32 %v1909
        %vm2529 = vweird.f32 %v2523
        %vm2530 = vmor %vm2528, %vm2529
        %v2531 = vsel %vm2530, %v2523, %v2527
        %v2532 = vand.u32 2147483647, %v1909
        %vm2533 = vcmp.eq.f32.partialorder %v2532, 8.507059e+37
        %v2534 = vand.u32 %v1909, 2147483648
        %v2535 = vor.u32 1.1754944e-38, %v2534
        %v2536 = vsel %vm2533, %v2535, %v2531
        %v2537 = vmul.f32 1.0, %v2536
        %v2538 = vrcp.pop %v1912
        %v2539 = vmul.f32 %v1912, %v2538
        %v2540 = vsub.f32 1.0, %v2539
        %v2541 = vmul.f32 %v2538, %v2540
        %v2542 = vadd.f32 %v2538, %v2541
        %vm2543 = vweird.f32 %v1912
        %vm2544 = vweird.f32 %v2538
        %vm2545 = vmor %vm2543, %vm2544
        %v2546 = vsel %vm2545, %v2538, %v2542
        %v2547 = vand.u32 2147483647, %v1912
        %vm2548 = vcmp.eq.f32.partialorder %v2547, 8.507059e+37
        %v2549 = vand.u32 %v1912, 2147483648
        %v2550 = vor.u32 1.1754944e-38, %v2549
        %v2551 = vsel %vm2548, %v2550, %v2546
        %v2552 = vmul.f32 1.0, %v2551
        %v2553 = vrcp.pop %v1915
        %v2554 = vmul.f32 %v1915, %v2553
        %v2555 = vsub.f32 1.0, %v2554
        %v2556 = vmul.f32 %v2553, %v2555
        %v2557 = vadd.f32 %v2553, %v2556
        %vm2558 = vweird.f32 %v1915
        %vm2559 = vweird.f32 %v2553
        %vm2560 = vmor %vm2558, %vm2559
        %v2561 = vsel %vm2560, %v2553, %v2557
        %v2562 = vand.u32 2147483647, %v1915
        %vm2563 = vcmp.eq.f32.partialorder %v2562, 8.507059e+37
        %v2564 = vand.u32 %v1915, 2147483648
        %v2565 = vor.u32 1.1754944e-38, %v2564
        %v2566 = vsel %vm2563, %v2565, %v2561
        %v2567 = vmul.f32 1.0, %v2566
        %v2568 = vrcp.pop %v1918
        %v2569 = vmul.f32 %v1918, %v2568
        %v2570 = vsub.f32 1.0, %v2569
        %v2571 = vmul.f32 %v2568, %v2570
        %v2572 = vadd.f32 %v2568, %v2571
        %vm2573 = vweird.f32 %v1918
        %vm2574 = vweird.f32 %v2568
        %vm2575 = vmor %vm2573, %vm2574
        %v2576 = vsel %vm2575, %v2568, %v2572
        %v2577 = vand.u32 2147483647, %v1918
        %vm2578 = vcmp.eq.f32.partialorder %v2577, 8.507059e+37
        %v2579 = vand.u32 %v1918, 2147483648
        %v2580 = vor.u32 1.1754944e-38, %v2579
        %v2581 = vsel %vm2578, %v2580, %v2576
        %v2582 = vmul.f32 1.0, %v2581
        %v2583 = vrcp.pop %v1921
        %v2584 = vmul.f32 %v1921, %v2583
        %v2585 = vsub.f32 1.0, %v2584
        %v2586 = vmul.f32 %v2583, %v2585
        %v2587 = vadd.f32 %v2583, %v2586
        %vm2588 = vweird.f32 %v1921
        %vm2589 = vweird.f32 %v2583
        %vm2590 = vmor %vm2588, %vm2589
        %v2591 = vsel %vm2590, %v2583, %v2587
        %v2592 = vand.u32 2147483647, %v1921
        %vm2593 = vcmp.eq.f32.partialorder %v2592, 8.507059e+37
        %v2594 = vand.u32 %v1921, 2147483648
        %v2595 = vor.u32 1.1754944e-38, %v2594
        %v2596 = vsel %vm2593, %v2595, %v2591
        %v2597 = vmul.f32 1.0, %v2596
        %v2598 = vrcp.pop %v1924
        %v2599 = vmul.f32 %v1924, %v2598
        %v2600 = vsub.f32 1.0, %v2599
        %v2601 = vmul.f32 %v2598, %v2600
        %v2602 = vadd.f32 %v2598, %v2601
        %vm2603 = vweird.f32 %v1924
        %vm2604 = vweird.f32 %v2598
        %vm2605 = vmor %vm2603, %vm2604
        %v2606 = vsel %vm2605, %v2598, %v2602
        %v2607 = vand.u32 2147483647, %v1924
        %vm2608 = vcmp.eq.f32.partialorder %v2607, 8.507059e+37
        %v2609 = vand.u32 %v1924, 2147483648
        %v2610 = vor.u32 1.1754944e-38, %v2609
        %v2611 = vsel %vm2608, %v2610, %v2606
        %v2612 = vmul.f32 1.0, %v2611
        %v2613 = vrcp.pop %v1927
        %v2614 = vmul.f32 %v1927, %v2613
        %v2615 = vsub.f32 1.0, %v2614
        %v2616 = vmul.f32 %v2613, %v2615
        %v2617 = vadd.f32 %v2613, %v2616
        %vm2618 = vweird.f32 %v1927
        %vm2619 = vweird.f32 %v2613
        %vm2620 = vmor %vm2618, %vm2619
        %v2621 = vsel %vm2620, %v2613, %v2617
        %v2622 = vand.u32 2147483647, %v1927
        %vm2623 = vcmp.eq.f32.partialorder %v2622, 8.507059e+37
        %v2624 = vand.u32 %v1927, 2147483648
        %v2625 = vor.u32 1.1754944e-38, %v2624
        %v2626 = vsel %vm2623, %v2625, %v2621
        %v2627 = vmul.f32 1.0, %v2626
        %v2628 = vrcp.pop %v1930
        %v2629 = vmul.f32 %v1930, %v2628
        %v2630 = vsub.f32 1.0, %v2629
        %v2631 = vmul.f32 %v2628, %v2630
        %v2632 = vadd.f32 %v2628, %v2631
        %vm2633 = vweird.f32 %v1930
        %vm2634 = vweird.f32 %v2628
        %vm2635 = vmor %vm2633, %vm2634
        %v2636 = vsel %vm2635, %v2628, %v2632
        %v2637 = vand.u32 2147483647, %v1930
        %vm2638 = vcmp.eq.f32.partialorder %v2637, 8.507059e+37
        %v2639 = vand.u32 %v1930, 2147483648
        %v2640 = vor.u32 1.1754944e-38, %v2639
        %v2641 = vsel %vm2638, %v2640, %v2636
        %v2642 = vmul.f32 1.0, %v2641
        %v2643 = vmul.f32 %v1967, %v2297
        %v2644 = vmul.f32 %v1970, %v2312
        %v2645 = vmul.f32 %v1973, %v2327
        %v2646 = vmul.f32 %v2011, %v2342
        %v2647 = vmul.f32 %v2014, %v2357
        %v2648 = vmul.f32 %v2017, %v2372
        %v2649 = vmul.f32 %v2055, %v2387
        %v2650 = vmul.f32 %v2058, %v2402
        %v2651 = vmul.f32 %v2061, %v2417
        %v2652 = vmul.f32 %v2099, %v2432
        %v2653 = vmul.f32 %v2102, %v2447
        %v2654 = vmul.f32 %v2105, %v2462
        %v2655 = vmul.f32 %v2143, %v2477
        %v2656 = vmul.f32 %v2146, %v2492
        %v2657 = vmul.f32 %v2149, %v2507
        %v2658 = vmul.f32 %v2187, %v2522
        %v2659 = vmul.f32 %v2190, %v2537
        %v2660 = vmul.f32 %v2193, %v2552
        %v2661 = vmul.f32 %v2231, %v2567
        %v2662 = vmul.f32 %v2234, %v2582
        %v2663 = vmul.f32 %v2237, %v2597
        %v2664 = vmul.f32 %v2275, %v2612
        %v2665 = vmul.f32 %v2278, %v2627
        %v2666 = vmul.f32 %v2281, %v2642
        %2673 = vrot.lane.b32.xlu0 %v2649, 8
        %v2674 = vpop.permute.xlu0 %2673
        %2675 = vrot.lane.b32.xlu0 %v2650, 8
        %v2676 = vpop.permute.xlu0 %2675
        %2677 = vrot.lane.b32.xlu0 %v2651, 8
        %v2678 = vpop.permute.xlu0 %2677
        %2679 = vrot.lane.b32.xlu0 %v2652, 8
        %v2680 = vpop.permute.xlu0 %2679
        %2681 = vrot.lane.b32.xlu0 %v2653, 8
        %v2682 = vpop.permute.xlu0 %2681
        %2683 = vrot.lane.b32.xlu0 %v2654, 8
        %v2684 = vpop.permute.xlu0 %2683
        %2697 = vrot.lane.b32.xlu0 %v2655, 16
        %v2698 = vpop.permute.xlu0 %2697
        %2699 = vrot.lane.b32.xlu0 %v2656, 16
        %v2700 = vpop.permute.xlu0 %2699
        %2701 = vrot.lane.b32.xlu0 %v2657, 16
        %v2702 = vpop.permute.xlu0 %2701
        %2703 = vrot.lane.b32.xlu0 %v2658, 16
        %v2704 = vpop.permute.xlu0 %2703
        %2705 = vrot.lane.b32.xlu0 %v2659, 16
        %v2706 = vpop.permute.xlu0 %2705
        %2707 = vrot.lane.b32.xlu0 %v2660, 16
        %v2708 = vpop.permute.xlu0 %2707
        %2721 = vrot.lane.b32.xlu0 %v2661, 24
        %v2722 = vpop.permute.xlu0 %2721
        %2723 = vrot.lane.b32.xlu0 %v2662, 24
        %v2724 = vpop.permute.xlu0 %2723
        %2725 = vrot.lane.b32.xlu0 %v2663, 24
        %v2726 = vpop.permute.xlu0 %2725
        %2727 = vrot.lane.b32.xlu0 %v2664, 24
        %v2728 = vpop.permute.xlu0 %2727
        %2729 = vrot.lane.b32.xlu0 %v2665, 24
        %v2730 = vpop.permute.xlu0 %2729
        %2731 = vrot.lane.b32.xlu0 %v2666, 24
        %v2732 = vpop.permute.xlu0 %2731
        %v2739 = vsel %vm1341, %v2643, %v2674
        %v2740 = vsel %vm1341, %v2644, %v2676
        %v2741 = vsel %vm1341, %v2645, %v2678
        %v2742 = vsel %vm1341, %v2646, %v2680
        %v2743 = vsel %vm1341, %v2647, %v2682
        %v2744 = vsel %vm1341, %v2648, %v2684
        %vm2745 = vcmask 130048
        %v2746 = vsel %vm2745, %v2739, %v2698
        %v2747 = vsel %vm2745, %v2740, %v2700
        %v2748 = vsel %vm2745, %v2741, %v2702
        %v2749 = vsel %vm2745, %v2742, %v2704
        %v2750 = vsel %vm2745, %v2743, %v2706
        %v2751 = vsel %vm2745, %v2744, %v2708
        %v2752 = vsel %vm1714, %v2746, %v2722
        %v2753 = vsel %vm1714, %v2747, %v2724
        %v2754 = vsel %vm1714, %v2748, %v2726
        %v2755 = vsel %vm1714, %v2749, %v2728
        %v2756 = vsel %vm1714, %v2750, %v2730
        %v2757 = vsel %vm1714, %v2751, %v2732
        %v2758 = vld [vmem:[%s762] sm:$0xf]
        %v2759 = vld [vmem:[%s762 + $0x4] sm:$0xf]
        %v2760 = vld [vmem:[%s762 + $0x8] sm:$0xf]
        %v2761 = vld [vmem:[%s762 + $0xc] sm:$0xf]
        %v2762 = vpack.c.bf16 %v2753, %v2752
        %v2763 = vpack.c.bf16 %v2755, %v2754
        %v2764 = vpack.c.bf16 %v2757, %v2756
        %v2765 = vld [vmem:[%s765] sm:$0x1]
        %v2767 = vperm.slane %v2765, 0
        %v2773 = vunpack.c.l.b16 %v2758
        %v2774 = vunpack.c.l.b16 %v2759
        %v2775 = vunpack.c.l.b16 %v2760
        %v2776 = vunpack.c.l.b16 %v2761
        %v2777 = vpack.c.b16 %v2774, %v2773
        %v2778 = vpack.c.b16 %v2776, %v2775
        %v2782 = vsel %vm1076, %v2762, 0
        %v2785 = vsel %vm1076, %v2763, 0
        %v2788 = vsel %vm1076, %v2764, 0
        %2790 = vmatpush.bf16.msra.mxu0 0
        %2791 = vmatpush.bf16.msra.mxu0 0
        %2792 = vmatpush.bf16.msra.mxu0 0
        %2793 = vmatpush.bf16.msra.mxu0 0
        %2794 = vmatpush.bf16.msra.mxu0 0
        %2795 = vmatpush.bf16.msra.mxu0 0
        %2796 = vmatpush.bf16.msra.mxu0 %v2778
        %2797 = vmatpush.bf16.msra.mxu0 %v2777
        %2798 = vmatmul.bf16.gmra.mxu0 %v2782
        %v2799 = vpop.f32.mrf.mxu0
        %v2800 = vadd.f32 %v2767, %v2799
        %v2801 = vpop.f32.mrf.mxu0
        %v2802 = vadd.f32 %v2767, %v2801
        %2803 = vmatmul.bf16.gmra.mxu0 %v2785
        %v2804 = vpop.f32.mrf.mxu0
        %v2805 = vadd.f32 %v2767, %v2804
        %v2806 = vpop.f32.mrf.mxu0
        %v2807 = vadd.f32 %v2767, %v2806
        %2808 = vmatmul.bf16.gmra.mxu0 %v2788
        %v2809 = vpop.f32.mrf.mxu0
        %v2810 = vadd.f32 %v2767, %v2809
        %v2811 = vpop.f32.mrf.mxu0
        %v2812 = vadd.f32 %v2767, %v2811
        %2813 = vdwg.mxu0
        %v2814 = vadd.f32 %v1068, %v2800
        %v2815 = vadd.f32 %v1069, %v2802
        %v2816 = vadd.f32 %v1070, %v2805
        %v2817 = vadd.f32 %v1071, %v2807
        %v2818 = vadd.f32 %v1072, %v2810
        %v2819 = vadd.f32 %v1073, %v2812
        %v2820 = vld [vmem:[%s768] sm:$0x1]
        %v2821 = vld [vmem:[%s771] sm:$0x1]
        %v2822 = vsel %vm1076, %v2814, 0.0
        %2823 = vadd.xlane.f32.xlu0 %v2822
        %v2824 = vpop.xlane.xlu0 %2823
        %v2825 = vsel %vm1076, %v2815, 0.0
        %2826 = vadd.xlane.f32.xlu0 %v2825
        %v2827 = vpop.xlane.xlu0 %2826
        %v2828 = vsel %vm1076, %v2816, 0.0
        %2829 = vadd.xlane.f32.xlu0 %v2828
        %v2830 = vpop.xlane.xlu0 %2829
        %v2831 = vsel %vm1076, %v2817, 0.0
        %2832 = vadd.xlane.f32.xlu0 %v2831
        %v2833 = vpop.xlane.xlu0 %2832
        %v2834 = vsel %vm1076, %v2818, 0.0
        %2835 = vadd.xlane.f32.xlu0 %v2834
        %v2836 = vpop.xlane.xlu0 %2835
        %v2837 = vsel %vm1076, %v2819, 0.0
        %2838 = vadd.xlane.f32.xlu0 %v2837
        %v2839 = vpop.xlane.xlu0 %2838
        %v2840 = vmul.f32 %v2824, %v1101
        %v2841 = vmul.f32 %v2827, %v1101
        %v2842 = vmul.f32 %v2830, %v1101
        %v2843 = vmul.f32 %v2833, %v1101
        %v2844 = vmul.f32 %v2836, %v1101
        %v2845 = vmul.f32 %v2839, %v1101
        %v2846 = vsub.f32 %v2814, %v2840
        %v2847 = vsub.f32 %v2815, %v2841
        %v2848 = vsub.f32 %v2816, %v2842
        %v2849 = vsub.f32 %v2817, %v2843
        %v2850 = vsub.f32 %v2818, %v2844
        %v2851 = vsub.f32 %v2819, %v2845
        %v2852 = vmul.f32 %v2846, %v2846
        %v2853 = vmul.f32 %v2847, %v2847
        %v2854 = vmul.f32 %v2848, %v2848
        %v2855 = vmul.f32 %v2849, %v2849
        %v2856 = vmul.f32 %v2850, %v2850
        %v2857 = vmul.f32 %v2851, %v2851
        %v2858 = vsel %vm1076, %v2852, 0.0
        %2859 = vadd.xlane.f32.xlu0 %v2858
        %v2860 = vpop.xlane.xlu0 %2859
        %v2861 = vsel %vm1076, %v2853, 0.0
        %2862 = vadd.xlane.f32.xlu0 %v2861
        %v2863 = vpop.xlane.xlu0 %2862
        %v2864 = vsel %vm1076, %v2854, 0.0
        %2865 = vadd.xlane.f32.xlu0 %v2864
        %v2866 = vpop.xlane.xlu0 %2865
        %v2867 = vsel %vm1076, %v2855, 0.0
        %2868 = vadd.xlane.f32.xlu0 %v2867
        %v2869 = vpop.xlane.xlu0 %2868
        %v2870 = vsel %vm1076, %v2856, 0.0
        %2871 = vadd.xlane.f32.xlu0 %v2870
        %v2872 = vpop.xlane.xlu0 %2871
        %v2873 = vsel %vm1076, %v2857, 0.0
        %2874 = vadd.xlane.f32.xlu0 %v2873
        %v2875 = vpop.xlane.xlu0 %2874
        %v2876 = vmul.f32 %v2860, %v1101
        %v2877 = vmul.f32 %v2863, %v1101
        %v2878 = vmul.f32 %v2866, %v1101
        %v2879 = vmul.f32 %v2869, %v1101
        %v2880 = vmul.f32 %v2872, %v1101
        %v2881 = vmul.f32 %v2875, %v1101
        %v2882 = vadd.f32 %v2876, 1e-06
        %v2883 = vadd.f32 %v2877, 1e-06
        %v2884 = vadd.f32 %v2878, 1e-06
        %v2885 = vadd.f32 %v2879, 1e-06
        %v2886 = vadd.f32 %v2880, 1e-06
        %v2887 = vadd.f32 %v2881, 1e-06
        %v2888 = vrsqrt.pop %v2882
        %v2889 = vmul.f32 %v2888, %v2882
        %v2890 = vmul.f32 %v2889, %v2888
        %v2891 = vmul.f32 0.5, %v2890
        %v2892 = vsub.f32 1.5, %v2891
        %v2893 = vmul.f32 %v2888, %v2892
        %vm2894 = vweird.f32 %v2882
        %vm2895 = vweird.f32 %v2888
        %vm2896 = vmor %vm2894, %vm2895
        %v2897 = vsel %vm2896, %v2888, %v2893
        %v2898 = vrsqrt.pop %v2883
        %v2899 = vmul.f32 %v2898, %v2883
        %v2900 = vmul.f32 %v2899, %v2898
        %v2901 = vmul.f32 0.5, %v2900
        %v2902 = vsub.f32 1.5, %v2901
        %v2903 = vmul.f32 %v2898, %v2902
        %vm2904 = vweird.f32 %v2883
        %vm2905 = vweird.f32 %v2898
        %vm2906 = vmor %vm2904, %vm2905
        %v2907 = vsel %vm2906, %v2898, %v2903
        %v2908 = vrsqrt.pop %v2884
        %v2909 = vmul.f32 %v2908, %v2884
        %v2910 = vmul.f32 %v2909, %v2908
        %v2911 = vmul.f32 0.5, %v2910
        %v2912 = vsub.f32 1.5, %v2911
        %v2913 = vmul.f32 %v2908, %v2912
        %vm2914 = vweird.f32 %v2884
        %vm2915 = vweird.f32 %v2908
        %vm2916 = vmor %vm2914, %vm2915
        %v2917 = vsel %vm2916, %v2908, %v2913
        %v2918 = vrsqrt.pop %v2885
        %v2919 = vmul.f32 %v2918, %v2885
        %v2920 = vmul.f32 %v2919, %v2918
        %v2921 = vmul.f32 0.5, %v2920
        %v2922 = vsub.f32 1.5, %v2921
        %v2923 = vmul.f32 %v2918, %v2922
        %vm2924 = vweird.f32 %v2885
        %vm2925 = vweird.f32 %v2918
        %vm2926 = vmor %vm2924, %vm2925
        %v2927 = vsel %vm2926, %v2918, %v2923
        %v2928 = vrsqrt.pop %v2886
        %v2929 = vmul.f32 %v2928, %v2886
        %v2930 = vmul.f32 %v2929, %v2928
        %v2931 = vmul.f32 0.5, %v2930
        %v2932 = vsub.f32 1.5, %v2931
        %v2933 = vmul.f32 %v2928, %v2932
        %vm2934 = vweird.f32 %v2886
        %vm2935 = vweird.f32 %v2928
        %vm2936 = vmor %vm2934, %vm2935
        %v2937 = vsel %vm2936, %v2928, %v2933
        %v2938 = vrsqrt.pop %v2887
        %v2939 = vmul.f32 %v2938, %v2887
        %v2940 = vmul.f32 %v2939, %v2938
        %v2941 = vmul.f32 0.5, %v2940
        %v2942 = vsub.f32 1.5, %v2941
        %v2943 = vmul.f32 %v2938, %v2942
        %vm2944 = vweird.f32 %v2887
        %vm2945 = vweird.f32 %v2938
        %vm2946 = vmor %vm2944, %vm2945
        %v2947 = vsel %vm2946, %v2938, %v2943
        %v2948 = vmul.f32 %v2846, %v2897
        %v2949 = vmul.f32 %v2847, %v2907
        %v2950 = vmul.f32 %v2848, %v2917
        %v2951 = vmul.f32 %v2849, %v2927
        %v2952 = vmul.f32 %v2850, %v2937
        %v2953 = vmul.f32 %v2851, %v2947
        %v2955 = vperm.slane %v2820, 0
        %v2957 = vmul.f32 %v2948, %v2955
        %v2958 = vmul.f32 %v2949, %v2955
        %v2959 = vmul.f32 %v2950, %v2955
        %v2960 = vmul.f32 %v2951, %v2955
        %v2961 = vmul.f32 %v2952, %v2955
        %v2962 = vmul.f32 %v2953, %v2955
        %v2964 = vperm.slane %v2821, 0
        %v2966 = vadd.f32 %v2957, %v2964
        %v2967 = vadd.f32 %v2958, %v2964
        %v2968 = vadd.f32 %v2959, %v2964
        %v2969 = vadd.f32 %v2960, %v2964
        %v2970 = vadd.f32 %v2961, %v2964
        %v2971 = vadd.f32 %v2962, %v2964
        %v2972 = vld [vmem:[%s776] sm:$0xf]
        %v2973 = vld [vmem:[%s776 + $0x4] sm:$0xf]
        %v2974 = vld [vmem:[%s776 + $0x8] sm:$0xf]
        %v2975 = vld [vmem:[%s776 + $0xc] sm:$0xf]
        %v2976 = vpack.c.bf16 %v2967, %v2966
        %v2977 = vpack.c.bf16 %v2969, %v2968
        %v2978 = vpack.c.bf16 %v2971, %v2970
        %v2979 = vld [vmem:[%s779] sm:$0x1]
        %v2981 = vperm.slane %v2979, 0
        %v2987 = vunpack.c.l.b16 %v2972
        %v2988 = vunpack.c.l.b16 %v2973
        %v2989 = vunpack.c.l.b16 %v2974
        %v2990 = vunpack.c.l.b16 %v2975
        %v2991 = vpack.c.b16 %v2988, %v2987
        %v2992 = vpack.c.b16 %v2990, %v2989
        %v2996 = vsel %vm1076, %v2976, 0
        %v2999 = vsel %vm1076, %v2977, 0
        %v3002 = vsel %vm1076, %v2978, 0
        %3004 = vmatpush.bf16.msra.mxu0 0
        %3005 = vmatpush.bf16.msra.mxu0 0
        %3006 = vmatpush.bf16.msra.mxu0 0
        %3007 = vmatpush.bf16.msra.mxu0 0
        %3008 = vmatpush.bf16.msra.mxu0 0
        %3009 = vmatpush.bf16.msra.mxu0 0
        %3010 = vmatpush.bf16.msra.mxu0 %v2992
        %3011 = vmatpush.bf16.msra.mxu0 %v2991
        %3012 = vmatmul.bf16.gmra.mxu0 %v2996
        %v3013 = vpop.f32.mrf.mxu0
        %v3014 = vadd.f32 %v2981, %v3013
        %v3015 = vpop.f32.mrf.mxu0
        %v3016 = vadd.f32 %v2981, %v3015
        %3017 = vmatmul.bf16.gmra.mxu0 %v2999
        %v3018 = vpop.f32.mrf.mxu0
        %v3019 = vadd.f32 %v2981, %v3018
        %v3020 = vpop.f32.mrf.mxu0
        %v3021 = vadd.f32 %v2981, %v3020
        %3022 = vmatmul.bf16.gmra.mxu0 %v3002
        %v3023 = vpop.f32.mrf.mxu0
        %v3024 = vadd.f32 %v2981, %v3023
        %v3025 = vpop.f32.mrf.mxu0
        %v3026 = vadd.f32 %v2981, %v3025
        %3027 = vdwg.mxu0
        %v3028 = vmul.f32 %v3014, 0.5
        %v3029 = vmul.f32 %v3016, 0.5
        %v3030 = vmul.f32 %v3019, 0.5
        %v3031 = vmul.f32 %v3021, 0.5
        %v3032 = vmul.f32 %v3024, 0.5
        %v3033 = vmul.f32 %v3026, 0.5
        %v3034 = vmul.f32 %v3014, 0.70710677
        %v3035 = vmul.f32 %v3016, 0.70710677
        %v3036 = vmul.f32 %v3019, 0.70710677
        %v3037 = vmul.f32 %v3021, 0.70710677
        %v3038 = vmul.f32 %v3024, 0.70710677
        %v3039 = vmul.f32 %v3026, 0.70710677
        %v3040 = vmul.f32 %v3034, %v3034
        %v3041 = vmin.f32 16.0, %v3040
        %v3042 = vmul.f32 %v3041, 2.1237322e-06
        %v3043 = vadd.f32 %v3042, 0.00028619796
        %v3044 = vmul.f32 %v3041, %v3043
        %v3045 = vadd.f32 %v3044, 0.0036580483
        %v3046 = vmul.f32 %v3041, %v3045
        %v3047 = vadd.f32 %v3046, 0.05243302
        %v3048 = vmul.f32 %v3041, %v3047
        %v3049 = vadd.f32 %v3048, 0.18741608
        %v3050 = vmul.f32 %v3041, %v3049
        %v3051 = vadd.f32 %v3050, 1.1283791
        %v3052 = vmul.f32 %v3034, %v3051
        %v3053 = vmul.f32 %v3041, 3.8918573e-05
        %v3054 = vadd.f32 %v3053, 0.001143296
        %v3055 = vmul.f32 %v3041, %v3054
        %v3056 = vadd.f32 %v3055, 0.014752088
        %v3057 = vmul.f32 %v3041, %v3056
        %v3058 = vadd.f32 %v3057, 0.112945676
        %v3059 = vmul.f32 %v3041, %v3058
        %v3060 = vadd.f32 %v3059, 0.4994258
        %v3061 = vmul.f32 %v3041, %v3060
        %v3062 = vadd.f32 %v3061, 1.0
        %v3063 = vrcp.pop %v3062
        %v3064 = vmul.f32 %v3062, %v3063
        %v3065 = vsub.f32 1.0, %v3064
        %v3066 = vmul.f32 %v3063, %v3065
        %v3067 = vadd.f32 %v3063, %v3066
        %vm3068 = vweird.f32 %v3062
        %vm3069 = vweird.f32 %v3063
        %vm3070 = vmor %vm3068, %vm3069
        %v3071 = vsel %vm3070, %v3063, %v3067
        %v3072 = vand.u32 2147483647, %v3062
        %vm3073 = vcmp.eq.f32.partialorder %v3072, 8.507059e+37
        %v3074 = vand.u32 %v3062, 2147483648
        %v3075 = vor.u32 1.1754944e-38, %v3074
        %v3076 = vsel %vm3073, %v3075, %v3071
        %v3077 = vmul.f32 %v3052, %v3076
        %v3078 = vmin.f32 %v3077, 1.0
        %v3079 = vmax.f32 %v3078, -1.0
        %v3080 = vmul.f32 %v3035, %v3035
        %v3081 = vmin.f32 16.0, %v3080
        %v3082 = vmul.f32 %v3081, 2.1237322e-06
        %v3083 = vadd.f32 %v3082, 0.00028619796
        %v3084 = vmul.f32 %v3081, %v3083
        %v3085 = vadd.f32 %v3084, 0.0036580483
        %v3086 = vmul.f32 %v3081, %v3085
        %v3087 = vadd.f32 %v3086, 0.05243302
        %v3088 = vmul.f32 %v3081, %v3087
        %v3089 = vadd.f32 %v3088, 0.18741608
        %v3090 = vmul.f32 %v3081, %v3089
        %v3091 = vadd.f32 %v3090, 1.1283791
        %v3092 = vmul.f32 %v3035, %v3091
        %v3093 = vmul.f32 %v3081, 3.8918573e-05
        %v3094 = vadd.f32 %v3093, 0.001143296
        %v3095 = vmul.f32 %v3081, %v3094
        %v3096 = vadd.f32 %v3095, 0.014752088
        %v3097 = vmul.f32 %v3081, %v3096
        %v3098 = vadd.f32 %v3097, 0.112945676
        %v3099 = vmul.f32 %v3081, %v3098
        %v3100 = vadd.f32 %v3099, 0.4994258
        %v3101 = vmul.f32 %v3081, %v3100
        %v3102 = vadd.f32 %v3101, 1.0
        %v3103 = vrcp.pop %v3102
        %v3104 = vmul.f32 %v3102, %v3103
        %v3105 = vsub.f32 1.0, %v3104
        %v3106 = vmul.f32 %v3103, %v3105
        %v3107 = vadd.f32 %v3103, %v3106
        %vm3108 = vweird.f32 %v3102
        %vm3109 = vweird.f32 %v3103
        %vm3110 = vmor %vm3108, %vm3109
        %v3111 = vsel %vm3110, %v3103, %v3107
        %v3112 = vand.u32 2147483647, %v3102
        %vm3113 = vcmp.eq.f32.partialorder %v3112, 8.507059e+37
        %v3114 = vand.u32 %v3102, 2147483648
        %v3115 = vor.u32 1.1754944e-38, %v3114
        %v3116 = vsel %vm3113, %v3115, %v3111
        %v3117 = vmul.f32 %v3092, %v3116
        %v3118 = vmin.f32 %v3117, 1.0
        %v3119 = vmax.f32 %v3118, -1.0
        %v3120 = vmul.f32 %v3036, %v3036
        %v3121 = vmin.f32 16.0, %v3120
        %v3122 = vmul.f32 %v3121, 2.1237322e-06
        %v3123 = vadd.f32 %v3122, 0.00028619796
        %v3124 = vmul.f32 %v3121, %v3123
        %v3125 = vadd.f32 %v3124, 0.0036580483
        %v3126 = vmul.f32 %v3121, %v3125
        %v3127 = vadd.f32 %v3126, 0.05243302
        %v3128 = vmul.f32 %v3121, %v3127
        %v3129 = vadd.f32 %v3128, 0.18741608
        %v3130 = vmul.f32 %v3121, %v3129
        %v3131 = vadd.f32 %v3130, 1.1283791
        %v3132 = vmul.f32 %v3036, %v3131
        %v3133 = vmul.f32 %v3121, 3.8918573e-05
        %v3134 = vadd.f32 %v3133, 0.001143296
        %v3135 = vmul.f32 %v3121, %v3134
        %v3136 = vadd.f32 %v3135, 0.014752088
        %v3137 = vmul.f32 %v3121, %v3136
        %v3138 = vadd.f32 %v3137, 0.112945676
        %v3139 = vmul.f32 %v3121, %v3138
        %v3140 = vadd.f32 %v3139, 0.4994258
        %v3141 = vmul.f32 %v3121, %v3140
        %v3142 = vadd.f32 %v3141, 1.0
        %v3143 = vrcp.pop %v3142
        %v3144 = vmul.f32 %v3142, %v3143
        %v3145 = vsub.f32 1.0, %v3144
        %v3146 = vmul.f32 %v3143, %v3145
        %v3147 = vadd.f32 %v3143, %v3146
        %vm3148 = vweird.f32 %v3142
        %vm3149 = vweird.f32 %v3143
        %vm3150 = vmor %vm3148, %vm3149
        %v3151 = vsel %vm3150, %v3143, %v3147
        %v3152 = vand.u32 2147483647, %v3142
        %vm3153 = vcmp.eq.f32.partialorder %v3152, 8.507059e+37
        %v3154 = vand.u32 %v3142, 2147483648
        %v3155 = vor.u32 1.1754944e-38, %v3154
        %v3156 = vsel %vm3153, %v3155, %v3151
        %v3157 = vmul.f32 %v3132, %v3156
        %v3158 = vmin.f32 %v3157, 1.0
        %v3159 = vmax.f32 %v3158, -1.0
        %v3160 = vmul.f32 %v3037, %v3037
        %v3161 = vmin.f32 16.0, %v3160
        %v3162 = vmul.f32 %v3161, 2.1237322e-06
        %v3163 = vadd.f32 %v3162, 0.00028619796
        %v3164 = vmul.f32 %v3161, %v3163
        %v3165 = vadd.f32 %v3164, 0.0036580483
        %v3166 = vmul.f32 %v3161, %v3165
        %v3167 = vadd.f32 %v3166, 0.05243302
        %v3168 = vmul.f32 %v3161, %v3167
        %v3169 = vadd.f32 %v3168, 0.18741608
        %v3170 = vmul.f32 %v3161, %v3169
        %v3171 = vadd.f32 %v3170, 1.1283791
        %v3172 = vmul.f32 %v3037, %v3171
        %v3173 = vmul.f32 %v3161, 3.8918573e-05
        %v3174 = vadd.f32 %v3173, 0.001143296
        %v3175 = vmul.f32 %v3161, %v3174
        %v3176 = vadd.f32 %v3175, 0.014752088
        %v3177 = vmul.f32 %v3161, %v3176
        %v3178 = vadd.f32 %v3177, 0.112945676
        %v3179 = vmul.f32 %v3161, %v3178
        %v3180 = vadd.f32 %v3179, 0.4994258
        %v3181 = vmul.f32 %v3161, %v3180
        %v3182 = vadd.f32 %v3181, 1.0
        %v3183 = vrcp.pop %v3182
        %v3184 = vmul.f32 %v3182, %v3183
        %v3185 = vsub.f32 1.0, %v3184
        %v3186 = vmul.f32 %v3183, %v3185
        %v3187 = vadd.f32 %v3183, %v3186
        %vm3188 = vweird.f32 %v3182
        %vm3189 = vweird.f32 %v3183
        %vm3190 = vmor %vm3188, %vm3189
        %v3191 = vsel %vm3190, %v3183, %v3187
        %v3192 = vand.u32 2147483647, %v3182
        %vm3193 = vcmp.eq.f32.partialorder %v3192, 8.507059e+37
        %v3194 = vand.u32 %v3182, 2147483648
        %v3195 = vor.u32 1.1754944e-38, %v3194
        %v3196 = vsel %vm3193, %v3195, %v3191
        %v3197 = vmul.f32 %v3172, %v3196
        %v3198 = vmin.f32 %v3197, 1.0
        %v3199 = vmax.f32 %v3198, -1.0
        %v3200 = vmul.f32 %v3038, %v3038
        %v3201 = vmin.f32 16.0, %v3200
        %v3202 = vmul.f32 %v3201, 2.1237322e-06
        %v3203 = vadd.f32 %v3202, 0.00028619796
        %v3204 = vmul.f32 %v3201, %v3203
        %v3205 = vadd.f32 %v3204, 0.0036580483
        %v3206 = vmul.f32 %v3201, %v3205
        %v3207 = vadd.f32 %v3206, 0.05243302
        %v3208 = vmul.f32 %v3201, %v3207
        %v3209 = vadd.f32 %v3208, 0.18741608
        %v3210 = vmul.f32 %v3201, %v3209
        %v3211 = vadd.f32 %v3210, 1.1283791
        %v3212 = vmul.f32 %v3038, %v3211
        %v3213 = vmul.f32 %v3201, 3.8918573e-05
        %v3214 = vadd.f32 %v3213, 0.001143296
        %v3215 = vmul.f32 %v3201, %v3214
        %v3216 = vadd.f32 %v3215, 0.014752088
        %v3217 = vmul.f32 %v3201, %v3216
        %v3218 = vadd.f32 %v3217, 0.112945676
        %v3219 = vmul.f32 %v3201, %v3218
        %v3220 = vadd.f32 %v3219, 0.4994258
        %v3221 = vmul.f32 %v3201, %v3220
        %v3222 = vadd.f32 %v3221, 1.0
        %v3223 = vrcp.pop %v3222
        %v3224 = vmul.f32 %v3222, %v3223
        %v3225 = vsub.f32 1.0, %v3224
        %v3226 = vmul.f32 %v3223, %v3225
        %v3227 = vadd.f32 %v3223, %v3226
        %vm3228 = vweird.f32 %v3222
        %vm3229 = vweird.f32 %v3223
        %vm3230 = vmor %vm3228, %vm3229
        %v3231 = vsel %vm3230, %v3223, %v3227
        %v3232 = vand.u32 2147483647, %v3222
        %vm3233 = vcmp.eq.f32.partialorder %v3232, 8.507059e+37
        %v3234 = vand.u32 %v3222, 2147483648
        %v3235 = vor.u32 1.1754944e-38, %v3234
        %v3236 = vsel %vm3233, %v3235, %v3231
        %v3237 = vmul.f32 %v3212, %v3236
        %v3238 = vmin.f32 %v3237, 1.0
        %v3239 = vmax.f32 %v3238, -1.0
        %v3240 = vmul.f32 %v3039, %v3039
        %v3241 = vmin.f32 16.0, %v3240
        %v3242 = vmul.f32 %v3241, 2.1237322e-06
        %v3243 = vadd.f32 %v3242, 0.00028619796
        %v3244 = vmul.f32 %v3241, %v3243
        %v3245 = vadd.f32 %v3244, 0.0036580483
        %v3246 = vmul.f32 %v3241, %v3245
        %v3247 = vadd.f32 %v3246, 0.05243302
        %v3248 = vmul.f32 %v3241, %v3247
        %v3249 = vadd.f32 %v3248, 0.18741608
        %v3250 = vmul.f32 %v3241, %v3249
        %v3251 = vadd.f32 %v3250, 1.1283791
        %v3252 = vmul.f32 %v3039, %v3251
        %v3253 = vmul.f32 %v3241, 3.8918573e-05
        %v3254 = vadd.f32 %v3253, 0.001143296
        %v3255 = vmul.f32 %v3241, %v3254
        %v3256 = vadd.f32 %v3255, 0.014752088
        %v3257 = vmul.f32 %v3241, %v3256
        %v3258 = vadd.f32 %v3257, 0.112945676
        %v3259 = vmul.f32 %v3241, %v3258
        %v3260 = vadd.f32 %v3259, 0.4994258
        %v3261 = vmul.f32 %v3241, %v3260
        %v3262 = vadd.f32 %v3261, 1.0
        %v3263 = vrcp.pop %v3262
        %v3264 = vmul.f32 %v3262, %v3263
        %v3265 = vsub.f32 1.0, %v3264
        %v3266 = vmul.f32 %v3263, %v3265
        %v3267 = vadd.f32 %v3263, %v3266
        %vm3268 = vweird.f32 %v3262
        %vm3269 = vweird.f32 %v3263
        %vm3270 = vmor %vm3268, %vm3269
        %v3271 = vsel %vm3270, %v3263, %v3267
        %v3272 = vand.u32 2147483647, %v3262
        %vm3273 = vcmp.eq.f32.partialorder %v3272, 8.507059e+37
        %v3274 = vand.u32 %v3262, 2147483648
        %v3275 = vor.u32 1.1754944e-38, %v3274
        %v3276 = vsel %vm3273, %v3275, %v3271
        %v3277 = vmul.f32 %v3252, %v3276
        %v3278 = vmin.f32 %v3277, 1.0
        %v3279 = vmax.f32 %v3278, -1.0
        %v3280 = vadd.f32 %v3079, 1.0
        %v3281 = vadd.f32 %v3119, 1.0
        %v3282 = vadd.f32 %v3159, 1.0
        %v3283 = vadd.f32 %v3199, 1.0
        %v3284 = vadd.f32 %v3239, 1.0
        %v3285 = vadd.f32 %v3279, 1.0
        %v3286 = vmul.f32 %v3028, %v3280
        %v3287 = vmul.f32 %v3029, %v3281
        %v3288 = vmul.f32 %v3030, %v3282
        %v3289 = vmul.f32 %v3031, %v3283
        %v3290 = vmul.f32 %v3032, %v3284
        %v3291 = vmul.f32 %v3033, %v3285
        %v3292 = vld [vmem:[%s784] sm:$0xf]
        %v3293 = vld [vmem:[%s784 + $0x4] sm:$0xf]
        %v3294 = vld [vmem:[%s784 + $0x8] sm:$0xf]
        %v3295 = vld [vmem:[%s784 + $0xc] sm:$0xf]
        %v3296 = vld [vmem:[%s784 + $0x10] sm:$0xf]
        %v3297 = vld [vmem:[%s784 + $0x14] sm:$0xf]
        %v3298 = vld [vmem:[%s784 + $0x18] sm:$0xf]
        %v3299 = vld [vmem:[%s784 + $0x1c] sm:$0xf]
        %v3300 = vld [vmem:[%s784 + $0x20] sm:$0xf]
        %v3301 = vld [vmem:[%s784 + $0x24] sm:$0xf]
        %v3302 = vld [vmem:[%s784 + $0x28] sm:$0xf]
        %v3303 = vld [vmem:[%s784 + $0x2c] sm:$0xf]
        %v3304 = vld [vmem:[%s784 + $0x30] sm:$0xf]
        %v3305 = vld [vmem:[%s784 + $0x34] sm:$0xf]
        %v3306 = vld [vmem:[%s784 + $0x38] sm:$0xf]
        %v3307 = vld [vmem:[%s784 + $0x3c] sm:$0xf]
        %v3308 = vpack.c.bf16 %v3287, %v3286
        %v3309 = vpack.c.bf16 %v3289, %v3288
        %v3310 = vpack.c.bf16 %v3291, %v3290
        %v3311 = vld [vmem:[%s787] sm:$0x1]
        %v3313 = vperm.slane %v3311, 0
        %v3331 = vunpack.c.l.b16 %v3292
        %v3332 = vunpack.c.l.b16 %v3293
        %v3333 = vunpack.c.l.b16 %v3294
        %v3334 = vunpack.c.l.b16 %v3295
        %v3335 = vunpack.c.l.b16 %v3296
        %v3336 = vunpack.c.l.b16 %v3297
        %v3337 = vunpack.c.l.b16 %v3298
        %v3338 = vunpack.c.l.b16 %v3299
        %v3339 = vunpack.c.l.b16 %v3300
        %v3340 = vunpack.c.l.b16 %v3301
        %v3341 = vunpack.c.l.b16 %v3302
        %v3342 = vunpack.c.l.b16 %v3303
        %v3343 = vunpack.c.l.b16 %v3304
        %v3344 = vunpack.c.l.b16 %v3305
        %v3345 = vunpack.c.l.b16 %v3306
        %v3346 = vunpack.c.l.b16 %v3307
        %v3347 = vpack.c.b16 %v3332, %v3331
        %v3348 = vpack.c.b16 %v3334, %v3333
        %v3349 = vpack.c.b16 %v3336, %v3335
        %v3350 = vpack.c.b16 %v3338, %v3337
        %v3351 = vpack.c.b16 %v3340, %v3339
        %v3352 = vpack.c.b16 %v3342, %v3341
        %v3353 = vpack.c.b16 %v3344, %v3343
        %v3354 = vpack.c.b16 %v3346, %v3345
        %3363 = vmatpush.bf16.msra.mxu0 %v3354
        %3364 = vmatpush.bf16.msra.mxu0 %v3353
        %3365 = vmatpush.bf16.msra.mxu0 %v3352
        %3366 = vmatpush.bf16.msra.mxu0 %v3351
        %3367 = vmatpush.bf16.msra.mxu0 %v3350
        %3368 = vmatpush.bf16.msra.mxu0 %v3349
        %3369 = vmatpush.bf16.msra.mxu0 %v3348
        %3370 = vmatpush.bf16.msra.mxu0 %v3347
        %3371 = vmatmul.bf16.gmra.mxu0 %v3308
        %v3372 = vpop.f32.mrf.mxu0
        %v3373 = vadd.f32 %v3313, %v3372
        %v3374 = vpop.f32.mrf.mxu0
        %v3375 = vadd.f32 %v3313, %v3374
        %3376 = vmatmul.bf16.gmra.mxu0 %v3309
        %v3377 = vpop.f32.mrf.mxu0
        %v3378 = vadd.f32 %v3313, %v3377
        %v3379 = vpop.f32.mrf.mxu0
        %v3380 = vadd.f32 %v3313, %v3379
        %3381 = vmatmul.bf16.gmra.mxu0 %v3310
        %v3382 = vpop.f32.mrf.mxu0
        %v3383 = vadd.f32 %v3313, %v3382
        %v3384 = vpop.f32.mrf.mxu0
        %v3385 = vadd.f32 %v3313, %v3384
        %3386 = vdwg.mxu0
        %v3387 = vadd.f32 %v2814, %v3373
        %v3388 = vadd.f32 %v2815, %v3375
        %v3389 = vadd.f32 %v2816, %v3378
        %v3390 = vadd.f32 %v2817, %v3380
        %v3391 = vadd.f32 %v2818, %v3383
        %v3392 = vadd.f32 %v2819, %v3385
        %3393 = vst.msk [vmem:[#allocation2] sm:$0xff] %vm1076, %v3387
        %3394 = vst.msk [vmem:[#allocation2 + $0x8] sm:$0xff] %vm1076, %v3388
        %3395 = vst.msk [vmem:[#allocation2 + $0x10] sm:$0xff] %vm1076, %v3389
        %3396 = vst.msk [vmem:[#allocation2 + $0x18] sm:$0xff] %vm1076, %v3390
        %3397 = vst.msk [vmem:[#allocation2 + $0x20] sm:$0xff] %vm1076, %v3391
        %3398 = vst.msk [vmem:[#allocation2 + $0x28] sm:$0xff] %vm1076, %v3392
        %p3399 = scmp.eq.s32.totalorder %s32, 1
        // Predicated region
        $region105: #{tpu_custom_call.1} parent=99 // pred_check
          %p3400 = pneg %p3399
        $region106: #{tpu_custom_call.1} parent=99 // pred_check_branch
          %3402 = sbr.rel (%p3400) target = $region108
        $region107: #{tpu_custom_call.1} parent=99 // pred_region
          %v3403 = vld [vmem:[%s17] sm:$0x1]
          %v3404 = vld [vmem:[%s18] sm:$0x1]
          %v3407 = vrot.slane %v3390, 7
          %vm3408 = vcmask 1041409
          %v3409 = vsel %vm3408, %v3407, %v3387
          %vm3411 = vcmask 254976
          %v3412 = vsel %vm3411, %v3409, 0.0
          %3413 = vadd.xlane.f32.xlu0 %v3412
          %v3414 = vpop.xlane.xlu0 %3413
          %v3415 = vmul.f32 %v3414, %v1101
          %v3417 = vrot.slane %v3415, 1
          %v3420 = vsub.f32 %v3387, %v3415
          %v3421 = vsub.f32 %v3390, %v3417
          %v3422 = vmul.f32 %v3420, %v3420
          %v3423 = vmul.f32 %v3421, %v3421
          %v3426 = vrot.slane %v3423, 7
          %v3427 = vsel %vm3408, %v3426, %v3422
          %v3429 = vsel %vm3411, %v3427, 0.0
          %3430 = vadd.xlane.f32.xlu0 %v3429
          %v3431 = vpop.xlane.xlu0 %3430
          %v3432 = vmul.f32 %v3431, %v1101
          %v3433 = vadd.f32 %v3432, 1e-06
          %v3434 = vrsqrt.pop %v3433
          %v3435 = vmul.f32 %v3434, %v3433
          %v3436 = vmul.f32 %v3435, %v3434
          %v3437 = vmul.f32 0.5, %v3436
          %v3438 = vsub.f32 1.5, %v3437
          %v3439 = vmul.f32 %v3434, %v3438
          %vm3440 = vweird.f32 %v3433
          %vm3441 = vweird.f32 %v3434
          %vm3442 = vmor %vm3440, %vm3441
          %v3443 = vsel %vm3442, %v3434, %v3439
          %v3445 = vrot.slane %v3443, 1
          %v3448 = vmul.f32 %v3420, %v3443
          %v3449 = vmul.f32 %v3421, %v3445
          %v3451 = vperm.slane %v3403, 0
          %v3453 = vmul.f32 %v3448, %v3451
          %v3454 = vmul.f32 %v3449, %v3451
          %v3456 = vperm.slane %v3404, 0
          %v3458 = vadd.f32 %v3453, %v3456
          %v3459 = vadd.f32 %v3454, %v3456
          %v3460 = vld [vmem:[%s19] sm:$0xf]
          %v3461 = vld [vmem:[%s19 + $0x4] sm:$0xf]
          %v3462 = vld [vmem:[%s19 + $0x8] sm:$0xf]
          %v3463 = vld [vmem:[%s19 + $0xc] sm:$0xf]
          %v3464 = vpack.c.bf16 %v3458, %v3458
          %v3465 = vpack.c.bf16 %v3459, %v3459
          %v3468 = vunpack.c.l.b16 %v3464
          %v3469 = vunpack.c.l.b16 %v3465
          %v3470 = vrot.slane %v3469, 7
          %v3471 = vsel %vm3408, %v3470, %v3468
          %v3472 = vpack.c.b16 %v3471, %v3471
          %v3477 = vunpack.c.l.b16 %v3460
          %v3478 = vunpack.c.l.b16 %v3461
          %v3479 = vunpack.c.l.b16 %v3462
          %v3480 = vunpack.c.l.b16 %v3463
          %v3481 = vpack.c.b16 %v3478, %v3477
          %v3482 = vpack.c.b16 %v3480, %v3479
          %v3486 = vsel %vm1076, %v3472, 0
          %3488 = vmatpush.bf16.msra.mxu0 0
          %3489 = vmatpush.bf16.msra.mxu0 0
          %3490 = vmatpush.bf16.msra.mxu0 0
          %3491 = vmatpush.bf16.msra.mxu0 0
          %3492 = vmatpush.bf16.msra.mxu0 0
          %3493 = vmatpush.bf16.msra.mxu0 0
          %3494 = vmatpush.bf16.msra.mxu0 %v3482
          %3495 = vmatpush.bf16.msra.mxu0 %v3481
          %3496 = vmatmul.bf16.gmra.mxu0 %v3486
          %v3497 = vpop.f32.mrf.mxu0
          %v3498 = vadd.f32 0.0, %v3497
          %v3499 = vpop.f32.mrf.mxu0
          %3500 = vdwg.mxu0
          %v3501 = vmul.f32 %v3498, %v3498
          %vm3502 = vcmask 123904
          %v3503 = vsel %vm3502, %v3501, 0.0
          %3504 = vadd.xlane.f32.xlu0 %v3503
          %v3505 = vpop.xlane.xlu0 %3504
          %v3506 = vmax.f32 %v3505, 1e-24
          %v3507 = vrsqrt.pop %v3506
          %v3508 = vmul.f32 %v3507, %v3506
          %v3509 = vmul.f32 %v3508, %v3507
          %v3510 = vmul.f32 0.5, %v3509
          %v3511 = vsub.f32 1.5, %v3510
          %v3512 = vmul.f32 %v3507, %v3511
          %vm3513 = vweird.f32 %v3506
          %vm3514 = vweird.f32 %v3507
          %vm3515 = vmor %vm3513, %vm3514
          %v3516 = vsel %vm3515, %v3507, %v3512
          %v3517 = vmul.f32 %v3498, %v3516
          %3518 = vst.msk [vmem:[#allocation3] sm:$0x3] %vm3502, %v3517
        $region108: #{tpu_custom_call.1} parent=99 // pred_fallthru
          _
        // Predicated region
        $region109: #{tpu_custom_call.1} parent=99 // pred_check
          %p3519 = pneg %p525
        $region110: #{tpu_custom_call.1} parent=99 // pred_check_branch
          %3521 = sbr.rel (%p3519) target = $region112
        $region111: #{tpu_custom_call.1} parent=99 // pred_region
          %3523 = vsyncadd [#allocation4], 0
          %s3525 = sshll.u32 [#allocation3], 4
          %s3526 = int_to_ptr.vmem [resolvable:$true] %s3525
          %s3527 = sshll.u32 %s20, 4
          %s3528 = int_to_ptr.hbm [resolvable:$true] %s3527
          %3530 = dma.vmem_to_hbm [thread:$0]  %s3526, 32, %s3528, [#allocation4]
        $region112: #{tpu_custom_call.1} parent=99 // pred_fallthru
          _
        // Predicated region
        $region113: #{tpu_custom_call.1} parent=99 // pred_check
          %p3531 = pneg %p525
        $region114: #{tpu_custom_call.1} parent=99 // pred_check_branch
          %3533 = sbr.rel (%p3531) target = $region116
        $region115: #{tpu_custom_call.1} parent=99 // pred_region
          %3535 = dma.done [#allocation4], 32
        $region116: #{tpu_custom_call.1} parent=99 // pred_fallthru
          _
      $region100: #{tpu_custom_call.1} parent=5 // pred_fallthru
        _
      %p3536 = scmp.le.s32.totalorder 2, %s27
      // Predicated region
      $region117: #{tpu_custom_call.1} parent=5 // pred_check
        %p3537 = pneg %p3536
      $region118: #{tpu_custom_call.1} parent=5 // pred_check_branch
        %3539 = sbr.rel (%p3537) target = $region120
      $region119: #{tpu_custom_call.1} parent=5 // pred_region
        %s3540 = ssub.s32 %s27, 2
      $region120: #{tpu_custom_call.1} parent=5 // pred_fallthru
        _
    $region6: #{tpu_custom_call.1} parent=1 // loop_footer
      %s31 = sadd.s32 1, %s27
    $region7: #{tpu_custom_call.1} parent=1 // loop_footer_branch
      %26 = sbr.rel target = $region3
    $region8: #{tpu_custom_call.1} parent=1 // loop_exit
      _
    %3541 = vsyncpa [#allocation4], 1
    %s3542 = scalar_lea.sflag [#allocation4], 1
    %3543 = vsyncpa %s3542, 1

</llo_original>
